<compile_context>
chip_gen: v7x
topology: tpu7x:2x2x1
jax: 0.10.0
libtpu: 0.0.40
codegen_flags: <defaults>
</compile_context>

<pallas_src>
import functools
import math

import jax
import jax.numpy as jnp
from jax.experimental import pallas as pl
from jax.experimental.pallas import tpu as pltpu


_TAPS = tuple((dy, dx) for dy in (-1, 0, 1) for dx in (-1, 0, 1))


def _attn_kernel(x_ref, gw_ref, gb_ref, wtap_ref, bpj_ref, mask_ref, scale_ref,
                 o_ref, *, nh, W):
    # x_ref:    (1, 1, c1, L)        halo slab (L = t_hw + 2W + 2), compute dtype
    # gw_ref:   (1, nh*n_guide, c1)  re-associated guide weights (1/sqrt(hc) folded)
    # gb_ref:   (1, nh*n_guide, 1)   re-associated guide bias (+ attn bias), f32
    # wtap_ref: (9, c2, c1)          BN-folded 3x3 taps, compute dtype
    # bpj_ref:  (c2, 1)              BN-folded proj bias, f32
    # mask_ref: (2, t_hw)            [left-edge, right-edge] column masks
    # scale_ref:(nh,)                per-head post-sigmoid scale (SMEM)
    # o_ref:    (1, c2, t_hw)
    c2, t_hw = o_ref.shape[1], o_ref.shape[2]
    hc = c2 // nh
    n_guide = gw_ref.shape[1] // nh

    slab = x_ref[0, 0]                                   # (c1, L)
    mask_l = mask_ref[0:1, :]                            # (1, t_hw)
    mask_r = mask_ref[1:2, :]

    x_center = slab[:, W + 1:W + 1 + t_hw]               # dy=dx=0 tap == x tile

    # 3x3 proj conv: 9 accumulating MXU matmuls over lane-shifted slab slices.
    acc = jnp.zeros((c2, t_hw), jnp.float32)
    for k, (dy, dx) in enumerate(_TAPS):
        off = (1 + dy) * W + dx + 1
        if dy == 0 and dx == 0:
            xs = x_center
        else:
            xs = slab[:, off:off + t_hw]
        if dx == -1:
            xs = xs * mask_l
        elif dx == 1:
            xs = xs * mask_r
        acc = acc + jnp.dot(wtap_ref[k], xs, preferred_element_type=jnp.float32)
    proj = acc + bpj_ref[...]                            # (c2, t_hw), f32

    # Attention scores for all heads / guide tokens in one matmul.
    scores = jnp.dot(gw_ref[0], x_center,
                     preferred_element_type=jnp.float32) + gb_ref[0]

    pieces = []
    for m in range(nh):                                  # static unroll, nh small
        aw = jnp.max(scores[m * n_guide:(m + 1) * n_guide, :], axis=0,
                     keepdims=True)                      # (1, t_hw)
        aw = jax.nn.sigmoid(aw) * scale_ref[m]           # EUP sigmoid, SMEM scalar
        pieces.append(proj[m * hc:(m + 1) * hc, :] * aw)
    o_ref[0] = jnp.concatenate(pieces, axis=0).astype(o_ref.dtype)


def _pick_tile_rows(H, W, c1, c2, G, itemsize, vmem_budget=24 << 20):
    """Largest whole-row, lane-dense spatial tile whose streams fit the budget."""
    def stream_bytes(tr):
        t_hw = tr * W
        return 2 * (c1 * (t_hw + 2 * W + 2) * itemsize + c2 * t_hw * 4
                    + G * (c1 * itemsize + 4))
    cands = [tr for tr in range(1, H) if H % tr == 0 and (tr * W) % 128 == 0]
    cands.append(H)                                       # whole plane always legal
    fitting = [tr for tr in cands if stream_bytes(tr) <= vmem_budget]
    return max(fitting) if fitting else min(cands)


def max_sigmoid_attn_pallas(x, guide, params, *, nh, ec, scale=False,
                            compute_dtype=jnp.bfloat16, tile_rows=None):
    """x: (N, c1, H, W), guide: (N, n_guide, gc). Eval-mode BN is folded."""
    N, c1, H, W = x.shape
    _, n_guide, gc = guide.shape
    c2 = params["w_proj"].shape[0]
    hc = c2 // nh
    assert ec == nh * hc, "MaxSigmoidAttnBlock requires ec == nh * (c2 // nh)"
    HW = H * W
    G = nh * n_guide
    f32 = jnp.float32
    hi = jax.lax.Precision.HIGHEST

    # ---- wrapper glue: guide embedding hoisted out of the grid, BN folded, ----
    # ---- score path re-associated so w_ec never enters the kernel.          ----
    g = jnp.einsum("bng,eg->bne", guide.astype(f32), params["w_gl"].astype(f32),
                   precision=hi) + params["b_gl"].astype(f32)[None, None, :]
    g_h = g.reshape(N, n_guide, nh, hc).transpose(0, 2, 1, 3)       # (N, nh, n, hc)

    if c1 != ec:                         # 1x1 embed conv present: fold its BN
        bn = params["bn_ec"]
        s_ec = bn["gamma"] / jnp.sqrt(bn["var"] + bn["eps"])
        wec = (params["w_ec"].astype(f32) * s_ec[:, None]).reshape(nh, hc, c1)
        bec = (bn["beta"] - bn["mean"] * s_ec).reshape(nh, hc)
    else:                                # identity embedding: per-head channel selector
        wec = jnp.eye(c1, dtype=f32).reshape(nh, hc, c1)
        bec = jnp.zeros((nh, hc), f32)

    inv = 1.0 / math.sqrt(hc)
    gw = jnp.einsum("bmnh,mhc->bmnc", g_h, wec, precision=hi) * inv   # (N, nh, n, c1)
    gb = jnp.einsum("bmnh,mh->bmn", g_h, bec, precision=hi) * inv     # (N, nh, n)
    gb = gb + params["attn_bias"].astype(f32).reshape(1, nh, 1)       # bias commutes with max
    gw = gw.reshape(N, G, c1).astype(compute_dtype)
    gb = gb.reshape(N, G, 1).astype(f32)

    # 3x3 proj conv, BN folded, packed tap-major: wtap[k] = W_eff[:, :, dy+1, dx+1].
    bn = params["bn_proj"]
    s_pj = bn["gamma"] / jnp.sqrt(bn["var"] + bn["eps"])
    w_eff = params["w_proj"].astype(f32) * s_pj[:, None, None, None]  # (c2, c1, 3, 3)
    wtap = w_eff.transpose(2, 3, 0, 1).reshape(9, c2, c1).astype(compute_dtype)
    bpj = (bn["beta"] - bn["mean"] * s_pj).reshape(c2, 1).astype(f32)

    if scale:
        attn_scale = params["attn_scale"].astype(f32).reshape(nh)
    else:
        attn_scale = jnp.ones((nh,), f32)

    # ---- spatial tiling: whole rows, lane-dense tiles ------------------------
    itemsize = jnp.dtype(compute_dtype).itemsize
    if tile_rows is None:
        tile_rows = _pick_tile_rows(H, W, c1, c2, G, itemsize)
    assert H % tile_rows == 0, "tile_rows must divide H"
    t_hw = tile_rows * W
    S = H // tile_rows
    assert S == 1 or t_hw % 128 == 0, (
        "spatial tiles must be lane-dense (tile_rows*W % 128 == 0) unless S == 1")
    L = t_hw + 2 * W + 2        # tile rows + one halo row each side + corner slack

    # x shipped once (plus a tiny per-tile halo): flattened, zero-padded slabs.
    xpad = jnp.pad(x.reshape(N, c1, HW).astype(compute_dtype),
                   ((0, 0), (0, 0), (W + 1, W + 1)))
    if S == 1:
        x_halo = xpad[:, None]                                       # (N, 1, c1, L)
    else:
        x_halo = jnp.stack([xpad[:, :, s * t_hw:s * t_hw + L] for s in range(S)],
                           axis=1)                                   # (N, S, c1, L)

    # Horizontal-edge masks (pattern repeats per row; identical for every tile).
    w_idx = jnp.arange(t_hw, dtype=jnp.int32) % W
    masks = jnp.stack([(w_idx != 0), (w_idx != W - 1)]).astype(compute_dtype)

    # ---- pallas_call ---------------------------------------------------------
    est_bytes = (2 * (c1 * L * itemsize + c2 * t_hw * x.dtype.itemsize
                      + G * (c1 * itemsize + 4))
                 + 2 * (9 * c2 * c1 * itemsize + c2 * 4 + 2 * t_hw * itemsize))
    vmem_limit = int(min(max(2 * est_bytes + (8 << 20), 32 << 20), 56 << 20))

    kern = functools.partial(_attn_kernel, nh=nh, W=W)
    out_shape = jax.ShapeDtypeStruct((N, c2, HW), x.dtype)

    def _wspec(shape, index_map, mode):
        if mode is None:
            return pl.BlockSpec(shape, index_map)
        return pl.BlockSpec(shape, index_map, pipeline_mode=mode)

    def run(weight_mode):
        grid_spec = pltpu.PrefetchScalarGridSpec(
            num_scalar_prefetch=0,
            grid=(N, S),
            in_specs=[
                pl.BlockSpec((1, 1, c1, L), lambda b, s: (b, s, 0, 0)),
                pl.BlockSpec((1, G, c1), lambda b, s: (b, 0, 0)),
                pl.BlockSpec((1, G, 1), lambda b, s: (b, 0, 0)),
                _wspec((9, c2, c1), lambda b, s: (0, 0, 0), weight_mode),
                _wspec((c2, 1), lambda b, s: (0, 0), weight_mode),
                _wspec((2, t_hw), lambda b, s: (0, 0), weight_mode),
                pl.BlockSpec(memory_space=pltpu.MemorySpace.SMEM),
            ],
            out_specs=pl.BlockSpec((1, c2, t_hw), lambda b, s: (b, 0, s)),
        )
        return pl.pallas_call(
            kern,
            out_shape=out_shape,
            grid_spec=grid_spec,
            compiler_params=pltpu.CompilerParams(
                dimension_semantics=("parallel", "parallel"),
                vmem_limit_bytes=vmem_limit),
        )(x_halo, gw, gb, wtap, bpj, masks, attn_scale)

    try:
        # Grid-invariant weight blocks: request single buffering (saves VMEM).
        out = run(pl.Buffered(1))
    except Exception:
        # Fallback for runtimes without single-buffered pipeline_mode support.
        out = run(None)

    # (N, c2, HW) -> (N, c2, H, W): pure reshape, no transpose.
    return out.reshape(N, c2, H, W)


def max_sigmoid_attn_reference(x, guide, params, *, nh, ec, scale=False):
    """Plain-JAX reference matching the PyTorch forward (eval-mode BN)."""
    N, c1, H, W = x.shape
    c2 = params["w_proj"].shape[0]
    hc = c2 // nh
    hi = jax.lax.Precision.HIGHEST

    def bn_apply(y, bn):
        s = bn["gamma"] / jnp.sqrt(bn["var"] + bn["eps"])
        return (y * s[None, :, None, None]
                + (bn["beta"] - bn["mean"] * s)[None, :, None, None])

    g = jnp.einsum("bng,eg->bne", guide, params["w_gl"], precision=hi)
    g = g + params["b_gl"][None, None, :]
    g = g.reshape(N, -1, nh, hc)

    if c1 != ec:
        e = jnp.einsum("bchw,oc->bohw", x, params["w_ec"], precision=hi)
        e = bn_apply(e, params["bn_ec"])
    else:
        e = x
    e = e.reshape(N, nh, hc, H, W)

    aw = jnp.einsum("bmchw,bnmc->bmhwn", e, g, precision=hi)
    aw = aw.max(axis=-1)
    aw = aw / (hc ** 0.5)
    aw = aw + params["attn_bias"][None, :, None, None]
    aw = jax.nn.sigmoid(aw)
    if scale:
        aw = aw * params["attn_scale"]

    y = jax.lax.conv_general_dilated(
        x, params["w_proj"], window_strides=(1, 1), padding=((1, 1), (1, 1)),
        dimension_numbers=("NCHW", "OIHW", "NCHW"), precision=hi)
    y = bn_apply(y, params["bn_proj"])
    y = y.reshape(N, nh, hc, H, W)
    y = y * aw[:, :, None, :, :]
    return y.reshape(N, c2, H, W)


if __name__ == "__main__":
    key = jax.random.PRNGKey(0)
    keys = jax.random.split(key, 10)

    # Small shapes consistent with the module: c1=4, c2=16, nh=2 heads (hc=8),
    # ec=nh*hc=16 (!= c1 so the 1x1 embed conv is active), gc=32, 8 guide
    # tokens, 16x16 feature map, batch 2.
    N, c1, H, W = 2, 4, 16, 16
    c2, nh, gc, n_guide = 16, 2, 32, 8
    hc = c2 // nh
    ec = nh * hc

    x = jax.random.normal(keys[0], (N, c1, H, W), dtype=jnp.float32)
    guide = jax.random.normal(keys[1], (N, n_guide, gc), dtype=jnp.float32)

    def make_bn(k, c):
        kg, kb, km, kv = jax.random.split(k, 4)
        return dict(gamma=1.0 + 0.1 * jax.random.normal(kg, (c,), dtype=jnp.float32),
                    beta=0.05 * jax.random.normal(kb, (c,), dtype=jnp.float32),
                    mean=0.1 * jax.random.normal(km, (c,), dtype=jnp.float32),
                    var=1.0 + 0.1 * jax.random.uniform(kv, (c,), dtype=jnp.float32),
                    eps=jnp.float32(1e-3))

    params = dict(
        w_gl=0.1 * jax.random.normal(keys[2], (ec, gc), dtype=jnp.float32),
        b_gl=0.05 * jax.random.normal(keys[3], (ec,), dtype=jnp.float32),
        w_ec=0.2 * jax.random.normal(keys[4], (ec, c1), dtype=jnp.float32),
        bn_ec=make_bn(keys[5], ec),
        w_proj=0.2 * jax.random.normal(keys[6], (c2, c1, 3, 3), dtype=jnp.float32),
        bn_proj=make_bn(keys[7], c2),
        attn_bias=0.1 * jax.random.normal(keys[8], (nh,), dtype=jnp.float32),
        attn_scale=1.0 + 0.1 * jax.random.normal(keys[9], (1, nh, 1, 1),
                                                 dtype=jnp.float32),
    )

    ref_scaled = max_sigmoid_attn_reference(x, guide, params, nh=nh, ec=ec, scale=True)
    ref_plain = max_sigmoid_attn_reference(x, guide, params, nh=nh, ec=ec, scale=False)

    # 1) f32 compute, whole-plane tile: tight tolerance.
    out = max_sigmoid_attn_pallas(x, guide, params, nh=nh, ec=ec, scale=True,
                                  compute_dtype=jnp.float32)
    out = jax.block_until_ready(out)
    assert out.shape == (N, c2, H, W)
    err = float(jnp.max(jnp.abs(out - ref_scaled)))
    assert jnp.allclose(out, ref_scaled, atol=2e-3, rtol=2e-3), f"f32 max abs err {err}"

    # 2) f32 compute, explicit 2-way spatial tiling (exercises halo slabs), no scale.
    out_t = max_sigmoid_attn_pallas(x, guide, params, nh=nh, ec=ec, scale=False,
                                    compute_dtype=jnp.float32, tile_rows=8)
    out_t = jax.block_until_ready(out_t)
    err_t = float(jnp.max(jnp.abs(out_t - ref_plain)))
    assert jnp.allclose(out_t, ref_plain, atol=2e-3, rtol=2e-3), f"tiled max abs err {err_t}"

    # 3) bf16 matmul inputs (default perf path): looser tolerance.
    out_bf = max_sigmoid_attn_pallas(x, guide, params, nh=nh, ec=ec, scale=True)
    out_bf = jax.block_until_ready(out_bf)
    err_bf = float(jnp.max(jnp.abs(out_bf - ref_scaled)))
    assert jnp.allclose(out_bf, ref_scaled, atol=5e-2, rtol=5e-2), f"bf16 max abs err {err_bf}"

    print("KERNEL_OK")
</pallas_src>

<mosaic_0001>
module attributes {stable_mosaic.version = 11 : i64} {
  func.func @_attn_kernel(%arg0: i32, %arg1: i32, %arg2: memref<1x1x4x290xf32, #tpu.memory_space<vmem>>, %arg3: memref<1x16x4xf32, #tpu.memory_space<vmem>>, %arg4: memref<1x16x1xf32, #tpu.memory_space<vmem>>, %arg5: memref<9x16x4xf32, #tpu.memory_space<vmem>>, %arg6: memref<16x1xf32, #tpu.memory_space<vmem>>, %arg7: memref<2x256xf32, #tpu.memory_space<vmem>>, %arg8: memref<2xf32, #tpu.memory_space<smem>>, %arg9: memref<1x16x256xf32, #tpu.memory_space<vmem>>) attributes {dimension_semantics = [#tpu.dimension_semantics<parallel>, #tpu.dimension_semantics<parallel>], iteration_bounds = array<i64: 2, 1>, scalar_prefetch = 0 : i64, scratch_operands = 0 : i64, tpu.core_type = #tpu.core_type<tc>, window_params = [{transform_indices = @transform_0, window_bounds = array<i64: 1, 1, 4, 290>}, {transform_indices = @transform_1, window_bounds = array<i64: 1, 16, 4>}, {transform_indices = @transform_2, window_bounds = array<i64: 1, 16, 1>}, {pipeline_mode = #tpu.pipeline_mode<synchronous>, transform_indices = @transform_3, window_bounds = array<i64: 9, 16, 4>}, {pipeline_mode = #tpu.pipeline_mode<synchronous>, transform_indices = @transform_4, window_bounds = array<i64: 16, 1>}, {pipeline_mode = #tpu.pipeline_mode<synchronous>, transform_indices = @transform_5, window_bounds = array<i64: 2, 256>}, {transform_indices = @transform_6, window_bounds = array<i64: 2>}, {transform_indices = @transform_7, window_bounds = array<i64: 1, 16, 256>}]} {
    %c0 = arith.constant 0 : index
    %c0_0 = arith.constant 0 : index
    %c0_1 = arith.constant 0 : index
    %c0_2 = arith.constant 0 : index
    %0 = vector.load %arg2[%c0, %c0_0, %c0_1, %c0_2] : memref<1x1x4x290xf32, #tpu.memory_space<vmem>>, vector<1x1x4x290xf32>
    %1 = vector.shape_cast %0 : vector<1x1x4x290xf32> to vector<4x290xf32>
    %c0_3 = arith.constant 0 : index
    %c0_4 = arith.constant 0 : index
    %2 = vector.load %arg7[%c0_3, %c0_4] : memref<2x256xf32, #tpu.memory_space<vmem>>, vector<1x256xf32>
    %c1 = arith.constant 1 : index
    %c0_5 = arith.constant 0 : index
    %3 = vector.load %arg7[%c1, %c0_5] : memref<2x256xf32, #tpu.memory_space<vmem>>, vector<1x256xf32>
    %4 = vector.extract_strided_slice %1 {offsets = [0, 17], sizes = [4, 256], strides = [1, 1]} : vector<4x290xf32> to vector<4x256xf32>
    %cst = arith.constant 0.000000e+00 : f32
    %5 = vector.broadcast %cst : f32 to vector<16x256xf32>
    %6 = vector.extract_strided_slice %1 {offsets = [0, 0], sizes = [4, 256], strides = [1, 1]} : vector<4x290xf32> to vector<4x256xf32>
    %7 = vector.broadcast %2 : vector<1x256xf32> to vector<4x256xf32>
    %8 = arith.mulf %6, %7 : vector<4x256xf32>
    %c0_6 = arith.constant 0 : index
    %c0_7 = arith.constant 0 : index
    %c0_8 = arith.constant 0 : index
    %9 = vector.load %arg5[%c0_6, %c0_7, %c0_8] : memref<9x16x4xf32, #tpu.memory_space<vmem>>, vector<1x16x4xf32>
    %10 = vector.shape_cast %9 : vector<1x16x4xf32> to vector<16x4xf32>
    %cst_9 = arith.constant dense<0.000000e+00> : vector<16x256xf32>
    %11 = tpu.matmul %10, %8, %cst_9 {dimension_numbers = #tpu.dot_dimension_numbers<[1], [0], [0], [1], [0, 0, 1, 1], [], []>} : vector<16x4xf32>, vector<4x256xf32>, vector<16x256xf32> -> vector<16x256xf32>
    %12 = arith.addf %5, %11 : vector<16x256xf32>
    %13 = vector.extract_strided_slice %1 {offsets = [0, 1], sizes = [4, 256], strides = [1, 1]} : vector<4x290xf32> to vector<4x256xf32>
    %c1_10 = arith.constant 1 : index
    %c0_11 = arith.constant 0 : index
    %c0_12 = arith.constant 0 : index
    %14 = vector.load %arg5[%c1_10, %c0_11, %c0_12] : memref<9x16x4xf32, #tpu.memory_space<vmem>>, vector<1x16x4xf32>
    %15 = vector.shape_cast %14 : vector<1x16x4xf32> to vector<16x4xf32>
    %cst_13 = arith.constant dense<0.000000e+00> : vector<16x256xf32>
    %16 = tpu.matmul %15, %13, %cst_13 {dimension_numbers = #tpu.dot_dimension_numbers<[1], [0], [0], [1], [0, 0, 1, 1], [], []>} : vector<16x4xf32>, vector<4x256xf32>, vector<16x256xf32> -> vector<16x256xf32>
    %17 = arith.addf %12, %16 : vector<16x256xf32>
    %18 = vector.extract_strided_slice %1 {offsets = [0, 2], sizes = [4, 256], strides = [1, 1]} : vector<4x290xf32> to vector<4x256xf32>
    %19 = vector.broadcast %3 : vector<1x256xf32> to vector<4x256xf32>
    %20 = arith.mulf %18, %19 : vector<4x256xf32>
    %c2 = arith.constant 2 : index
    %c0_14 = arith.constant 0 : index
    %c0_15 = arith.constant 0 : index
    %21 = vector.load %arg5[%c2, %c0_14, %c0_15] : memref<9x16x4xf32, #tpu.memory_space<vmem>>, vector<1x16x4xf32>
    %22 = vector.shape_cast %21 : vector<1x16x4xf32> to vector<16x4xf32>
    %cst_16 = arith.constant dense<0.000000e+00> : vector<16x256xf32>
    %23 = tpu.matmul %22, %20, %cst_16 {dimension_numbers = #tpu.dot_dimension_numbers<[1], [0], [0], [1], [0, 0, 1, 1], [], []>} : vector<16x4xf32>, vector<4x256xf32>, vector<16x256xf32> -> vector<16x256xf32>
    %24 = arith.addf %17, %23 : vector<16x256xf32>
    %25 = vector.extract_strided_slice %1 {offsets = [0, 16], sizes = [4, 256], strides = [1, 1]} : vector<4x290xf32> to vector<4x256xf32>
    %26 = vector.broadcast %2 : vector<1x256xf32> to vector<4x256xf32>
    %27 = arith.mulf %25, %26 : vector<4x256xf32>
    %c3 = arith.constant 3 : index
    %c0_17 = arith.constant 0 : index
    %c0_18 = arith.constant 0 : index
    %28 = vector.load %arg5[%c3, %c0_17, %c0_18] : memref<9x16x4xf32, #tpu.memory_space<vmem>>, vector<1x16x4xf32>
    %29 = vector.shape_cast %28 : vector<1x16x4xf32> to vector<16x4xf32>
    %cst_19 = arith.constant dense<0.000000e+00> : vector<16x256xf32>
    %30 = tpu.matmul %29, %27, %cst_19 {dimension_numbers = #tpu.dot_dimension_numbers<[1], [0], [0], [1], [0, 0, 1, 1], [], []>} : vector<16x4xf32>, vector<4x256xf32>, vector<16x256xf32> -> vector<16x256xf32>
    %31 = arith.addf %24, %30 : vector<16x256xf32>
    %c4 = arith.constant 4 : index
    %c0_20 = arith.constant 0 : index
    %c0_21 = arith.constant 0 : index
    %32 = vector.load %arg5[%c4, %c0_20, %c0_21] : memref<9x16x4xf32, #tpu.memory_space<vmem>>, vector<1x16x4xf32>
    %33 = vector.shape_cast %32 : vector<1x16x4xf32> to vector<16x4xf32>
    %cst_22 = arith.constant dense<0.000000e+00> : vector<16x256xf32>
    %34 = tpu.matmul %33, %4, %cst_22 {dimension_numbers = #tpu.dot_dimension_numbers<[1], [0], [0], [1], [0, 0, 1, 1], [], []>} : vector<16x4xf32>, vector<4x256xf32>, vector<16x256xf32> -> vector<16x256xf32>
    %35 = arith.addf %31, %34 : vector<16x256xf32>
    %36 = vector.extract_strided_slice %1 {offsets = [0, 18], sizes = [4, 256], strides = [1, 1]} : vector<4x290xf32> to vector<4x256xf32>
    %37 = vector.broadcast %3 : vector<1x256xf32> to vector<4x256xf32>
    %38 = arith.mulf %36, %37 : vector<4x256xf32>
    %c5 = arith.constant 5 : index
    %c0_23 = arith.constant 0 : index
    %c0_24 = arith.constant 0 : index
    %39 = vector.load %arg5[%c5, %c0_23, %c0_24] : memref<9x16x4xf32, #tpu.memory_space<vmem>>, vector<1x16x4xf32>
    %40 = vector.shape_cast %39 : vector<1x16x4xf32> to vector<16x4xf32>
    %cst_25 = arith.constant dense<0.000000e+00> : vector<16x256xf32>
    %41 = tpu.matmul %40, %38, %cst_25 {dimension_numbers = #tpu.dot_dimension_numbers<[1], [0], [0], [1], [0, 0, 1, 1], [], []>} : vector<16x4xf32>, vector<4x256xf32>, vector<16x256xf32> -> vector<16x256xf32>
    %42 = arith.addf %35, %41 : vector<16x256xf32>
    %43 = vector.extract_strided_slice %1 {offsets = [0, 32], sizes = [4, 256], strides = [1, 1]} : vector<4x290xf32> to vector<4x256xf32>
    %44 = vector.broadcast %2 : vector<1x256xf32> to vector<4x256xf32>
    %45 = arith.mulf %43, %44 : vector<4x256xf32>
    %c6 = arith.constant 6 : index
    %c0_26 = arith.constant 0 : index
    %c0_27 = arith.constant 0 : index
    %46 = vector.load %arg5[%c6, %c0_26, %c0_27] : memref<9x16x4xf32, #tpu.memory_space<vmem>>, vector<1x16x4xf32>
    %47 = vector.shape_cast %46 : vector<1x16x4xf32> to vector<16x4xf32>
    %cst_28 = arith.constant dense<0.000000e+00> : vector<16x256xf32>
    %48 = tpu.matmul %47, %45, %cst_28 {dimension_numbers = #tpu.dot_dimension_numbers<[1], [0], [0], [1], [0, 0, 1, 1], [], []>} : vector<16x4xf32>, vector<4x256xf32>, vector<16x256xf32> -> vector<16x256xf32>
    %49 = arith.addf %42, %48 : vector<16x256xf32>
    %50 = vector.extract_strided_slice %1 {offsets = [0, 33], sizes = [4, 256], strides = [1, 1]} : vector<4x290xf32> to vector<4x256xf32>
    %c7 = arith.constant 7 : index
    %c0_29 = arith.constant 0 : index
    %c0_30 = arith.constant 0 : index
    %51 = vector.load %arg5[%c7, %c0_29, %c0_30] : memref<9x16x4xf32, #tpu.memory_space<vmem>>, vector<1x16x4xf32>
    %52 = vector.shape_cast %51 : vector<1x16x4xf32> to vector<16x4xf32>
    %cst_31 = arith.constant dense<0.000000e+00> : vector<16x256xf32>
    %53 = tpu.matmul %52, %50, %cst_31 {dimension_numbers = #tpu.dot_dimension_numbers<[1], [0], [0], [1], [0, 0, 1, 1], [], []>} : vector<16x4xf32>, vector<4x256xf32>, vector<16x256xf32> -> vector<16x256xf32>
    %54 = arith.addf %49, %53 : vector<16x256xf32>
    %55 = vector.extract_strided_slice %1 {offsets = [0, 34], sizes = [4, 256], strides = [1, 1]} : vector<4x290xf32> to vector<4x256xf32>
    %56 = vector.broadcast %3 : vector<1x256xf32> to vector<4x256xf32>
    %57 = arith.mulf %55, %56 : vector<4x256xf32>
    %c8 = arith.constant 8 : index
    %c0_32 = arith.constant 0 : index
    %c0_33 = arith.constant 0 : index
    %58 = vector.load %arg5[%c8, %c0_32, %c0_33] : memref<9x16x4xf32, #tpu.memory_space<vmem>>, vector<1x16x4xf32>
    %59 = vector.shape_cast %58 : vector<1x16x4xf32> to vector<16x4xf32>
    %cst_34 = arith.constant dense<0.000000e+00> : vector<16x256xf32>
    %60 = tpu.matmul %59, %57, %cst_34 {dimension_numbers = #tpu.dot_dimension_numbers<[1], [0], [0], [1], [0, 0, 1, 1], [], []>} : vector<16x4xf32>, vector<4x256xf32>, vector<16x256xf32> -> vector<16x256xf32>
    %61 = arith.addf %54, %60 : vector<16x256xf32>
    %c0_35 = arith.constant 0 : index
    %c0_36 = arith.constant 0 : index
    %62 = vector.load %arg6[%c0_35, %c0_36] : memref<16x1xf32, #tpu.memory_space<vmem>>, vector<16x1xf32>
    %63 = vector.broadcast %62 : vector<16x1xf32> to vector<16x256xf32>
    %64 = arith.addf %61, %63 : vector<16x256xf32>
    %c0_37 = arith.constant 0 : index
    %c0_38 = arith.constant 0 : index
    %c0_39 = arith.constant 0 : index
    %65 = vector.load %arg3[%c0_37, %c0_38, %c0_39] : memref<1x16x4xf32, #tpu.memory_space<vmem>>, vector<1x16x4xf32>
    %66 = vector.shape_cast %65 : vector<1x16x4xf32> to vector<16x4xf32>
    %cst_40 = arith.constant dense<0.000000e+00> : vector<16x256xf32>
    %67 = tpu.matmul %66, %4, %cst_40 {dimension_numbers = #tpu.dot_dimension_numbers<[1], [0], [0], [1], [0, 0, 1, 1], [], []>} : vector<16x4xf32>, vector<4x256xf32>, vector<16x256xf32> -> vector<16x256xf32>
    %c0_41 = arith.constant 0 : index
    %c0_42 = arith.constant 0 : index
    %c0_43 = arith.constant 0 : index
    %68 = vector.load %arg4[%c0_41, %c0_42, %c0_43] : memref<1x16x1xf32, #tpu.memory_space<vmem>>, vector<1x16x1xf32>
    %69 = vector.shape_cast %68 : vector<1x16x1xf32> to vector<16x1xf32>
    %70 = vector.broadcast %69 : vector<16x1xf32> to vector<16x256xf32>
    %71 = arith.addf %67, %70 : vector<16x256xf32>
    %72 = vector.extract_strided_slice %71 {offsets = [0, 0], sizes = [8, 256], strides = [1, 1]} : vector<16x256xf32> to vector<8x256xf32>
    %cst_44 = arith.constant dense<0xFF800000> : vector<256xf32>
    %73 = vector.multi_reduction <maximumf>, %72, %cst_44 [0] : vector<8x256xf32> to vector<256xf32>
    %74 = vector.shape_cast %73 : vector<256xf32> to vector<1x256xf32>
    %75 = arith.negf %74 : vector<1x256xf32>
    %76 = math.exp %75 : vector<1x256xf32>
    %cst_45 = arith.constant 1.000000e+00 : f32
    %77 = vector.broadcast %cst_45 : f32 to vector<1x256xf32>
    %78 = arith.addf %77, %76 : vector<1x256xf32>
    %79 = arith.divf %77, %78 : vector<1x256xf32>
    %c0_46 = arith.constant 0 : index
    %80 = memref.load %arg8[%c0_46] : memref<2xf32, #tpu.memory_space<smem>>
    %81 = vector.broadcast %80 : f32 to vector<1x256xf32>
    %82 = arith.mulf %79, %81 : vector<1x256xf32>
    %83 = vector.extract_strided_slice %64 {offsets = [0, 0], sizes = [8, 256], strides = [1, 1]} : vector<16x256xf32> to vector<8x256xf32>
    %84 = vector.broadcast %82 : vector<1x256xf32> to vector<8x256xf32>
    %85 = arith.mulf %83, %84 : vector<8x256xf32>
    %86 = vector.extract_strided_slice %71 {offsets = [8, 0], sizes = [8, 256], strides = [1, 1]} : vector<16x256xf32> to vector<8x256xf32>
    %cst_47 = arith.constant dense<0xFF800000> : vector<256xf32>
    %87 = vector.multi_reduction <maximumf>, %86, %cst_47 [0] : vector<8x256xf32> to vector<256xf32>
    %88 = vector.shape_cast %87 : vector<256xf32> to vector<1x256xf32>
    %89 = arith.negf %88 : vector<1x256xf32>
    %90 = math.exp %89 : vector<1x256xf32>
    %cst_48 = arith.constant 1.000000e+00 : f32
    %91 = vector.broadcast %cst_48 : f32 to vector<1x256xf32>
    %92 = arith.addf %91, %90 : vector<1x256xf32>
    %93 = arith.divf %91, %92 : vector<1x256xf32>
    %c1_49 = arith.constant 1 : index
    %94 = memref.load %arg8[%c1_49] : memref<2xf32, #tpu.memory_space<smem>>
    %95 = vector.broadcast %94 : f32 to vector<1x256xf32>
    %96 = arith.mulf %93, %95 : vector<1x256xf32>
    %97 = vector.extract_strided_slice %64 {offsets = [8, 0], sizes = [8, 256], strides = [1, 1]} : vector<16x256xf32> to vector<8x256xf32>
    %98 = vector.broadcast %96 : vector<1x256xf32> to vector<8x256xf32>
    %99 = arith.mulf %97, %98 : vector<8x256xf32>
    %100 = tpu.concatenate %85, %99 in 0 : vector<8x256xf32>, vector<8x256xf32> -> vector<16x256xf32>
    %c0_50 = arith.constant 0 : index
    %c0_51 = arith.constant 0 : index
    %c0_52 = arith.constant 0 : index
    %101 = vector.load %arg9[%c0_50, %c0_51, %c0_52] : memref<1x16x256xf32, #tpu.memory_space<vmem>>, vector<1x16x256xf32>
    %102 = vector.shape_cast %101 : vector<1x16x256xf32> to vector<16x256xf32>
    %103 = vector.shape_cast %100 : vector<16x256xf32> to vector<1x16x256xf32>
    tpu.vector_store %arg9[%c0_50, %c0_51, %c0_52], %103 {strides = array<i32>} : memref<1x16x256xf32, #tpu.memory_space<vmem>>, vector<1x16x256xf32>,
    return
  }
  func.func @transform_0(%arg0: i32, %arg1: i32) -> (i32, i32, i32, i32) {
    %c0_i32 = arith.constant 0 : i32
    %c0_i32_0 = arith.constant 0 : i32
    %c0_i32_1 = arith.constant 0 : i32
    return %arg0, %arg1, %c0_i32, %c0_i32_0 : i32, i32, i32, i32
  }
  func.func @transform_1(%arg0: i32, %arg1: i32) -> (i32, i32, i32) {
    %c0_i32 = arith.constant 0 : i32
    %c0_i32_0 = arith.constant 0 : i32
    %c0_i32_1 = arith.constant 0 : i32
    return %arg0, %c0_i32, %c0_i32_0 : i32, i32, i32
  }
  func.func @transform_2(%arg0: i32, %arg1: i32) -> (i32, i32, i32) {
    %c0_i32 = arith.constant 0 : i32
    %c0_i32_0 = arith.constant 0 : i32
    %c0_i32_1 = arith.constant 0 : i32
    return %arg0, %c0_i32, %c0_i32_0 : i32, i32, i32
  }
  func.func @transform_3(%arg0: i32, %arg1: i32) -> (i32, i32, i32) {
    %c0_i32 = arith.constant 0 : i32
    %c0_i32_0 = arith.constant 0 : i32
    %c0_i32_1 = arith.constant 0 : i32
    %c0_i32_2 = arith.constant 0 : i32
    return %c0_i32, %c0_i32_0, %c0_i32_1 : i32, i32, i32
  }
  func.func @transform_4(%arg0: i32, %arg1: i32) -> (i32, i32) {
    %c0_i32 = arith.constant 0 : i32
    %c0_i32_0 = arith.constant 0 : i32
    %c0_i32_1 = arith.constant 0 : i32
    return %c0_i32, %c0_i32_0 : i32, i32
  }
  func.func @transform_5(%arg0: i32, %arg1: i32) -> (i32, i32) {
    %c0_i32 = arith.constant 0 : i32
    %c0_i32_0 = arith.constant 0 : i32
    %c0_i32_1 = arith.constant 0 : i32
    return %c0_i32, %c0_i32_0 : i32, i32
  }
  func.func @transform_6(%arg0: i32, %arg1: i32) -> i32 {
    %c0_i32 = arith.constant 0 : i32
    %c0_i32_0 = arith.constant 0 : i32
    return %c0_i32 : i32
  }
  func.func @transform_7(%arg0: i32, %arg1: i32) -> (i32, i32, i32) {
    %c0_i32 = arith.constant 0 : i32
    %c0_i32_0 = arith.constant 0 : i32
    return %arg0, %c0_i32, %arg1 : i32, i32, i32
  }
}

module attributes {stable_mosaic.version = 11 : i64} {
  func.func @_attn_kernel(%arg0: i32, %arg1: i32, %arg2: memref<1x1x4x290xf32, #tpu.memory_space<vmem>>, %arg3: memref<1x16x4xf32, #tpu.memory_space<vmem>>, %arg4: memref<1x16x1xf32, #tpu.memory_space<vmem>>, %arg5: memref<9x16x4xf32, #tpu.memory_space<vmem>>, %arg6: memref<16x1xf32, #tpu.memory_space<vmem>>, %arg7: memref<2x256xf32, #tpu.memory_space<vmem>>, %arg8: memref<2xf32, #tpu.memory_space<smem>>, %arg9: memref<1x16x256xf32, #tpu.memory_space<vmem>>) attributes {dimension_semantics = [#tpu.dimension_semantics<parallel>, #tpu.dimension_semantics<parallel>], iteration_bounds = array<i64: 2, 1>, scalar_prefetch = 0 : i64, scratch_operands = 0 : i64, tpu.core_type = #tpu.core_type<tc>, window_params = [{transform_indices = @transform_0, window_bounds = array<i64: 1, 1, 4, 290>}, {transform_indices = @transform_1, window_bounds = array<i64: 1, 16, 4>}, {transform_indices = @transform_2, window_bounds = array<i64: 1, 16, 1>}, {pipeline_mode = #tpu.pipeline_mode<synchronous>, transform_indices = @transform_3, window_bounds = array<i64: 9, 16, 4>}, {pipeline_mode = #tpu.pipeline_mode<synchronous>, transform_indices = @transform_4, window_bounds = array<i64: 16, 1>}, {pipeline_mode = #tpu.pipeline_mode<synchronous>, transform_indices = @transform_5, window_bounds = array<i64: 2, 256>}, {transform_indices = @transform_6, window_bounds = array<i64: 2>}, {transform_indices = @transform_7, window_bounds = array<i64: 1, 16, 256>}]} {
    %c0 = arith.constant 0 : index
    %c0_0 = arith.constant 0 : index
    %c0_1 = arith.constant 0 : index
    %c0_2 = arith.constant 0 : index
    %0 = vector.load %arg2[%c0, %c0_0, %c0_1, %c0_2] : memref<1x1x4x290xf32, #tpu.memory_space<vmem>>, vector<1x1x4x290xf32>
    %1 = vector.shape_cast %0 : vector<1x1x4x290xf32> to vector<4x290xf32>
    %c0_3 = arith.constant 0 : index
    %c0_4 = arith.constant 0 : index
    %2 = vector.load %arg7[%c0_3, %c0_4] : memref<2x256xf32, #tpu.memory_space<vmem>>, vector<1x256xf32>
    %c1 = arith.constant 1 : index
    %c0_5 = arith.constant 0 : index
    %3 = vector.load %arg7[%c1, %c0_5] : memref<2x256xf32, #tpu.memory_space<vmem>>, vector<1x256xf32>
    %4 = vector.extract_strided_slice %1 {offsets = [0, 17], sizes = [4, 256], strides = [1, 1]} : vector<4x290xf32> to vector<4x256xf32>
    %cst = arith.constant 0.000000e+00 : f32
    %5 = vector.broadcast %cst : f32 to vector<16x256xf32>
    %6 = vector.extract_strided_slice %1 {offsets = [0, 0], sizes = [4, 256], strides = [1, 1]} : vector<4x290xf32> to vector<4x256xf32>
    %7 = vector.broadcast %2 : vector<1x256xf32> to vector<4x256xf32>
    %8 = arith.mulf %6, %7 : vector<4x256xf32>
    %c0_6 = arith.constant 0 : index
    %c0_7 = arith.constant 0 : index
    %c0_8 = arith.constant 0 : index
    %9 = vector.load %arg5[%c0_6, %c0_7, %c0_8] : memref<9x16x4xf32, #tpu.memory_space<vmem>>, vector<1x16x4xf32>
    %10 = vector.shape_cast %9 : vector<1x16x4xf32> to vector<16x4xf32>
    %cst_9 = arith.constant dense<0.000000e+00> : vector<16x256xf32>
    %11 = tpu.matmul %10, %8, %cst_9 {dimension_numbers = #tpu.dot_dimension_numbers<[1], [0], [0], [1], [0, 0, 1, 1], [], []>} : vector<16x4xf32>, vector<4x256xf32>, vector<16x256xf32> -> vector<16x256xf32>
    %12 = arith.addf %5, %11 : vector<16x256xf32>
    %13 = vector.extract_strided_slice %1 {offsets = [0, 1], sizes = [4, 256], strides = [1, 1]} : vector<4x290xf32> to vector<4x256xf32>
    %c1_10 = arith.constant 1 : index
    %c0_11 = arith.constant 0 : index
    %c0_12 = arith.constant 0 : index
    %14 = vector.load %arg5[%c1_10, %c0_11, %c0_12] : memref<9x16x4xf32, #tpu.memory_space<vmem>>, vector<1x16x4xf32>
    %15 = vector.shape_cast %14 : vector<1x16x4xf32> to vector<16x4xf32>
    %cst_13 = arith.constant dense<0.000000e+00> : vector<16x256xf32>
    %16 = tpu.matmul %15, %13, %cst_13 {dimension_numbers = #tpu.dot_dimension_numbers<[1], [0], [0], [1], [0, 0, 1, 1], [], []>} : vector<16x4xf32>, vector<4x256xf32>, vector<16x256xf32> -> vector<16x256xf32>
    %17 = arith.addf %12, %16 : vector<16x256xf32>
    %18 = vector.extract_strided_slice %1 {offsets = [0, 2], sizes = [4, 256], strides = [1, 1]} : vector<4x290xf32> to vector<4x256xf32>
    %19 = vector.broadcast %3 : vector<1x256xf32> to vector<4x256xf32>
    %20 = arith.mulf %18, %19 : vector<4x256xf32>
    %c2 = arith.constant 2 : index
    %c0_14 = arith.constant 0 : index
    %c0_15 = arith.constant 0 : index
    %21 = vector.load %arg5[%c2, %c0_14, %c0_15] : memref<9x16x4xf32, #tpu.memory_space<vmem>>, vector<1x16x4xf32>
    %22 = vector.shape_cast %21 : vector<1x16x4xf32> to vector<16x4xf32>
    %cst_16 = arith.constant dense<0.000000e+00> : vector<16x256xf32>
    %23 = tpu.matmul %22, %20, %cst_16 {dimension_numbers = #tpu.dot_dimension_numbers<[1], [0], [0], [1], [0, 0, 1, 1], [], []>} : vector<16x4xf32>, vector<4x256xf32>, vector<16x256xf32> -> vector<16x256xf32>
    %24 = arith.addf %17, %23 : vector<16x256xf32>
    %25 = vector.extract_strided_slice %1 {offsets = [0, 16], sizes = [4, 256], strides = [1, 1]} : vector<4x290xf32> to vector<4x256xf32>
    %26 = vector.broadcast %2 : vector<1x256xf32> to vector<4x256xf32>
    %27 = arith.mulf %25, %26 : vector<4x256xf32>
    %c3 = arith.constant 3 : index
    %c0_17 = arith.constant 0 : index
    %c0_18 = arith.constant 0 : index
    %28 = vector.load %arg5[%c3, %c0_17, %c0_18] : memref<9x16x4xf32, #tpu.memory_space<vmem>>, vector<1x16x4xf32>
    %29 = vector.shape_cast %28 : vector<1x16x4xf32> to vector<16x4xf32>
    %cst_19 = arith.constant dense<0.000000e+00> : vector<16x256xf32>
    %30 = tpu.matmul %29, %27, %cst_19 {dimension_numbers = #tpu.dot_dimension_numbers<[1], [0], [0], [1], [0, 0, 1, 1], [], []>} : vector<16x4xf32>, vector<4x256xf32>, vector<16x256xf32> -> vector<16x256xf32>
    %31 = arith.addf %24, %30 : vector<16x256xf32>
    %c4 = arith.constant 4 : index
    %c0_20 = arith.constant 0 : index
    %c0_21 = arith.constant 0 : index
    %32 = vector.load %arg5[%c4, %c0_20, %c0_21] : memref<9x16x4xf32, #tpu.memory_space<vmem>>, vector<1x16x4xf32>
    %33 = vector.shape_cast %32 : vector<1x16x4xf32> to vector<16x4xf32>
    %cst_22 = arith.constant dense<0.000000e+00> : vector<16x256xf32>
    %34 = tpu.matmul %33, %4, %cst_22 {dimension_numbers = #tpu.dot_dimension_numbers<[1], [0], [0], [1], [0, 0, 1, 1], [], []>} : vector<16x4xf32>, vector<4x256xf32>, vector<16x256xf32> -> vector<16x256xf32>
    %35 = arith.addf %31, %34 : vector<16x256xf32>
    %36 = vector.extract_strided_slice %1 {offsets = [0, 18], sizes = [4, 256], strides = [1, 1]} : vector<4x290xf32> to vector<4x256xf32>
    %37 = vector.broadcast %3 : vector<1x256xf32> to vector<4x256xf32>
    %38 = arith.mulf %36, %37 : vector<4x256xf32>
    %c5 = arith.constant 5 : index
    %c0_23 = arith.constant 0 : index
    %c0_24 = arith.constant 0 : index
    %39 = vector.load %arg5[%c5, %c0_23, %c0_24] : memref<9x16x4xf32, #tpu.memory_space<vmem>>, vector<1x16x4xf32>
    %40 = vector.shape_cast %39 : vector<1x16x4xf32> to vector<16x4xf32>
    %cst_25 = arith.constant dense<0.000000e+00> : vector<16x256xf32>
    %41 = tpu.matmul %40, %38, %cst_25 {dimension_numbers = #tpu.dot_dimension_numbers<[1], [0], [0], [1], [0, 0, 1, 1], [], []>} : vector<16x4xf32>, vector<4x256xf32>, vector<16x256xf32> -> vector<16x256xf32>
    %42 = arith.addf %35, %41 : vector<16x256xf32>
    %43 = vector.extract_strided_slice %1 {offsets = [0, 32], sizes = [4, 256], strides = [1, 1]} : vector<4x290xf32> to vector<4x256xf32>
    %44 = vector.broadcast %2 : vector<1x256xf32> to vector<4x256xf32>
    %45 = arith.mulf %43, %44 : vector<4x256xf32>
    %c6 = arith.constant 6 : index
    %c0_26 = arith.constant 0 : index
    %c0_27 = arith.constant 0 : index
    %46 = vector.load %arg5[%c6, %c0_26, %c0_27] : memref<9x16x4xf32, #tpu.memory_space<vmem>>, vector<1x16x4xf32>
    %47 = vector.shape_cast %46 : vector<1x16x4xf32> to vector<16x4xf32>
    %cst_28 = arith.constant dense<0.000000e+00> : vector<16x256xf32>
    %48 = tpu.matmul %47, %45, %cst_28 {dimension_numbers = #tpu.dot_dimension_numbers<[1], [0], [0], [1], [0, 0, 1, 1], [], []>} : vector<16x4xf32>, vector<4x256xf32>, vector<16x256xf32> -> vector<16x256xf32>
    %49 = arith.addf %42, %48 : vector<16x256xf32>
    %50 = vector.extract_strided_slice %1 {offsets = [0, 33], sizes = [4, 256], strides = [1, 1]} : vector<4x290xf32> to vector<4x256xf32>
    %c7 = arith.constant 7 : index
    %c0_29 = arith.constant 0 : index
    %c0_30 = arith.constant 0 : index
    %51 = vector.load %arg5[%c7, %c0_29, %c0_30] : memref<9x16x4xf32, #tpu.memory_space<vmem>>, vector<1x16x4xf32>
    %52 = vector.shape_cast %51 : vector<1x16x4xf32> to vector<16x4xf32>
    %cst_31 = arith.constant dense<0.000000e+00> : vector<16x256xf32>
    %53 = tpu.matmul %52, %50, %cst_31 {dimension_numbers = #tpu.dot_dimension_numbers<[1], [0], [0], [1], [0, 0, 1, 1], [], []>} : vector<16x4xf32>, vector<4x256xf32>, vector<16x256xf32> -> vector<16x256xf32>
    %54 = arith.addf %49, %53 : vector<16x256xf32>
    %55 = vector.extract_strided_slice %1 {offsets = [0, 34], sizes = [4, 256], strides = [1, 1]} : vector<4x290xf32> to vector<4x256xf32>
    %56 = vector.broadcast %3 : vector<1x256xf32> to vector<4x256xf32>
    %57 = arith.mulf %55, %56 : vector<4x256xf32>
    %c8 = arith.constant 8 : index
    %c0_32 = arith.constant 0 : index
    %c0_33 = arith.constant 0 : index
    %58 = vector.load %arg5[%c8, %c0_32, %c0_33] : memref<9x16x4xf32, #tpu.memory_space<vmem>>, vector<1x16x4xf32>
    %59 = vector.shape_cast %58 : vector<1x16x4xf32> to vector<16x4xf32>
    %cst_34 = arith.constant dense<0.000000e+00> : vector<16x256xf32>
    %60 = tpu.matmul %59, %57, %cst_34 {dimension_numbers = #tpu.dot_dimension_numbers<[1], [0], [0], [1], [0, 0, 1, 1], [], []>} : vector<16x4xf32>, vector<4x256xf32>, vector<16x256xf32> -> vector<16x256xf32>
    %61 = arith.addf %54, %60 : vector<16x256xf32>
    %c0_35 = arith.constant 0 : index
    %c0_36 = arith.constant 0 : index
    %62 = vector.load %arg6[%c0_35, %c0_36] : memref<16x1xf32, #tpu.memory_space<vmem>>, vector<16x1xf32>
    %63 = vector.broadcast %62 : vector<16x1xf32> to vector<16x256xf32>
    %64 = arith.addf %61, %63 : vector<16x256xf32>
    %c0_37 = arith.constant 0 : index
    %c0_38 = arith.constant 0 : index
    %c0_39 = arith.constant 0 : index
    %65 = vector.load %arg3[%c0_37, %c0_38, %c0_39] : memref<1x16x4xf32, #tpu.memory_space<vmem>>, vector<1x16x4xf32>
    %66 = vector.shape_cast %65 : vector<1x16x4xf32> to vector<16x4xf32>
    %cst_40 = arith.constant dense<0.000000e+00> : vector<16x256xf32>
    %67 = tpu.matmul %66, %4, %cst_40 {dimension_numbers = #tpu.dot_dimension_numbers<[1], [0], [0], [1], [0, 0, 1, 1], [], []>} : vector<16x4xf32>, vector<4x256xf32>, vector<16x256xf32> -> vector<16x256xf32>
    %c0_41 = arith.constant 0 : index
    %c0_42 = arith.constant 0 : index
    %c0_43 = arith.constant 0 : index
    %68 = vector.load %arg4[%c0_41, %c0_42, %c0_43] : memref<1x16x1xf32, #tpu.memory_space<vmem>>, vector<1x16x1xf32>
    %69 = vector.shape_cast %68 : vector<1x16x1xf32> to vector<16x1xf32>
    %70 = vector.broadcast %69 : vector<16x1xf32> to vector<16x256xf32>
    %71 = arith.addf %67, %70 : vector<16x256xf32>
    %72 = vector.extract_strided_slice %71 {offsets = [0, 0], sizes = [8, 256], strides = [1, 1]} : vector<16x256xf32> to vector<8x256xf32>
    %cst_44 = arith.constant dense<0xFF800000> : vector<256xf32>
    %73 = vector.multi_reduction <maximumf>, %72, %cst_44 [0] : vector<8x256xf32> to vector<256xf32>
    %74 = vector.shape_cast %73 : vector<256xf32> to vector<1x256xf32>
    %75 = arith.negf %74 : vector<1x256xf32>
    %76 = math.exp %75 : vector<1x256xf32>
    %cst_45 = arith.constant 1.000000e+00 : f32
    %77 = vector.broadcast %cst_45 : f32 to vector<1x256xf32>
    %78 = arith.addf %77, %76 : vector<1x256xf32>
    %79 = arith.divf %77, %78 : vector<1x256xf32>
    %c0_46 = arith.constant 0 : index
    %80 = memref.load %arg8[%c0_46] : memref<2xf32, #tpu.memory_space<smem>>
    %81 = vector.broadcast %80 : f32 to vector<1x256xf32>
    %82 = arith.mulf %79, %81 : vector<1x256xf32>
    %83 = vector.extract_strided_slice %64 {offsets = [0, 0], sizes = [8, 256], strides = [1, 1]} : vector<16x256xf32> to vector<8x256xf32>
    %84 = vector.broadcast %82 : vector<1x256xf32> to vector<8x256xf32>
    %85 = arith.mulf %83, %84 : vector<8x256xf32>
    %86 = vector.extract_strided_slice %71 {offsets = [8, 0], sizes = [8, 256], strides = [1, 1]} : vector<16x256xf32> to vector<8x256xf32>
    %cst_47 = arith.constant dense<0xFF800000> : vector<256xf32>
    %87 = vector.multi_reduction <maximumf>, %86, %cst_47 [0] : vector<8x256xf32> to vector<256xf32>
    %88 = vector.shape_cast %87 : vector<256xf32> to vector<1x256xf32>
    %89 = arith.negf %88 : vector<1x256xf32>
    %90 = math.exp %89 : vector<1x256xf32>
    %cst_48 = arith.constant 1.000000e+00 : f32
    %91 = vector.broadcast %cst_48 : f32 to vector<1x256xf32>
    %92 = arith.addf %91, %90 : vector<1x256xf32>
    %93 = arith.divf %91, %92 : vector<1x256xf32>
    %c1_49 = arith.constant 1 : index
    %94 = memref.load %arg8[%c1_49] : memref<2xf32, #tpu.memory_space<smem>>
    %95 = vector.broadcast %94 : f32 to vector<1x256xf32>
    %96 = arith.mulf %93, %95 : vector<1x256xf32>
    %97 = vector.extract_strided_slice %64 {offsets = [8, 0], sizes = [8, 256], strides = [1, 1]} : vector<16x256xf32> to vector<8x256xf32>
    %98 = vector.broadcast %96 : vector<1x256xf32> to vector<8x256xf32>
    %99 = arith.mulf %97, %98 : vector<8x256xf32>
    %100 = tpu.concatenate %85, %99 in 0 : vector<8x256xf32>, vector<8x256xf32> -> vector<16x256xf32>
    %c0_50 = arith.constant 0 : index
    %c0_51 = arith.constant 0 : index
    %c0_52 = arith.constant 0 : index
    %101 = vector.load %arg9[%c0_50, %c0_51, %c0_52] : memref<1x16x256xf32, #tpu.memory_space<vmem>>, vector<1x16x256xf32>
    %102 = vector.shape_cast %101 : vector<1x16x256xf32> to vector<16x256xf32>
    %103 = vector.shape_cast %100 : vector<16x256xf32> to vector<1x16x256xf32>
    tpu.vector_store %arg9[%c0_50, %c0_51, %c0_52], %103 {strides = array<i32>} : memref<1x16x256xf32, #tpu.memory_space<vmem>>, vector<1x16x256xf32>,
    return
  }
  func.func @transform_0(%arg0: i32, %arg1: i32) -> (i32, i32, i32, i32) {
    %c0_i32 = arith.constant 0 : i32
    %c0_i32_0 = arith.constant 0 : i32
    %c0_i32_1 = arith.constant 0 : i32
    return %arg0, %arg1, %c0_i32, %c0_i32_0 : i32, i32, i32, i32
  }
  func.func @transform_1(%arg0: i32, %arg1: i32) -> (i32, i32, i32) {
    %c0_i32 = arith.constant 0 : i32
    %c0_i32_0 = arith.constant 0 : i32
    %c0_i32_1 = arith.constant 0 : i32
    return %arg0, %c0_i32, %c0_i32_0 : i32, i32, i32
  }
  func.func @transform_2(%arg0: i32, %arg1: i32) -> (i32, i32, i32) {
    %c0_i32 = arith.constant 0 : i32
    %c0_i32_0 = arith.constant 0 : i32
    %c0_i32_1 = arith.constant 0 : i32
    return %arg0, %c0_i32, %c0_i32_0 : i32, i32, i32
  }
  func.func @transform_3(%arg0: i32, %arg1: i32) -> (i32, i32, i32) {
    %c0_i32 = arith.constant 0 : i32
    %c0_i32_0 = arith.constant 0 : i32
    %c0_i32_1 = arith.constant 0 : i32
    %c0_i32_2 = arith.constant 0 : i32
    return %c0_i32, %c0_i32_0, %c0_i32_1 : i32, i32, i32
  }
  func.func @transform_4(%arg0: i32, %arg1: i32) -> (i32, i32) {
    %c0_i32 = arith.constant 0 : i32
    %c0_i32_0 = arith.constant 0 : i32
    %c0_i32_1 = arith.constant 0 : i32
    return %c0_i32, %c0_i32_0 : i32, i32
  }
  func.func @transform_5(%arg0: i32, %arg1: i32) -> (i32, i32) {
    %c0_i32 = arith.constant 0 : i32
    %c0_i32_0 = arith.constant 0 : i32
    %c0_i32_1 = arith.constant 0 : i32
    return %c0_i32, %c0_i32_0 : i32, i32
  }
  func.func @transform_6(%arg0: i32, %arg1: i32) -> i32 {
    %c0_i32 = arith.constant 0 : i32
    %c0_i32_0 = arith.constant 0 : i32
    return %c0_i32 : i32
  }
  func.func @transform_7(%arg0: i32, %arg1: i32) -> (i32, i32, i32) {
    %c0_i32 = arith.constant 0 : i32
    %c0_i32_0 = arith.constant 0 : i32
    return %arg0, %c0_i32, %arg1 : i32, i32, i32
  }
}

</mosaic_0001>

<llo_original>
// kernel: tpu_custom_call.1
$region0: #{tpu_custom_call.1}
  #allocation0 [shape = 'u32[]', space=smem, size = 0x4, offset = 0x4, fixed_abs, tag = 'smem constant byte address 0x4 - core index']
  #allocation1 [shape = 'u32[144,128]{1,0:T(1,128)}', space=vmem, size = 0x12000, scoped, tag = 'internal scratch']
  %s0 = inlined_call_operand.vmem [shape: f32[2,1,4,290], index: 0, kind: input, shape index: {}]
  %s1 = inlined_call_operand.vmem [shape: f32[2,16,4], index: 1, kind: input, shape index: {}]
  %s2 = inlined_call_operand.vmem [shape: f32[2,16,1], index: 2, kind: input, shape index: {}]
  %s3 = inlined_call_operand.vmem [shape: f32[9,16,4], index: 3, kind: input, shape index: {}]
  %s4 = inlined_call_operand.vmem [shape: f32[16,1], index: 4, kind: input, shape index: {}]
  %s5 = inlined_call_operand.vmem [shape: f32[2,256], index: 5, kind: input, shape index: {}]
  %s6 = inlined_call_operand.vmem [shape: f32[2], index: 6, kind: input, shape index: {}]
  %s7 = inlined_call_operand.hbm [shape: f32[2,16,256], index: 7, kind: output, shape index: {}]
  %s8 = sld [smem:[#allocation0]]
  $region65: #{tpu_custom_call.1} parent=0
    _
  %s10 = ssub.s32 1, %s8
  %s11 = scalar_select 0, %s10, %s8
  $region1: #{tpu_custom_call.1} parent=0
    #allocation2 [shape = 'u8[512]{0}', space=smem, size = 0x200, scoped, tag = 'input window, operand 6, single buffered']
    #allocation3 [shape = 's32[2]{0}', space=sflag, size = 0x8, scoped, tag = 'scoped memory for tpu_custom_call.1']
    #allocation4 [shape = 's32[2]{0}', space=sflag, size = 0x8, scoped, tag = 'scoped memory for tpu_custom_call.1']
    #allocation5 [shape = 'u8[32768]{0}', space=vmem, size = 0x8000, scoped, tag = 'output window, operand 0']
    %12 = vsyncpa [#allocation4], 0
    %13 = vsyncpa [#allocation3], 0
    %s14 = scalar_lea.sflag [#allocation3], 1
    %15 = vsyncpa %s14, 0
    loop: start=0, step=1, limit=4
    $region2: #{tpu_custom_call.1} parent=1 // loop_pre_header
      _
    $region3: #{tpu_custom_call.1} parent=1 // loop_header
      %s17 = sphi 0, %s21
      %p18 = scmp.ge.s32.totalorder %s17, 4
      %s24 = sphi 0, %s36
      %s25 = sphi 0, %s32
      %s26 = sphi 0, %s24
      %s27 = sphi 0, %s25
      %s28 = sphi 0, %s26
      %s29 = sphi 0, %s27
      %s41 = sphi 0, %s43
      %s44 = sphi 0, %s41
      %s45 = sphi 0, %s44
      %s61 = sphi 0, %s45
      %s67 = sphi 0, %s69
      %s70 = sphi 0, %s67
      %s71 = sphi 0, %s70
      %s87 = sphi 0, %s71
      %s93 = sphi 0, %s95
      %s96 = sphi 0, %s93
      %s97 = sphi 0, %s96
      %s113 = sphi 0, %s97
      %s117 = sphi 0, %s117
      %s119 = sphi 0, %s117
      %s120 = sphi 0, %s119
      %s134 = sphi 0, %s120
      %s138 = sphi 0, %s138
      %s140 = sphi 0, %s138
      %s141 = sphi 0, %s140
      %s155 = sphi 0, %s141
      %s159 = sphi 0, %s159
      %s161 = sphi 0, %s159
      %s162 = sphi 0, %s161
      %s176 = sphi 0, %s162
      %s180 = sphi 0, %s180
      %s182 = sphi 0, %s180
      %s183 = sphi 0, %s182
      %s197 = sphi 0, %s183
      %s205 = sphi 0, %s207
      %s208 = sphi 0, %s205
      %s209 = sphi 0, %s208
      %s225 = sphi 0, %s209
    $region4: #{tpu_custom_call.1} parent=1 // loop_header_branch
      %20 = sbr.rel (%p18) target = $region8
    $region5: #{tpu_custom_call.1} parent=1 // loop_body
      %s22 = ssub.s32 %s17, 1
      %s23 = ssub.s32 %s17, 2
      %s30 = sadd.s32 1, %s25
      %p31 = scmp.ge.s32.totalorder %s30, 1
      %s32 = scalar_select %p31, 0, %s30
      %s33 = sadd.s32 1, %s24
      %s34 = scalar_select %p31, %s33, %s24
      %p35 = scmp.ge.s32.totalorder %s34, 2
      %s36 = scalar_select %p35, 0, %s34
      %s37 = ssub.s32 %s24, %s36
      %s38 = ssub.s32 %s25, %s32
      %s39 = sor.u32 %s37, %s38
      %p40 = scmp.eq.s32.totalorder %s39, 0
      %s42 = sadd.s32 %s41, 1
      %s43 = scalar_select %p40, %s41, %s42
      %p46 = pneg %p40
      %p47 = scmp.eq.s32.totalorder %s17, 1
      %p48 = por %p46, %p47
      %p49 = scmp.ne.s32.totalorder %s41, %s44
      %p50 = scmp.eq.s32.totalorder %s17, 0
      %p51 = por %p49, %p50
      %p52 = scmp.ne.s32.totalorder %s41, %s44
      %p53 = scmp.eq.s32.totalorder %s22, 1
      %p54 = por %p52, %p53
      %p55 = scmp.ne.s32.totalorder %s44, %s45
      %p56 = scmp.eq.s32.totalorder %s22, 0
      %p57 = por %p55, %p56
      %p58 = scmp.ne.s32.totalorder %s44, %s45
      %p59 = scmp.eq.s32.totalorder %s23, 1
      %p60 = por %p58, %p59
      %p62 = scmp.ne.s32.totalorder %s45, %s61
      %p63 = scmp.eq.s32.totalorder %s23, 0
      %p64 = por %p62, %p63
      %s65 = ssub.s32 %s24, %s36
      %p66 = scmp.eq.s32.totalorder %s65, 0
      %s68 = sadd.s32 %s67, 1
      %s69 = scalar_select %p66, %s67, %s68
      %p72 = pneg %p66
      %p73 = scmp.eq.s32.totalorder %s17, 1
      %p74 = por %p72, %p73
      %p75 = scmp.ne.s32.totalorder %s67, %s70
      %p76 = scmp.eq.s32.totalorder %s17, 0
      %p77 = por %p75, %p76
      %p78 = scmp.ne.s32.totalorder %s67, %s70
      %p79 = scmp.eq.s32.totalorder %s22, 1
      %p80 = por %p78, %p79
      %p81 = scmp.ne.s32.totalorder %s70, %s71
      %p82 = scmp.eq.s32.totalorder %s22, 0
      %p83 = por %p81, %p82
      %p84 = scmp.ne.s32.totalorder %s70, %s71
      %p85 = scmp.eq.s32.totalorder %s23, 1
      %p86 = por %p84, %p85
      %p88 = scmp.ne.s32.totalorder %s71, %s87
      %p89 = scmp.eq.s32.totalorder %s23, 0
      %p90 = por %p88, %p89
      %s91 = ssub.s32 %s24, %s36
      %p92 = scmp.eq.s32.totalorder %s91, 0
      %s94 = sadd.s32 %s93, 1
      %s95 = scalar_select %p92, %s93, %s94
      %p98 = pneg %p92
      %p99 = scmp.eq.s32.totalorder %s17, 1
      %p100 = por %p98, %p99
      %p101 = scmp.ne.s32.totalorder %s93, %s96
      %p102 = scmp.eq.s32.totalorder %s17, 0
      %p103 = por %p101, %p102
      %p104 = scmp.ne.s32.totalorder %s93, %s96
      %p105 = scmp.eq.s32.totalorder %s22, 1
      %p106 = por %p104, %p105
      %p107 = scmp.ne.s32.totalorder %s96, %s97
      %p108 = scmp.eq.s32.totalorder %s22, 0
      %p109 = por %p107, %p108
      %p110 = scmp.ne.s32.totalorder %s96, %s97
      %p111 = scmp.eq.s32.totalorder %s23, 1
      %p112 = por %p110, %p111
      %p114 = scmp.ne.s32.totalorder %s97, %s113
      %p115 = scmp.eq.s32.totalorder %s23, 0
      %p116 = por %p114, %p115
      %s118 = sadd.s32 %s117, 1
      %p121 = scmp.eq.s32.totalorder %s17, 1
      %p122 = scmp.ne.s32.totalorder %s117, %s119
      %p123 = scmp.eq.s32.totalorder %s17, 0
      %p124 = por %p122, %p123
      %p125 = scmp.ne.s32.totalorder %s117, %s119
      %p126 = scmp.eq.s32.totalorder %s22, 1
      %p127 = por %p125, %p126
      %p128 = scmp.ne.s32.totalorder %s119, %s120
      %p129 = scmp.eq.s32.totalorder %s22, 0
      %p130 = por %p128, %p129
      %p131 = scmp.ne.s32.totalorder %s119, %s120
      %p132 = scmp.eq.s32.totalorder %s23, 1
      %p133 = por %p131, %p132
      %p135 = scmp.ne.s32.totalorder %s120, %s134
      %p136 = scmp.eq.s32.totalorder %s23, 0
      %p137 = por %p135, %p136
      %s139 = sadd.s32 %s138, 1
      %p142 = scmp.eq.s32.totalorder %s17, 1
      %p143 = scmp.ne.s32.totalorder %s138, %s140
      %p144 = scmp.eq.s32.totalorder %s17, 0
      %p145 = por %p143, %p144
      %p146 = scmp.ne.s32.totalorder %s138, %s140
      %p147 = scmp.eq.s32.totalorder %s22, 1
      %p148 = por %p146, %p147
      %p149 = scmp.ne.s32.totalorder %s140, %s141
      %p150 = scmp.eq.s32.totalorder %s22, 0
      %p151 = por %p149, %p150
      %p152 = scmp.ne.s32.totalorder %s140, %s141
      %p153 = scmp.eq.s32.totalorder %s23, 1
      %p154 = por %p152, %p153
      %p156 = scmp.ne.s32.totalorder %s141, %s155
      %p157 = scmp.eq.s32.totalorder %s23, 0
      %p158 = por %p156, %p157
      %s160 = sadd.s32 %s159, 1
      %p163 = scmp.eq.s32.totalorder %s17, 1
      %p164 = scmp.ne.s32.totalorder %s159, %s161
      %p165 = scmp.eq.s32.totalorder %s17, 0
      %p166 = por %p164, %p165
      %p167 = scmp.ne.s32.totalorder %s159, %s161
      %p168 = scmp.eq.s32.totalorder %s22, 1
      %p169 = por %p167, %p168
      %p170 = scmp.ne.s32.totalorder %s161, %s162
      %p171 = scmp.eq.s32.totalorder %s22, 0
      %p172 = por %p170, %p171
      %p173 = scmp.ne.s32.totalorder %s161, %s162
      %p174 = scmp.eq.s32.totalorder %s23, 1
      %p175 = por %p173, %p174
      %p177 = scmp.ne.s32.totalorder %s162, %s176
      %p178 = scmp.eq.s32.totalorder %s23, 0
      %p179 = por %p177, %p178
      %s181 = sadd.s32 %s180, 1
      %p184 = scmp.eq.s32.totalorder %s17, 1
      %p185 = scmp.ne.s32.totalorder %s180, %s182
      %p186 = scmp.eq.s32.totalorder %s17, 0
      %p187 = por %p185, %p186
      %p188 = scmp.ne.s32.totalorder %s180, %s182
      %p189 = scmp.eq.s32.totalorder %s22, 1
      %p190 = por %p188, %p189
      %p191 = scmp.ne.s32.totalorder %s182, %s183
      %p192 = scmp.eq.s32.totalorder %s22, 0
      %p193 = por %p191, %p192
      %p194 = scmp.ne.s32.totalorder %s182, %s183
      %p195 = scmp.eq.s32.totalorder %s23, 1
      %p196 = por %p194, %p195
      %p198 = scmp.ne.s32.totalorder %s183, %s197
      %p199 = scmp.eq.s32.totalorder %s23, 0
      %p200 = por %p198, %p199
      %s201 = ssub.s32 %s24, %s36
      %s202 = ssub.s32 %s25, %s32
      %s203 = sor.u32 %s201, %s202
      %p204 = scmp.eq.s32.totalorder %s203, 0
      %s206 = sadd.s32 %s205, 1
      %s207 = scalar_select %p204, %s205, %s206
      %p210 = pneg %p204
      %p211 = scmp.eq.s32.totalorder %s17, 1
      %p212 = por %p210, %p211
      %p213 = scmp.ne.s32.totalorder %s205, %s208
      %p214 = scmp.eq.s32.totalorder %s17, 0
      %p215 = por %p213, %p214
      %p216 = scmp.ne.s32.totalorder %s205, %s208
      %p217 = scmp.eq.s32.totalorder %s22, 1
      %p218 = por %p216, %p217
      %p219 = scmp.ne.s32.totalorder %s208, %s209
      %p220 = scmp.eq.s32.totalorder %s22, 0
      %p221 = por %p219, %p220
      %p222 = scmp.ne.s32.totalorder %s208, %s209
      %p223 = scmp.eq.s32.totalorder %s23, 1
      %p224 = por %p222, %p223
      %p226 = scmp.ne.s32.totalorder %s209, %s225
      %p227 = scmp.eq.s32.totalorder %s23, 0
      %p228 = por %p226, %p227
      %p229 = scmp.le.s32.totalorder 1, %s17
      %p230 = scmp.lt.s32.totalorder %s17, 3
      %p231 = pnand %p229, %p230
      %p232 = pneg %p231
      // Predicated region
      $region9: #{tpu_custom_call.1} parent=5 // pred_check
        _
      $region10: #{tpu_custom_call.1} parent=5 // pred_check_branch
        %234 = sbr.rel (%p231) target = $region12
      $region11: #{tpu_custom_call.1} parent=5 // pred_region
        %s235 = ssub.s32 %s17, 1
        // Predicated region
        $region13: #{tpu_custom_call.1} parent=11 // pred_check
          %p236 = pneg %p130
        $region14: #{tpu_custom_call.1} parent=11 // pred_check_branch
          %238 = sbr.rel (%p236) target = $region16
        $region15: #{tpu_custom_call.1} parent=11 // pred_region
          _
        $region16: #{tpu_custom_call.1} parent=11 // pred_fallthru
          _
        // Predicated region
        $region17: #{tpu_custom_call.1} parent=11 // pred_check
          %p239 = pneg %p151
        $region18: #{tpu_custom_call.1} parent=11 // pred_check_branch
          %241 = sbr.rel (%p239) target = $region20
        $region19: #{tpu_custom_call.1} parent=11 // pred_region
          _
        $region20: #{tpu_custom_call.1} parent=11 // pred_fallthru
          _
        // Predicated region
        $region21: #{tpu_custom_call.1} parent=11 // pred_check
          %p242 = pneg %p172
        $region22: #{tpu_custom_call.1} parent=11 // pred_check_branch
          %244 = sbr.rel (%p242) target = $region24
        $region23: #{tpu_custom_call.1} parent=11 // pred_region
          _
        $region24: #{tpu_custom_call.1} parent=11 // pred_fallthru
          _
        // Predicated region
        $region25: #{tpu_custom_call.1} parent=11 // pred_check
          %p245 = pneg %p193
        $region26: #{tpu_custom_call.1} parent=11 // pred_check_branch
          %247 = sbr.rel (%p245) target = $region28
        $region27: #{tpu_custom_call.1} parent=11 // pred_region
          %s249 = ssub.s32 16, 16
          %250 = vsyncadd [#allocation4], %s249
          %s252 = sshll.u32 %s6, 4
          %s253 = int_to_ptr.vmem [resolvable:$true] %s252
          %255 = dma.vmem_to_smem %s253, 16, [#allocation2], [#allocation4]
        $region28: #{tpu_custom_call.1} parent=11 // pred_fallthru
          _
      $region12: #{tpu_custom_call.1} parent=5 // pred_fallthru
        _
      %p256 = scmp.lt.s32.totalorder %s17, 2
      // Predicated region
      $region29: #{tpu_custom_call.1} parent=5 // pred_check
        %p257 = pneg %p256
      $region30: #{tpu_custom_call.1} parent=5 // pred_check_branch
        %259 = sbr.rel (%p257) target = $region32
      $region31: #{tpu_custom_call.1} parent=5 // pred_region
        // Predicated region
        $region33: #{tpu_custom_call.1} parent=31 // pred_check
          %p260 = pneg %p51
        $region34: #{tpu_custom_call.1} parent=31 // pred_check_branch
          %262 = sbr.rel (%p260) target = $region36
        $region35: #{tpu_custom_call.1} parent=31 // pred_region
          %p263 = scmp.lt.s32.totalorder %s24, 1
          %s264 = scalar_select %p263, %s24, 1
          %p265 = scmp.lt.s32.totalorder %s25, 0
          %s266 = scalar_select %p265, %s25, 0
          %s267 = smul.addr %s266, 3
          %s268 = smul.addr %s264, 3
          %s269 = sadd.s32 %s267, %s268
          %s270 = smul.addr %s269, 4
          %s271 = scalar_lea.vmem %s0, %s270
        $region36: #{tpu_custom_call.1} parent=31 // pred_fallthru
          _
        // Predicated region
        $region37: #{tpu_custom_call.1} parent=31 // pred_check
          %p272 = pneg %p77
        $region38: #{tpu_custom_call.1} parent=31 // pred_check_branch
          %274 = sbr.rel (%p272) target = $region40
        $region39: #{tpu_custom_call.1} parent=31 // pred_region
          %p275 = scmp.lt.s32.totalorder %s24, 1
          %s276 = scalar_select %p275, %s24, 1
          %s277 = smul.addr %s276, 2
          %s278 = smul.addr %s277, 8
          %s279 = scalar_lea.vmem %s1, %s278
        $region40: #{tpu_custom_call.1} parent=31 // pred_fallthru
          _
        // Predicated region
        $region41: #{tpu_custom_call.1} parent=31 // pred_check
          %p280 = pneg %p103
        $region42: #{tpu_custom_call.1} parent=31 // pred_check_branch
          %282 = sbr.rel (%p280) target = $region44
        $region43: #{tpu_custom_call.1} parent=31 // pred_region
          %p283 = scmp.lt.s32.totalorder %s24, 1
          %s284 = scalar_select %p283, %s24, 1
          %s285 = smul.addr %s284, 2
          %s286 = smul.addr %s285, 8
          %s287 = scalar_lea.vmem %s2, %s286
        $region44: #{tpu_custom_call.1} parent=31 // pred_fallthru
          _
      $region32: #{tpu_custom_call.1} parent=5 // pred_fallthru
        _
      %p288 = scmp.le.s32.totalorder 1, %s17
      %p289 = scmp.lt.s32.totalorder %s17, 3
      %p290 = pnand %p288, %p289
      %p291 = pneg %p290
      // Predicated region
      $region45: #{tpu_custom_call.1} parent=5 // pred_check
        _
      $region46: #{tpu_custom_call.1} parent=5 // pred_check_branch
        %293 = sbr.rel (%p290) target = $region48
      $region47: #{tpu_custom_call.1} parent=5 // pred_region
        %s294 = ssub.s32 %s17, 1
        // Predicated region
        $region49: #{tpu_custom_call.1} parent=47 // pred_check
          %p295 = pneg %p193
        $region50: #{tpu_custom_call.1} parent=47 // pred_check_branch
          %297 = sbr.rel (%p295) target = $region52
        $region51: #{tpu_custom_call.1} parent=47 // pred_region
          %298 = dma.done [#allocation4], 16
        $region52: #{tpu_custom_call.1} parent=47 // pred_fallthru
          _
        %299 = sfence
        %p300 = scmp.lt.s32.totalorder %s26, 1
        %s301 = scalar_select %p300, %s26, 1
        %p302 = scmp.lt.s32.totalorder %s27, 0
        %s303 = scalar_select %p302, %s27, 0
        %s304 = smul.addr %s303, 3
        %s305 = smul.addr %s301, 3
        %s306 = sadd.s32 %s304, %s305
        %s307 = smul.addr %s306, 4
        %s308 = scalar_lea.vmem %s0, %s307
        %p309 = pneg %p57
        %p310 = pneg %p54
        %p311 = scmp.lt.s32.totalorder %s26, 1
        %s312 = scalar_select %p311, %s26, 1
        %s313 = smul.addr %s312, 2
        %s314 = smul.addr %s313, 8
        %s315 = scalar_lea.vmem %s1, %s314
        %p316 = pneg %p83
        %p317 = pneg %p80
        %p318 = scmp.lt.s32.totalorder %s26, 1
        %s319 = scalar_select %p318, %s26, 1
        %s320 = smul.addr %s319, 2
        %s321 = smul.addr %s320, 8
        %s322 = scalar_lea.vmem %s2, %s321
        %p323 = pneg %p109
        %p324 = pneg %p106
        %p325 = pneg %p130
        %p326 = pneg %p127
        %p327 = pneg %p151
        %p328 = pneg %p148
        %p329 = pneg %p172
        %p330 = pneg %p169
        %p331 = pneg %p193
        %p332 = pneg %p190
        %p333 = pneg %p221
        %p334 = pneg %p218
        %s335 = sand.u32 %s208, 1
        %s336 = scalar_lea.sflag [#allocation3], %s335
        %s337 = sand.u32 %s208, 1
        %s338 = smul.addr %s337, 32
        %s339 = scalar_lea.vmem [#allocation5], %s338
        %p340 = scmp.lt.s32.totalorder %s26, 1
        %s341 = scalar_select %p340, %s26, 1
        %p342 = scmp.lt.s32.totalorder %s27, 0
        %s343 = scalar_select %p342, %s27, 0
        %s344 = smul.addr %s343, 3
        %s345 = smul.addr %s341, 3
        %s346 = sadd.s32 %s344, %s345
        %s347 = smul.addr %s346, 4
        %s348 = scalar_lea.vmem %s0, %s347
        %p349 = scmp.lt.s32.totalorder %s26, 1
        %s350 = scalar_select %p349, %s26, 1
        %s351 = smul.addr %s350, 2
        %s352 = smul.addr %s351, 8
        %s353 = scalar_lea.vmem %s1, %s352
        %p354 = scmp.lt.s32.totalorder %s26, 1
        %s355 = scalar_select %p354, %s26, 1
        %s356 = smul.addr %s355, 2
        %s357 = smul.addr %s356, 8
        %s358 = scalar_lea.vmem %s2, %s357
        %s359 = smul.u32 2, %s27
        %v360 = vld [vmem:[%s348] sm:$0xff]
        %v361 = vld [vmem:[%s348 + $0x8] sm:$0xf]
        %v362 = vld [vmem:[%s5] ss:$2 sm:$0x3]
        %s363 = scalar_lea.vmem %s5, 1
        %v364 = vld [vmem:[%s363] ss:$2 sm:$0x3]
        %v366 = vlaneseq
        %v367 = vshrl.u32 %v366, 7
        %v368 = vsub.s32 0, %v367
        %v369 = vrot.slane %v362, %v368
        %v370 = vlaneseq
        %v371 = vshrl.u32 %v370, 7
        %v372 = vsub.s32 1, %v371
        %v373 = vrot.slane %v362, %v372
        %v374 = vcombine.low %v369, %v373
        %v376 = vmul.f32 %v360, %v374
        %v377 = vld [vmem:[%s3] sm:$0xff]
        %v378 = vld [vmem:[%s3 + $0x8] sm:$0xff]
        %s379 = scalar_lea.vmem %s3, 16
        %v380 = vld [vmem:[%s379] sm:$0xff]
        %v381 = vld [vmem:[%s379 + $0x8] sm:$0xff]
        %v384 = vcombine.high %v360, %v360
        %385 = vrot.lane.b32.xlu0 %v360, 127
        %v386 = vpop.permute.xlu0 %385
        %387 = vrot.lane.b32.xlu0 %v384, 127
        %v388 = vpop.permute.xlu0 %387
        %389 = vrot.lane.b32.xlu0 %v361, 127
        %v390 = vpop.permute.xlu0 %389
        %vm391 = vcmask 1039360
        %v392 = vsel %vm391, %v386, %v388
        %v393 = vsel %vm391, %v388, %v390
        %vm394 = vcmask 31744
        %v396 = vsel %vm394, %v380, 0
        %v399 = vsel %vm394, %v381, 0
        %vm401 = vcmask 1043456
        %v402 = vsel %vm401, %v392, 0
        %v404 = vsel %vm401, %v393, 0
        %406 = vmatprep.subr.mxu0 %v404
        %407 = vmatpush1.msra.mxu0 %v402
        %408 = vmatprep.subr.mxu0 0.0
        %409 = vmatpush1.msra.mxu0 0.0
        %410 = vmatprep.subr.mxu0 0.0
        %411 = vmatpush1.msra.mxu0 0.0
        %412 = vmatprep.subr.mxu0 0.0
        %413 = vmatpush1.msra.mxu0 0.0
        %414 = vmatprep.subr.mxu0 0.0
        %415 = vmatpush1.msra.mxu0 0.0
        %416 = vmatprep.subr.mxu0 0.0
        %417 = vmatpush1.msra.mxu0 0.0
        %418 = vmatprep.subr.mxu0 0.0
        %419 = vmatpush1.msra.mxu0 0.0
        %420 = vmatprep.subr.mxu0 0.0
        %421 = vmatpush1.msra.mxu0 0.0
        %422 = vmatprep.subr.mxu0 0.0
        %423 = vmatpush1.msra.mxu0 0.0
        %424 = vmatprep.subr.mxu0 0.0
        %425 = vmatpush1.msra.mxu0 0.0
        %426 = vmatprep.subr.mxu0 0.0
        %427 = vmatpush1.msra.mxu0 0.0
        %428 = vmatprep.subr.mxu0 0.0
        %429 = vmatpush1.msra.mxu0 0.0
        %430 = vmatprep.subr.mxu0 0.0
        %431 = vmatpush1.msra.mxu0 0.0
        %432 = vmatprep.subr.mxu0 0.0
        %433 = vmatpush1.msra.mxu0 0.0
        %434 = vmatprep.subr.mxu0 0.0
        %435 = vmatpush1.msra.mxu0 0.0
        %436 = vmatprep.subr.mxu0 0.0
        %437 = vmatpush1.msra.mxu0 0.0
        %438 = vmatprep.subr.mxu0 0.0
        %439 = vmatpush1.msra.mxu0 0.0
        %440 = vmatprep.subr.mxu0 0.0
        %441 = vmatpush1.msra.mxu0 0.0
        %442 = vmatprep.subr.mxu0 0.0
        %443 = vmatpush1.msra.mxu0 0.0
        %444 = vmatprep.subr.mxu0 0.0
        %445 = vmatpush1.msra.mxu0 0.0
        %446 = vmatprep.subr.mxu0 0.0
        %447 = vmatpush1.msra.mxu0 0.0
        %448 = vmatprep.subr.mxu0 0.0
        %449 = vmatpush1.msra.mxu0 0.0
        %450 = vmatprep.subr.mxu0 0.0
        %451 = vmatpush1.msra.mxu0 0.0
        %452 = vmatprep.subr.mxu0 0.0
        %453 = vmatpush1.msra.mxu0 0.0
        %454 = vmatprep.subr.mxu0 0.0
        %455 = vmatpush1.msra.mxu0 0.0
        %456 = vmatprep.subr.mxu0 0.0
        %457 = vmatpush1.msra.mxu0 0.0
        %458 = vmatprep.subr.mxu0 0.0
        %459 = vmatpush1.msra.mxu0 0.0
        %460 = vmatprep.subr.mxu0 0.0
        %461 = vmatpush1.msra.mxu0 0.0
        %462 = vmatprep.subr.mxu0 0.0
        %463 = vmatpush1.msra.mxu0 0.0
        %464 = vmatprep.subr.mxu0 0.0
        %465 = vmatpush1.msra.mxu0 0.0
        %466 = vmatprep.subr.mxu0 0.0
        %467 = vmatpush1.msra.mxu0 0.0
        %468 = vmatprep.subr.mxu0 0.0
        %469 = vmatpush1.msra.mxu0 0.0
        %470 = vmatprep.mubr.f32.mxu0 0.0
        %471 = vmatmul.mubr.f32.gmra.mrb[0].mxu0 %v396
        %v472 = vpop.f32.mrb[0].mxu0
        %v473 = vadd.f32 0.0, %v472
        %v474 = vpop.f32.mrb[0].mxu0
        %v475 = vadd.f32 0.0, %v474
        %476 = vmatprep.mubr.f32.mxu0 0.0
        %477 = vmatmul.mubr.f32.gmra.mrb[0].mxu0 %v399
        %v478 = vpop.f32.mrb[0].mxu0
        %v479 = vadd.f32 0.0, %v478
        %v480 = vpop.f32.mrb[0].mxu0
        %v481 = vadd.f32 0.0, %v480
        %482 = vdwg.mxu0
        %v484 = vcombine.high %v376, %v376
        %v486 = vsel %vm394, %v377, 0
        %v489 = vsel %vm394, %v378, 0
        %v491 = vsel %vm401, %v376, 0
        %v493 = vsel %vm401, %v484, 0
        %495 = vmatprep.subr.mxu0 %v493
        %496 = vmatpush1.msra.mxu0 %v491
        %497 = vmatprep.subr.mxu0 0.0
        %498 = vmatpush1.msra.mxu0 0.0
        %499 = vmatprep.subr.mxu0 0.0
        %500 = vmatpush1.msra.mxu0 0.0
        %501 = vmatprep.subr.mxu0 0.0
        %502 = vmatpush1.msra.mxu0 0.0
        %503 = vmatprep.subr.mxu0 0.0
        %504 = vmatpush1.msra.mxu0 0.0
        %505 = vmatprep.subr.mxu0 0.0
        %506 = vmatpush1.msra.mxu0 0.0
        %507 = vmatprep.subr.mxu0 0.0
        %508 = vmatpush1.msra.mxu0 0.0
        %509 = vmatprep.subr.mxu0 0.0
        %510 = vmatpush1.msra.mxu0 0.0
        %511 = vmatprep.subr.mxu0 0.0
        %512 = vmatpush1.msra.mxu0 0.0
        %513 = vmatprep.subr.mxu0 0.0
        %514 = vmatpush1.msra.mxu0 0.0
        %515 = vmatprep.subr.mxu0 0.0
        %516 = vmatpush1.msra.mxu0 0.0
        %517 = vmatprep.subr.mxu0 0.0
        %518 = vmatpush1.msra.mxu0 0.0
        %519 = vmatprep.subr.mxu0 0.0
        %520 = vmatpush1.msra.mxu0 0.0
        %521 = vmatprep.subr.mxu0 0.0
        %522 = vmatpush1.msra.mxu0 0.0
        %523 = vmatprep.subr.mxu0 0.0
        %524 = vmatpush1.msra.mxu0 0.0
        %525 = vmatprep.subr.mxu0 0.0
        %526 = vmatpush1.msra.mxu0 0.0
        %527 = vmatprep.subr.mxu0 0.0
        %528 = vmatpush1.msra.mxu0 0.0
        %529 = vmatprep.subr.mxu0 0.0
        %530 = vmatpush1.msra.mxu0 0.0
        %531 = vmatprep.subr.mxu0 0.0
        %532 = vmatpush1.msra.mxu0 0.0
        %533 = vmatprep.subr.mxu0 0.0
        %534 = vmatpush1.msra.mxu0 0.0
        %535 = vmatprep.subr.mxu0 0.0
        %536 = vmatpush1.msra.mxu0 0.0
        %537 = vmatprep.subr.mxu0 0.0
        %538 = vmatpush1.msra.mxu0 0.0
        %539 = vmatprep.subr.mxu0 0.0
        %540 = vmatpush1.msra.mxu0 0.0
        %541 = vmatprep.subr.mxu0 0.0
        %542 = vmatpush1.msra.mxu0 0.0
        %543 = vmatprep.subr.mxu0 0.0
        %544 = vmatpush1.msra.mxu0 0.0
        %545 = vmatprep.subr.mxu0 0.0
        %546 = vmatpush1.msra.mxu0 0.0
        %547 = vmatprep.subr.mxu0 0.0
        %548 = vmatpush1.msra.mxu0 0.0
        %549 = vmatprep.subr.mxu0 0.0
        %550 = vmatpush1.msra.mxu0 0.0
        %551 = vmatprep.subr.mxu0 0.0
        %552 = vmatpush1.msra.mxu0 0.0
        %553 = vmatprep.subr.mxu0 0.0
        %554 = vmatpush1.msra.mxu0 0.0
        %555 = vmatprep.subr.mxu0 0.0
        %556 = vmatpush1.msra.mxu0 0.0
        %557 = vmatprep.subr.mxu0 0.0
        %558 = vmatpush1.msra.mxu0 0.0
        %559 = vmatprep.mubr.f32.mxu0 0.0
        %560 = vmatmul.mubr.f32.gmra.mrb[0].mxu0 %v486
        %v561 = vpop.f32.mrb[0].mxu0
        %v562 = vadd.f32 %v473, %v561
        %v563 = vpop.f32.mrb[0].mxu0
        %v564 = vadd.f32 %v475, %v563
        %565 = vmatprep.mubr.f32.mxu0 0.0
        %566 = vmatmul.mubr.f32.gmra.mrb[0].mxu0 %v489
        %v567 = vpop.f32.mrb[0].mxu0
        %v568 = vadd.f32 %v479, %v567
        %v569 = vpop.f32.mrb[0].mxu0
        %v570 = vadd.f32 %v481, %v569
        %571 = vdwg.mxu0
        %v573 = vlaneseq
        %v574 = vshrl.u32 %v573, 7
        %v575 = vsub.s32 0, %v574
        %v576 = vrot.slane %v364, %v575
        %v577 = vlaneseq
        %v578 = vshrl.u32 %v577, 7
        %v579 = vsub.s32 1, %v578
        %v580 = vrot.slane %v364, %v579
        %v581 = vcombine.low %v576, %v580
        %582 = vrot.lane.b32.xlu0 %v581, 2
        %v583 = vpop.permute.xlu0 %582
        %v584 = vrot.slane %v583, 4
        %vm585 = vcmask 15360
        %v586 = vsel %vm585, %v584, %v583
        %v589 = vmul.f32 %v360, %v586
        %v590 = vmul.f32 %v361, %v584
        %s591 = scalar_lea.vmem %s3, 32
        %v592 = vld [vmem:[%s591] sm:$0xff]
        %v593 = vld [vmem:[%s591 + $0x8] sm:$0xff]
        %v596 = vcombine.high %v589, %v589
        %597 = vrot.lane.b32.xlu0 %v589, 126
        %v598 = vpop.permute.xlu0 %597
        %599 = vrot.lane.b32.xlu0 %v596, 126
        %v600 = vpop.permute.xlu0 %599
        %601 = vrot.lane.b32.xlu0 %v590, 126
        %v602 = vpop.permute.xlu0 %601
        %vm603 = vcmask 1031168
        %v604 = vsel %vm603, %v598, %v600
        %v605 = vsel %vm603, %v600, %v602
        %v607 = vsel %vm394, %v592, 0
        %v610 = vsel %vm394, %v593, 0
        %v612 = vsel %vm401, %v604, 0
        %v614 = vsel %vm401, %v605, 0
        %616 = vmatprep.subr.mxu0 %v614
        %617 = vmatpush1.msra.mxu0 %v612
        %618 = vmatprep.subr.mxu0 0.0
        %619 = vmatpush1.msra.mxu0 0.0
        %620 = vmatprep.subr.mxu0 0.0
        %621 = vmatpush1.msra.mxu0 0.0
        %622 = vmatprep.subr.mxu0 0.0
        %623 = vmatpush1.msra.mxu0 0.0
        %624 = vmatprep.subr.mxu0 0.0
        %625 = vmatpush1.msra.mxu0 0.0
        %626 = vmatprep.subr.mxu0 0.0
        %627 = vmatpush1.msra.mxu0 0.0
        %628 = vmatprep.subr.mxu0 0.0
        %629 = vmatpush1.msra.mxu0 0.0
        %630 = vmatprep.subr.mxu0 0.0
        %631 = vmatpush1.msra.mxu0 0.0
        %632 = vmatprep.subr.mxu0 0.0
        %633 = vmatpush1.msra.mxu0 0.0
        %634 = vmatprep.subr.mxu0 0.0
        %635 = vmatpush1.msra.mxu0 0.0
        %636 = vmatprep.subr.mxu0 0.0
        %637 = vmatpush1.msra.mxu0 0.0
        %638 = vmatprep.subr.mxu0 0.0
        %639 = vmatpush1.msra.mxu0 0.0
        %640 = vmatprep.subr.mxu0 0.0
        %641 = vmatpush1.msra.mxu0 0.0
        %642 = vmatprep.subr.mxu0 0.0
        %643 = vmatpush1.msra.mxu0 0.0
        %644 = vmatprep.subr.mxu0 0.0
        %645 = vmatpush1.msra.mxu0 0.0
        %646 = vmatprep.subr.mxu0 0.0
        %647 = vmatpush1.msra.mxu0 0.0
        %648 = vmatprep.subr.mxu0 0.0
        %649 = vmatpush1.msra.mxu0 0.0
        %650 = vmatprep.subr.mxu0 0.0
        %651 = vmatpush1.msra.mxu0 0.0
        %652 = vmatprep.subr.mxu0 0.0
        %653 = vmatpush1.msra.mxu0 0.0
        %654 = vmatprep.subr.mxu0 0.0
        %655 = vmatpush1.msra.mxu0 0.0
        %656 = vmatprep.subr.mxu0 0.0
        %657 = vmatpush1.msra.mxu0 0.0
        %658 = vmatprep.subr.mxu0 0.0
        %659 = vmatpush1.msra.mxu0 0.0
        %660 = vmatprep.subr.mxu0 0.0
        %661 = vmatpush1.msra.mxu0 0.0
        %662 = vmatprep.subr.mxu0 0.0
        %663 = vmatpush1.msra.mxu0 0.0
        %664 = vmatprep.subr.mxu0 0.0
        %665 = vmatpush1.msra.mxu0 0.0
        %666 = vmatprep.subr.mxu0 0.0
        %667 = vmatpush1.msra.mxu0 0.0
        %668 = vmatprep.subr.mxu0 0.0
        %669 = vmatpush1.msra.mxu0 0.0
        %670 = vmatprep.subr.mxu0 0.0
        %671 = vmatpush1.msra.mxu0 0.0
        %672 = vmatprep.subr.mxu0 0.0
        %673 = vmatpush1.msra.mxu0 0.0
        %674 = vmatprep.subr.mxu0 0.0
        %675 = vmatpush1.msra.mxu0 0.0
        %676 = vmatprep.subr.mxu0 0.0
        %677 = vmatpush1.msra.mxu0 0.0
        %678 = vmatprep.subr.mxu0 0.0
        %679 = vmatpush1.msra.mxu0 0.0
        %680 = vmatprep.mubr.f32.mxu0 0.0
        %681 = vmatmul.mubr.f32.gmra.mrb[0].mxu0 %v607
        %v682 = vpop.f32.mrb[0].mxu0
        %v683 = vadd.f32 0.0, %v682
        %v684 = vpop.f32.mrb[0].mxu0
        %v685 = vadd.f32 0.0, %v684
        %686 = vmatprep.mubr.f32.mxu0 0.0
        %687 = vmatmul.mubr.f32.gmra.mrb[0].mxu0 %v610
        %v688 = vpop.f32.mrb[0].mxu0
        %v689 = vadd.f32 0.0, %v688
        %v690 = vpop.f32.mrb[0].mxu0
        %v691 = vadd.f32 0.0, %v690
        %692 = vdwg.mxu0
        %v693 = vadd.f32 %v562, %v683
        %v694 = vadd.f32 %v564, %v685
        %v695 = vadd.f32 %v568, %v689
        %v696 = vadd.f32 %v570, %v691
        %697 = vrot.lane.b32.xlu0 %v374, 16
        %v698 = vpop.permute.xlu0 %697
        %v699 = vrot.slane %v698, 4
        %vm700 = vcmask 130048
        %v701 = vsel %vm700, %v699, %v698
        %v704 = vmul.f32 %v360, %v701
        %v705 = vmul.f32 %v361, %v699
        %s706 = scalar_lea.vmem %s3, 48
        %v707 = vld [vmem:[%s706] sm:$0xff]
        %v708 = vld [vmem:[%s706 + $0x8] sm:$0xff]
        %v711 = vcombine.high %v704, %v704
        %712 = vrot.lane.b32.xlu0 %v704, 112
        %v713 = vpop.permute.xlu0 %712
        %714 = vrot.lane.b32.xlu0 %v711, 112
        %v715 = vpop.permute.xlu0 %714
        %716 = vrot.lane.b32.xlu0 %v705, 112
        %v717 = vpop.permute.xlu0 %716
        %vm718 = vcmask 916480
        %v719 = vsel %vm718, %v713, %v715
        %v720 = vsel %vm718, %v715, %v717
        %v722 = vsel %vm394, %v707, 0
        %v725 = vsel %vm394, %v708, 0
        %v727 = vsel %vm401, %v719, 0
        %v729 = vsel %vm401, %v720, 0
        %731 = vmatprep.subr.mxu0 %v729
        %732 = vmatpush1.msra.mxu0 %v727
        %733 = vmatprep.subr.mxu0 0.0
        %734 = vmatpush1.msra.mxu0 0.0
        %735 = vmatprep.subr.mxu0 0.0
        %736 = vmatpush1.msra.mxu0 0.0
        %737 = vmatprep.subr.mxu0 0.0
        %738 = vmatpush1.msra.mxu0 0.0
        %739 = vmatprep.subr.mxu0 0.0
        %740 = vmatpush1.msra.mxu0 0.0
        %741 = vmatprep.subr.mxu0 0.0
        %742 = vmatpush1.msra.mxu0 0.0
        %743 = vmatprep.subr.mxu0 0.0
        %744 = vmatpush1.msra.mxu0 0.0
        %745 = vmatprep.subr.mxu0 0.0
        %746 = vmatpush1.msra.mxu0 0.0
        %747 = vmatprep.subr.mxu0 0.0
        %748 = vmatpush1.msra.mxu0 0.0
        %749 = vmatprep.subr.mxu0 0.0
        %750 = vmatpush1.msra.mxu0 0.0
        %751 = vmatprep.subr.mxu0 0.0
        %752 = vmatpush1.msra.mxu0 0.0
        %753 = vmatprep.subr.mxu0 0.0
        %754 = vmatpush1.msra.mxu0 0.0
        %755 = vmatprep.subr.mxu0 0.0
        %756 = vmatpush1.msra.mxu0 0.0
        %757 = vmatprep.subr.mxu0 0.0
        %758 = vmatpush1.msra.mxu0 0.0
        %759 = vmatprep.subr.mxu0 0.0
        %760 = vmatpush1.msra.mxu0 0.0
        %761 = vmatprep.subr.mxu0 0.0
        %762 = vmatpush1.msra.mxu0 0.0
        %763 = vmatprep.subr.mxu0 0.0
        %764 = vmatpush1.msra.mxu0 0.0
        %765 = vmatprep.subr.mxu0 0.0
        %766 = vmatpush1.msra.mxu0 0.0
        %767 = vmatprep.subr.mxu0 0.0
        %768 = vmatpush1.msra.mxu0 0.0
        %769 = vmatprep.subr.mxu0 0.0
        %770 = vmatpush1.msra.mxu0 0.0
        %771 = vmatprep.subr.mxu0 0.0
        %772 = vmatpush1.msra.mxu0 0.0
        %773 = vmatprep.subr.mxu0 0.0
        %774 = vmatpush1.msra.mxu0 0.0
        %775 = vmatprep.subr.mxu0 0.0
        %776 = vmatpush1.msra.mxu0 0.0
        %777 = vmatprep.subr.mxu0 0.0
        %778 = vmatpush1.msra.mxu0 0.0
        %779 = vmatprep.subr.mxu0 0.0
        %780 = vmatpush1.msra.mxu0 0.0
        %781 = vmatprep.subr.mxu0 0.0
        %782 = vmatpush1.msra.mxu0 0.0
        %783 = vmatprep.subr.mxu0 0.0
        %784 = vmatpush1.msra.mxu0 0.0
        %785 = vmatprep.subr.mxu0 0.0
        %786 = vmatpush1.msra.mxu0 0.0
        %787 = vmatprep.subr.mxu0 0.0
        %788 = vmatpush1.msra.mxu0 0.0
        %789 = vmatprep.subr.mxu0 0.0
        %790 = vmatpush1.msra.mxu0 0.0
        %791 = vmatprep.subr.mxu0 0.0
        %792 = vmatpush1.msra.mxu0 0.0
        %793 = vmatprep.subr.mxu0 0.0
        %794 = vmatpush1.msra.mxu0 0.0
        %795 = vmatprep.mubr.f32.mxu0 0.0
        %796 = vmatmul.mubr.f32.gmra.mrb[0].mxu0 %v722
        %v797 = vpop.f32.mrb[0].mxu0
        %v798 = vadd.f32 0.0, %v797
        %v799 = vpop.f32.mrb[0].mxu0
        %v800 = vadd.f32 0.0, %v799
        %801 = vmatprep.mubr.f32.mxu0 0.0
        %802 = vmatmul.mubr.f32.gmra.mrb[0].mxu0 %v725
        %v803 = vpop.f32.mrb[0].mxu0
        %v804 = vadd.f32 0.0, %v803
        %v805 = vpop.f32.mrb[0].mxu0
        %v806 = vadd.f32 0.0, %v805
        %807 = vdwg.mxu0
        %v808 = vadd.f32 %v693, %v798
        %v809 = vadd.f32 %v694, %v800
        %v810 = vadd.f32 %v695, %v804
        %v811 = vadd.f32 %v696, %v806
        %s812 = scalar_lea.vmem %s3, 64
        %v813 = vld [vmem:[%s812] sm:$0xff]
        %v814 = vld [vmem:[%s812 + $0x8] sm:$0xff]
        %815 = vrot.lane.b32.xlu0 %v360, 111
        %v816 = vpop.permute.xlu0 %815
        %817 = vrot.lane.b32.xlu0 %v384, 111
        %v818 = vpop.permute.xlu0 %817
        %819 = vrot.lane.b32.xlu0 %v361, 111
        %v820 = vpop.permute.xlu0 %819
        %vm821 = vcmask 908288
        %v822 = vsel %vm821, %v816, %v818
        %v823 = vsel %vm821, %v818, %v820
        %v825 = vsel %vm394, %v813, 0
        %v828 = vsel %vm394, %v814, 0
        %v830 = vsel %vm401, %v822, 0
        %v832 = vsel %vm401, %v823, 0
        %834 = vmatprep.subr.mxu0 %v832
        %835 = vmatpush1.msra.mxu0 %v830
        %836 = vmatprep.subr.mxu0 0.0
        %837 = vmatpush1.msra.mxu0 0.0
        %838 = vmatprep.subr.mxu0 0.0
        %839 = vmatpush1.msra.mxu0 0.0
        %840 = vmatprep.subr.mxu0 0.0
        %841 = vmatpush1.msra.mxu0 0.0
        %842 = vmatprep.subr.mxu0 0.0
        %843 = vmatpush1.msra.mxu0 0.0
        %844 = vmatprep.subr.mxu0 0.0
        %845 = vmatpush1.msra.mxu0 0.0
        %846 = vmatprep.subr.mxu0 0.0
        %847 = vmatpush1.msra.mxu0 0.0
        %848 = vmatprep.subr.mxu0 0.0
        %849 = vmatpush1.msra.mxu0 0.0
        %850 = vmatprep.subr.mxu0 0.0
        %851 = vmatpush1.msra.mxu0 0.0
        %852 = vmatprep.subr.mxu0 0.0
        %853 = vmatpush1.msra.mxu0 0.0
        %854 = vmatprep.subr.mxu0 0.0
        %855 = vmatpush1.msra.mxu0 0.0
        %856 = vmatprep.subr.mxu0 0.0
        %857 = vmatpush1.msra.mxu0 0.0
        %858 = vmatprep.subr.mxu0 0.0
        %859 = vmatpush1.msra.mxu0 0.0
        %860 = vmatprep.subr.mxu0 0.0
        %861 = vmatpush1.msra.mxu0 0.0
        %862 = vmatprep.subr.mxu0 0.0
        %863 = vmatpush1.msra.mxu0 0.0
        %864 = vmatprep.subr.mxu0 0.0
        %865 = vmatpush1.msra.mxu0 0.0
        %866 = vmatprep.subr.mxu0 0.0
        %867 = vmatpush1.msra.mxu0 0.0
        %868 = vmatprep.subr.mxu0 0.0
        %869 = vmatpush1.msra.mxu0 0.0
        %870 = vmatprep.subr.mxu0 0.0
        %871 = vmatpush1.msra.mxu0 0.0
        %872 = vmatprep.subr.mxu0 0.0
        %873 = vmatpush1.msra.mxu0 0.0
        %874 = vmatprep.subr.mxu0 0.0
        %875 = vmatpush1.msra.mxu0 0.0
        %876 = vmatprep.subr.mxu0 0.0
        %877 = vmatpush1.msra.mxu0 0.0
        %878 = vmatprep.subr.mxu0 0.0
        %879 = vmatpush1.msra.mxu0 0.0
        %880 = vmatprep.subr.mxu0 0.0
        %881 = vmatpush1.msra.mxu0 0.0
        %882 = vmatprep.subr.mxu0 0.0
        %883 = vmatpush1.msra.mxu0 0.0
        %884 = vmatprep.subr.mxu0 0.0
        %885 = vmatpush1.msra.mxu0 0.0
        %886 = vmatprep.subr.mxu0 0.0
        %887 = vmatpush1.msra.mxu0 0.0
        %888 = vmatprep.subr.mxu0 0.0
        %889 = vmatpush1.msra.mxu0 0.0
        %890 = vmatprep.subr.mxu0 0.0
        %891 = vmatpush1.msra.mxu0 0.0
        %892 = vmatprep.subr.mxu0 0.0
        %893 = vmatpush1.msra.mxu0 0.0
        %894 = vmatprep.subr.mxu0 0.0
        %895 = vmatpush1.msra.mxu0 0.0
        %896 = vmatprep.subr.mxu0 0.0
        %897 = vmatpush1.msra.mxu0 0.0
        %898 = vmatprep.mubr.f32.mxu0 0.0
        %899 = vmatmul.mubr.f32.gmra.mrb[0].mxu0 %v825
        %v900 = vpop.f32.mrb[0].mxu0
        %v901 = vadd.f32 0.0, %v900
        %v902 = vpop.f32.mrb[0].mxu0
        %v903 = vadd.f32 0.0, %v902
        %904 = vmatprep.mubr.f32.mxu0 0.0
        %905 = vmatmul.mubr.f32.gmra.mrb[0].mxu0 %v828
        %v906 = vpop.f32.mrb[0].mxu0
        %v907 = vadd.f32 0.0, %v906
        %v908 = vpop.f32.mrb[0].mxu0
        %v909 = vadd.f32 0.0, %v908
        %910 = vdwg.mxu0
        %v911 = vadd.f32 %v808, %v901
        %v912 = vadd.f32 %v809, %v903
        %v913 = vadd.f32 %v810, %v907
        %v914 = vadd.f32 %v811, %v909
        %915 = vrot.lane.b32.xlu0 %v581, 18
        %v916 = vpop.permute.xlu0 %915
        %v917 = vrot.slane %v916, 4
        %vm918 = vcmask 146432
        %v919 = vsel %vm918, %v917, %v916
        %v922 = vmul.f32 %v360, %v919
        %v923 = vmul.f32 %v361, %v917
        %s924 = scalar_lea.vmem %s3, 80
        %v925 = vld [vmem:[%s924] sm:$0xff]
        %v926 = vld [vmem:[%s924 + $0x8] sm:$0xff]
        %v929 = vcombine.high %v922, %v922
        %930 = vrot.lane.b32.xlu0 %v922, 110
        %v931 = vpop.permute.xlu0 %930
        %932 = vrot.lane.b32.xlu0 %v929, 110
        %v933 = vpop.permute.xlu0 %932
        %934 = vrot.lane.b32.xlu0 %v923, 110
        %v935 = vpop.permute.xlu0 %934
        %vm936 = vcmask 900096
        %v937 = vsel %vm936, %v931, %v933
        %v938 = vsel %vm936, %v933, %v935
        %v940 = vsel %vm394, %v925, 0
        %v943 = vsel %vm394, %v926, 0
        %v945 = vsel %vm401, %v937, 0
        %v947 = vsel %vm401, %v938, 0
        %949 = vmatprep.subr.mxu0 %v947
        %950 = vmatpush1.msra.mxu0 %v945
        %951 = vmatprep.subr.mxu0 0.0
        %952 = vmatpush1.msra.mxu0 0.0
        %953 = vmatprep.subr.mxu0 0.0
        %954 = vmatpush1.msra.mxu0 0.0
        %955 = vmatprep.subr.mxu0 0.0
        %956 = vmatpush1.msra.mxu0 0.0
        %957 = vmatprep.subr.mxu0 0.0
        %958 = vmatpush1.msra.mxu0 0.0
        %959 = vmatprep.subr.mxu0 0.0
        %960 = vmatpush1.msra.mxu0 0.0
        %961 = vmatprep.subr.mxu0 0.0
        %962 = vmatpush1.msra.mxu0 0.0
        %963 = vmatprep.subr.mxu0 0.0
        %964 = vmatpush1.msra.mxu0 0.0
        %965 = vmatprep.subr.mxu0 0.0
        %966 = vmatpush1.msra.mxu0 0.0
        %967 = vmatprep.subr.mxu0 0.0
        %968 = vmatpush1.msra.mxu0 0.0
        %969 = vmatprep.subr.mxu0 0.0
        %970 = vmatpush1.msra.mxu0 0.0
        %971 = vmatprep.subr.mxu0 0.0
        %972 = vmatpush1.msra.mxu0 0.0
        %973 = vmatprep.subr.mxu0 0.0
        %974 = vmatpush1.msra.mxu0 0.0
        %975 = vmatprep.subr.mxu0 0.0
        %976 = vmatpush1.msra.mxu0 0.0
        %977 = vmatprep.subr.mxu0 0.0
        %978 = vmatpush1.msra.mxu0 0.0
        %979 = vmatprep.subr.mxu0 0.0
        %980 = vmatpush1.msra.mxu0 0.0
        %981 = vmatprep.subr.mxu0 0.0
        %982 = vmatpush1.msra.mxu0 0.0
        %983 = vmatprep.subr.mxu0 0.0
        %984 = vmatpush1.msra.mxu0 0.0
        %985 = vmatprep.subr.mxu0 0.0
        %986 = vmatpush1.msra.mxu0 0.0
        %987 = vmatprep.subr.mxu0 0.0
        %988 = vmatpush1.msra.mxu0 0.0
        %989 = vmatprep.subr.mxu0 0.0
        %990 = vmatpush1.msra.mxu0 0.0
        %991 = vmatprep.subr.mxu0 0.0
        %992 = vmatpush1.msra.mxu0 0.0
        %993 = vmatprep.subr.mxu0 0.0
        %994 = vmatpush1.msra.mxu0 0.0
        %995 = vmatprep.subr.mxu0 0.0
        %996 = vmatpush1.msra.mxu0 0.0
        %997 = vmatprep.subr.mxu0 0.0
        %998 = vmatpush1.msra.mxu0 0.0
        %999 = vmatprep.subr.mxu0 0.0
        %1000 = vmatpush1.msra.mxu0 0.0
        %1001 = vmatprep.subr.mxu0 0.0
        %1002 = vmatpush1.msra.mxu0 0.0
        %1003 = vmatprep.subr.mxu0 0.0
        %1004 = vmatpush1.msra.mxu0 0.0
        %1005 = vmatprep.subr.mxu0 0.0
        %1006 = vmatpush1.msra.mxu0 0.0
        %1007 = vmatprep.subr.mxu0 0.0
        %1008 = vmatpush1.msra.mxu0 0.0
        %1009 = vmatprep.subr.mxu0 0.0
        %1010 = vmatpush1.msra.mxu0 0.0
        %1011 = vmatprep.subr.mxu0 0.0
        %1012 = vmatpush1.msra.mxu0 0.0
        %1013 = vmatprep.mubr.f32.mxu0 0.0
        %1014 = vmatmul.mubr.f32.gmra.mrb[0].mxu0 %v940
        %v1015 = vpop.f32.mrb[0].mxu0
        %v1016 = vadd.f32 0.0, %v1015
        %v1017 = vpop.f32.mrb[0].mxu0
        %v1018 = vadd.f32 0.0, %v1017
        %1019 = vmatprep.mubr.f32.mxu0 0.0
        %1020 = vmatmul.mubr.f32.gmra.mrb[0].mxu0 %v943
        %v1021 = vpop.f32.mrb[0].mxu0
        %v1022 = vadd.f32 0.0, %v1021
        %v1023 = vpop.f32.mrb[0].mxu0
        %v1024 = vadd.f32 0.0, %v1023
        %1025 = vdwg.mxu0
        %v1026 = vadd.f32 %v911, %v1016
        %v1027 = vadd.f32 %v912, %v1018
        %v1028 = vadd.f32 %v913, %v1022
        %v1029 = vadd.f32 %v914, %v1024
        %1030 = vrot.lane.b32.xlu0 %v374, 32
        %v1031 = vpop.permute.xlu0 %1030
        %v1032 = vrot.slane %v1031, 4
        %vm1033 = vcmask 261120
        %v1034 = vsel %vm1033, %v1032, %v1031
        %v1037 = vmul.f32 %v360, %v1034
        %v1038 = vmul.f32 %v361, %v1032
        %s1039 = scalar_lea.vmem %s3, 96
        %v1040 = vld [vmem:[%s1039] sm:$0xff]
        %v1041 = vld [vmem:[%s1039 + $0x8] sm:$0xff]
        %v1044 = vcombine.high %v1037, %v1037
        %1045 = vrot.lane.b32.xlu0 %v1037, 96
        %v1046 = vpop.permute.xlu0 %1045
        %1047 = vrot.lane.b32.xlu0 %v1044, 96
        %v1048 = vpop.permute.xlu0 %1047
        %1049 = vrot.lane.b32.xlu0 %v1038, 96
        %v1050 = vpop.permute.xlu0 %1049
        %vm1051 = vcmask 785408
        %v1052 = vsel %vm1051, %v1046, %v1048
        %v1053 = vsel %vm1051, %v1048, %v1050
        %v1055 = vsel %vm394, %v1040, 0
        %v1058 = vsel %vm394, %v1041, 0
        %v1060 = vsel %vm401, %v1052, 0
        %v1062 = vsel %vm401, %v1053, 0
        %1064 = vmatprep.subr.mxu0 %v1062
        %1065 = vmatpush1.msra.mxu0 %v1060
        %1066 = vmatprep.subr.mxu0 0.0
        %1067 = vmatpush1.msra.mxu0 0.0
        %1068 = vmatprep.subr.mxu0 0.0
        %1069 = vmatpush1.msra.mxu0 0.0
        %1070 = vmatprep.subr.mxu0 0.0
        %1071 = vmatpush1.msra.mxu0 0.0
        %1072 = vmatprep.subr.mxu0 0.0
        %1073 = vmatpush1.msra.mxu0 0.0
        %1074 = vmatprep.subr.mxu0 0.0
        %1075 = vmatpush1.msra.mxu0 0.0
        %1076 = vmatprep.subr.mxu0 0.0
        %1077 = vmatpush1.msra.mxu0 0.0
        %1078 = vmatprep.subr.mxu0 0.0
        %1079 = vmatpush1.msra.mxu0 0.0
        %1080 = vmatprep.subr.mxu0 0.0
        %1081 = vmatpush1.msra.mxu0 0.0
        %1082 = vmatprep.subr.mxu0 0.0
        %1083 = vmatpush1.msra.mxu0 0.0
        %1084 = vmatprep.subr.mxu0 0.0
        %1085 = vmatpush1.msra.mxu0 0.0
        %1086 = vmatprep.subr.mxu0 0.0
        %1087 = vmatpush1.msra.mxu0 0.0
        %1088 = vmatprep.subr.mxu0 0.0
        %1089 = vmatpush1.msra.mxu0 0.0
        %1090 = vmatprep.subr.mxu0 0.0
        %1091 = vmatpush1.msra.mxu0 0.0
        %1092 = vmatprep.subr.mxu0 0.0
        %1093 = vmatpush1.msra.mxu0 0.0
        %1094 = vmatprep.subr.mxu0 0.0
        %1095 = vmatpush1.msra.mxu0 0.0
        %1096 = vmatprep.subr.mxu0 0.0
        %1097 = vmatpush1.msra.mxu0 0.0
        %1098 = vmatprep.subr.mxu0 0.0
        %1099 = vmatpush1.msra.mxu0 0.0
        %1100 = vmatprep.subr.mxu0 0.0
        %1101 = vmatpush1.msra.mxu0 0.0
        %1102 = vmatprep.subr.mxu0 0.0
        %1103 = vmatpush1.msra.mxu0 0.0
        %1104 = vmatprep.subr.mxu0 0.0
        %1105 = vmatpush1.msra.mxu0 0.0
        %1106 = vmatprep.subr.mxu0 0.0
        %1107 = vmatpush1.msra.mxu0 0.0
        %1108 = vmatprep.subr.mxu0 0.0
        %1109 = vmatpush1.msra.mxu0 0.0
        %1110 = vmatprep.subr.mxu0 0.0
        %1111 = vmatpush1.msra.mxu0 0.0
        %1112 = vmatprep.subr.mxu0 0.0
        %1113 = vmatpush1.msra.mxu0 0.0
        %1114 = vmatprep.subr.mxu0 0.0
        %1115 = vmatpush1.msra.mxu0 0.0
        %1116 = vmatprep.subr.mxu0 0.0
        %1117 = vmatpush1.msra.mxu0 0.0
        %1118 = vmatprep.subr.mxu0 0.0
        %1119 = vmatpush1.msra.mxu0 0.0
        %1120 = vmatprep.subr.mxu0 0.0
        %1121 = vmatpush1.msra.mxu0 0.0
        %1122 = vmatprep.subr.mxu0 0.0
        %1123 = vmatpush1.msra.mxu0 0.0
        %1124 = vmatprep.subr.mxu0 0.0
        %1125 = vmatpush1.msra.mxu0 0.0
        %1126 = vmatprep.subr.mxu0 0.0
        %1127 = vmatpush1.msra.mxu0 0.0
        %1128 = vmatprep.mubr.f32.mxu0 0.0
        %1129 = vmatmul.mubr.f32.gmra.mrb[0].mxu0 %v1055
        %v1130 = vpop.f32.mrb[0].mxu0
        %v1131 = vadd.f32 0.0, %v1130
        %v1132 = vpop.f32.mrb[0].mxu0
        %v1133 = vadd.f32 0.0, %v1132
        %1134 = vmatprep.mubr.f32.mxu0 0.0
        %1135 = vmatmul.mubr.f32.gmra.mrb[0].mxu0 %v1058
        %v1136 = vpop.f32.mrb[0].mxu0
        %v1137 = vadd.f32 0.0, %v1136
        %v1138 = vpop.f32.mrb[0].mxu0
        %v1139 = vadd.f32 0.0, %v1138
        %1140 = vdwg.mxu0
        %v1141 = vadd.f32 %v1026, %v1131
        %v1142 = vadd.f32 %v1027, %v1133
        %v1143 = vadd.f32 %v1028, %v1137
        %v1144 = vadd.f32 %v1029, %v1139
        %s1145 = scalar_lea.vmem %s3, 112
        %v1146 = vld [vmem:[%s1145] sm:$0xff]
        %v1147 = vld [vmem:[%s1145 + $0x8] sm:$0xff]
        %1148 = vrot.lane.b32.xlu0 %v360, 95
        %v1149 = vpop.permute.xlu0 %1148
        %1150 = vrot.lane.b32.xlu0 %v384, 95
        %v1151 = vpop.permute.xlu0 %1150
        %1152 = vrot.lane.b32.xlu0 %v361, 95
        %v1153 = vpop.permute.xlu0 %1152
        %vm1154 = vcmask 777216
        %v1155 = vsel %vm1154, %v1149, %v1151
        %v1156 = vsel %vm1154, %v1151, %v1153
        %v1158 = vsel %vm394, %v1146, 0
        %v1161 = vsel %vm394, %v1147, 0
        %v1163 = vsel %vm401, %v1155, 0
        %v1165 = vsel %vm401, %v1156, 0
        %1167 = vmatprep.subr.mxu0 %v1165
        %1168 = vmatpush1.msra.mxu0 %v1163
        %1169 = vmatprep.subr.mxu0 0.0
        %1170 = vmatpush1.msra.mxu0 0.0
        %1171 = vmatprep.subr.mxu0 0.0
        %1172 = vmatpush1.msra.mxu0 0.0
        %1173 = vmatprep.subr.mxu0 0.0
        %1174 = vmatpush1.msra.mxu0 0.0
        %1175 = vmatprep.subr.mxu0 0.0
        %1176 = vmatpush1.msra.mxu0 0.0
        %1177 = vmatprep.subr.mxu0 0.0
        %1178 = vmatpush1.msra.mxu0 0.0
        %1179 = vmatprep.subr.mxu0 0.0
        %1180 = vmatpush1.msra.mxu0 0.0
        %1181 = vmatprep.subr.mxu0 0.0
        %1182 = vmatpush1.msra.mxu0 0.0
        %1183 = vmatprep.subr.mxu0 0.0
        %1184 = vmatpush1.msra.mxu0 0.0
        %1185 = vmatprep.subr.mxu0 0.0
        %1186 = vmatpush1.msra.mxu0 0.0
        %1187 = vmatprep.subr.mxu0 0.0
        %1188 = vmatpush1.msra.mxu0 0.0
        %1189 = vmatprep.subr.mxu0 0.0
        %1190 = vmatpush1.msra.mxu0 0.0
        %1191 = vmatprep.subr.mxu0 0.0
        %1192 = vmatpush1.msra.mxu0 0.0
        %1193 = vmatprep.subr.mxu0 0.0
        %1194 = vmatpush1.msra.mxu0 0.0
        %1195 = vmatprep.subr.mxu0 0.0
        %1196 = vmatpush1.msra.mxu0 0.0
        %1197 = vmatprep.subr.mxu0 0.0
        %1198 = vmatpush1.msra.mxu0 0.0
        %1199 = vmatprep.subr.mxu0 0.0
        %1200 = vmatpush1.msra.mxu0 0.0
        %1201 = vmatprep.subr.mxu0 0.0
        %1202 = vmatpush1.msra.mxu0 0.0
        %1203 = vmatprep.subr.mxu0 0.0
        %1204 = vmatpush1.msra.mxu0 0.0
        %1205 = vmatprep.subr.mxu0 0.0
        %1206 = vmatpush1.msra.mxu0 0.0
        %1207 = vmatprep.subr.mxu0 0.0
        %1208 = vmatpush1.msra.mxu0 0.0
        %1209 = vmatprep.subr.mxu0 0.0
        %1210 = vmatpush1.msra.mxu0 0.0
        %1211 = vmatprep.subr.mxu0 0.0
        %1212 = vmatpush1.msra.mxu0 0.0
        %1213 = vmatprep.subr.mxu0 0.0
        %1214 = vmatpush1.msra.mxu0 0.0
        %1215 = vmatprep.subr.mxu0 0.0
        %1216 = vmatpush1.msra.mxu0 0.0
        %1217 = vmatprep.subr.mxu0 0.0
        %1218 = vmatpush1.msra.mxu0 0.0
        %1219 = vmatprep.subr.mxu0 0.0
        %1220 = vmatpush1.msra.mxu0 0.0
        %1221 = vmatprep.subr.mxu0 0.0
        %1222 = vmatpush1.msra.mxu0 0.0
        %1223 = vmatprep.subr.mxu0 0.0
        %1224 = vmatpush1.msra.mxu0 0.0
        %1225 = vmatprep.subr.mxu0 0.0
        %1226 = vmatpush1.msra.mxu0 0.0
        %1227 = vmatprep.subr.mxu0 0.0
        %1228 = vmatpush1.msra.mxu0 0.0
        %1229 = vmatprep.subr.mxu0 0.0
        %1230 = vmatpush1.msra.mxu0 0.0
        %1231 = vmatprep.mubr.f32.mxu0 0.0
        %1232 = vmatmul.mubr.f32.gmra.mrb[0].mxu0 %v1158
        %v1233 = vpop.f32.mrb[0].mxu0
        %v1234 = vadd.f32 0.0, %v1233
        %v1235 = vpop.f32.mrb[0].mxu0
        %v1236 = vadd.f32 0.0, %v1235
        %1237 = vmatprep.mubr.f32.mxu0 0.0
        %1238 = vmatmul.mubr.f32.gmra.mrb[0].mxu0 %v1161
        %v1239 = vpop.f32.mrb[0].mxu0
        %v1240 = vadd.f32 0.0, %v1239
        %v1241 = vpop.f32.mrb[0].mxu0
        %v1242 = vadd.f32 0.0, %v1241
        %1243 = vdwg.mxu0
        %v1244 = vadd.f32 %v1141, %v1234
        %v1245 = vadd.f32 %v1142, %v1236
        %v1246 = vadd.f32 %v1143, %v1240
        %v1247 = vadd.f32 %v1144, %v1242
        %1248 = vrot.lane.b32.xlu0 %v581, 34
        %v1249 = vpop.permute.xlu0 %1248
        %v1250 = vrot.slane %v1249, 4
        %vm1251 = vcmask 277504
        %v1252 = vsel %vm1251, %v1250, %v1249
        %v1255 = vmul.f32 %v360, %v1252
        %v1256 = vmul.f32 %v361, %v1250
        %s1257 = scalar_lea.vmem %s3, 128
        %v1258 = vld [vmem:[%s1257] sm:$0xff]
        %v1259 = vld [vmem:[%s1257 + $0x8] sm:$0xff]
        %v1262 = vcombine.high %v1255, %v1255
        %1263 = vrot.lane.b32.xlu0 %v1255, 94
        %v1264 = vpop.permute.xlu0 %1263
        %1265 = vrot.lane.b32.xlu0 %v1262, 94
        %v1266 = vpop.permute.xlu0 %1265
        %1267 = vrot.lane.b32.xlu0 %v1256, 94
        %v1268 = vpop.permute.xlu0 %1267
        %vm1269 = vcmask 769024
        %v1270 = vsel %vm1269, %v1264, %v1266
        %v1271 = vsel %vm1269, %v1266, %v1268
        %v1273 = vsel %vm394, %v1258, 0
        %v1276 = vsel %vm394, %v1259, 0
        %v1278 = vsel %vm401, %v1270, 0
        %v1280 = vsel %vm401, %v1271, 0
        %1282 = vmatprep.subr.mxu0 %v1280
        %1283 = vmatpush1.msra.mxu0 %v1278
        %1284 = vmatprep.subr.mxu0 0.0
        %1285 = vmatpush1.msra.mxu0 0.0
        %1286 = vmatprep.subr.mxu0 0.0
        %1287 = vmatpush1.msra.mxu0 0.0
        %1288 = vmatprep.subr.mxu0 0.0
        %1289 = vmatpush1.msra.mxu0 0.0
        %1290 = vmatprep.subr.mxu0 0.0
        %1291 = vmatpush1.msra.mxu0 0.0
        %1292 = vmatprep.subr.mxu0 0.0
        %1293 = vmatpush1.msra.mxu0 0.0
        %1294 = vmatprep.subr.mxu0 0.0
        %1295 = vmatpush1.msra.mxu0 0.0
        %1296 = vmatprep.subr.mxu0 0.0
        %1297 = vmatpush1.msra.mxu0 0.0
        %1298 = vmatprep.subr.mxu0 0.0
        %1299 = vmatpush1.msra.mxu0 0.0
        %1300 = vmatprep.subr.mxu0 0.0
        %1301 = vmatpush1.msra.mxu0 0.0
        %1302 = vmatprep.subr.mxu0 0.0
        %1303 = vmatpush1.msra.mxu0 0.0
        %1304 = vmatprep.subr.mxu0 0.0
        %1305 = vmatpush1.msra.mxu0 0.0
        %1306 = vmatprep.subr.mxu0 0.0
        %1307 = vmatpush1.msra.mxu0 0.0
        %1308 = vmatprep.subr.mxu0 0.0
        %1309 = vmatpush1.msra.mxu0 0.0
        %1310 = vmatprep.subr.mxu0 0.0
        %1311 = vmatpush1.msra.mxu0 0.0
        %1312 = vmatprep.subr.mxu0 0.0
        %1313 = vmatpush1.msra.mxu0 0.0
        %1314 = vmatprep.subr.mxu0 0.0
        %1315 = vmatpush1.msra.mxu0 0.0
        %1316 = vmatprep.subr.mxu0 0.0
        %1317 = vmatpush1.msra.mxu0 0.0
        %1318 = vmatprep.subr.mxu0 0.0
        %1319 = vmatpush1.msra.mxu0 0.0
        %1320 = vmatprep.subr.mxu0 0.0
        %1321 = vmatpush1.msra.mxu0 0.0
        %1322 = vmatprep.subr.mxu0 0.0
        %1323 = vmatpush1.msra.mxu0 0.0
        %1324 = vmatprep.subr.mxu0 0.0
        %1325 = vmatpush1.msra.mxu0 0.0
        %1326 = vmatprep.subr.mxu0 0.0
        %1327 = vmatpush1.msra.mxu0 0.0
        %1328 = vmatprep.subr.mxu0 0.0
        %1329 = vmatpush1.msra.mxu0 0.0
        %1330 = vmatprep.subr.mxu0 0.0
        %1331 = vmatpush1.msra.mxu0 0.0
        %1332 = vmatprep.subr.mxu0 0.0
        %1333 = vmatpush1.msra.mxu0 0.0
        %1334 = vmatprep.subr.mxu0 0.0
        %1335 = vmatpush1.msra.mxu0 0.0
        %1336 = vmatprep.subr.mxu0 0.0
        %1337 = vmatpush1.msra.mxu0 0.0
        %1338 = vmatprep.subr.mxu0 0.0
        %1339 = vmatpush1.msra.mxu0 0.0
        %1340 = vmatprep.subr.mxu0 0.0
        %1341 = vmatpush1.msra.mxu0 0.0
        %1342 = vmatprep.subr.mxu0 0.0
        %1343 = vmatpush1.msra.mxu0 0.0
        %1344 = vmatprep.subr.mxu0 0.0
        %1345 = vmatpush1.msra.mxu0 0.0
        %1346 = vmatprep.mubr.f32.mxu0 0.0
        %1347 = vmatmul.mubr.f32.gmra.mrb[0].mxu0 %v1273
        %v1348 = vpop.f32.mrb[0].mxu0
        %v1349 = vadd.f32 0.0, %v1348
        %v1350 = vpop.f32.mrb[0].mxu0
        %v1351 = vadd.f32 0.0, %v1350
        %1352 = vmatprep.mubr.f32.mxu0 0.0
        %1353 = vmatmul.mubr.f32.gmra.mrb[0].mxu0 %v1276
        %v1354 = vpop.f32.mrb[0].mxu0
        %v1355 = vadd.f32 0.0, %v1354
        %v1356 = vpop.f32.mrb[0].mxu0
        %v1357 = vadd.f32 0.0, %v1356
        %1358 = vdwg.mxu0
        %v1359 = vadd.f32 %v1244, %v1349
        %v1360 = vadd.f32 %v1245, %v1351
        %v1361 = vadd.f32 %v1246, %v1355
        %v1362 = vadd.f32 %v1247, %v1357
        %v1363 = vld [vmem:[%s4] sm:$0xff]
        %v1364 = vld [vmem:[%s4 + $0x8] sm:$0xff]
        %1366 = vset.pattern.permute.xlu0 0
        %1367 = vperm.xlu0 %1366, %v1363
        %v1368 = vpop.permute.xlu0 %1367
        %1371 = vset.pattern.permute.xlu0 0
        %1372 = vperm.xlu0 %1371, %v1364
        %v1373 = vpop.permute.xlu0 %1372
        %v1375 = vadd.f32 %v1359, %v1368
        %v1376 = vadd.f32 %v1360, %v1368
        %v1377 = vadd.f32 %v1361, %v1373
        %v1378 = vadd.f32 %v1362, %v1373
        %v1379 = vld [vmem:[%s353] sm:$0xff]
        %v1380 = vld [vmem:[%s353 + $0x8] sm:$0xff]
        %v1381 = vld [vmem:[%s358] sm:$0xff]
        %v1382 = vld [vmem:[%s358 + $0x8] sm:$0xff]
        %1384 = vset.pattern.permute.xlu0 0
        %1385 = vperm.xlu0 %1384, %v1381
        %v1386 = vpop.permute.xlu0 %1385
        %1389 = vset.pattern.permute.xlu0 0
        %1390 = vperm.xlu0 %1389, %v1382
        %v1391 = vpop.permute.xlu0 %1390
        %v1394 = vsel %vm394, %v1379, 0
        %v1397 = vsel %vm394, %v1380, 0
        %1399 = vmatprep.subr.mxu0 %v832
        %1400 = vmatpush1.msra.mxu0 %v830
        %1401 = vmatprep.subr.mxu0 0.0
        %1402 = vmatpush1.msra.mxu0 0.0
        %1403 = vmatprep.subr.mxu0 0.0
        %1404 = vmatpush1.msra.mxu0 0.0
        %1405 = vmatprep.subr.mxu0 0.0
        %1406 = vmatpush1.msra.mxu0 0.0
        %1407 = vmatprep.subr.mxu0 0.0
        %1408 = vmatpush1.msra.mxu0 0.0
        %1409 = vmatprep.subr.mxu0 0.0
        %1410 = vmatpush1.msra.mxu0 0.0
        %1411 = vmatprep.subr.mxu0 0.0
        %1412 = vmatpush1.msra.mxu0 0.0
        %1413 = vmatprep.subr.mxu0 0.0
        %1414 = vmatpush1.msra.mxu0 0.0
        %1415 = vmatprep.subr.mxu0 0.0
        %1416 = vmatpush1.msra.mxu0 0.0
        %1417 = vmatprep.subr.mxu0 0.0
        %1418 = vmatpush1.msra.mxu0 0.0
        %1419 = vmatprep.subr.mxu0 0.0
        %1420 = vmatpush1.msra.mxu0 0.0
        %1421 = vmatprep.subr.mxu0 0.0
        %1422 = vmatpush1.msra.mxu0 0.0
        %1423 = vmatprep.subr.mxu0 0.0
        %1424 = vmatpush1.msra.mxu0 0.0
        %1425 = vmatprep.subr.mxu0 0.0
        %1426 = vmatpush1.msra.mxu0 0.0
        %1427 = vmatprep.subr.mxu0 0.0
        %1428 = vmatpush1.msra.mxu0 0.0
        %1429 = vmatprep.subr.mxu0 0.0
        %1430 = vmatpush1.msra.mxu0 0.0
        %1431 = vmatprep.subr.mxu0 0.0
        %1432 = vmatpush1.msra.mxu0 0.0
        %1433 = vmatprep.subr.mxu0 0.0
        %1434 = vmatpush1.msra.mxu0 0.0
        %1435 = vmatprep.subr.mxu0 0.0
        %1436 = vmatpush1.msra.mxu0 0.0
        %1437 = vmatprep.subr.mxu0 0.0
        %1438 = vmatpush1.msra.mxu0 0.0
        %1439 = vmatprep.subr.mxu0 0.0
        %1440 = vmatpush1.msra.mxu0 0.0
        %1441 = vmatprep.subr.mxu0 0.0
        %1442 = vmatpush1.msra.mxu0 0.0
        %1443 = vmatprep.subr.mxu0 0.0
        %1444 = vmatpush1.msra.mxu0 0.0
        %1445 = vmatprep.subr.mxu0 0.0
        %1446 = vmatpush1.msra.mxu0 0.0
        %1447 = vmatprep.subr.mxu0 0.0
        %1448 = vmatpush1.msra.mxu0 0.0
        %1449 = vmatprep.subr.mxu0 0.0
        %1450 = vmatpush1.msra.mxu0 0.0
        %1451 = vmatprep.subr.mxu0 0.0
        %1452 = vmatpush1.msra.mxu0 0.0
        %1453 = vmatprep.subr.mxu0 0.0
        %1454 = vmatpush1.msra.mxu0 0.0
        %1455 = vmatprep.subr.mxu0 0.0
        %1456 = vmatpush1.msra.mxu0 0.0
        %1457 = vmatprep.subr.mxu0 0.0
        %1458 = vmatpush1.msra.mxu0 0.0
        %1459 = vmatprep.subr.mxu0 0.0
        %1460 = vmatpush1.msra.mxu0 0.0
        %1461 = vmatprep.subr.mxu0 0.0
        %1462 = vmatpush1.msra.mxu0 0.0
        %1463 = vmatprep.mubr.f32.mxu0 0.0
        %1464 = vmatmul.mubr.f32.gmra.mrb[0].mxu0 %v1394
        %v1465 = vpop.f32.mrb[0].mxu0
        %v1466 = vadd.f32 %v1386, %v1465
        %v1467 = vpop.f32.mrb[0].mxu0
        %v1468 = vadd.f32 %v1386, %v1467
        %1469 = vmatprep.mubr.f32.mxu0 0.0
        %1470 = vmatmul.mubr.f32.gmra.mrb[0].mxu0 %v1397
        %v1471 = vpop.f32.mrb[0].mxu0
        %v1472 = vadd.f32 %v1391, %v1471
        %v1473 = vpop.f32.mrb[0].mxu0
        %v1474 = vadd.f32 %v1391, %v1473
        %1475 = vdwg.mxu0
        %v1476 = vrot.slane %v1466, 4
        %v1477 = vmax.f32 %v1466, %v1476
        %v1478 = vrot.slane %v1477, 2
        %v1479 = vmax.f32 %v1477, %v1478
        %v1480 = vrot.slane %v1479, 1
        %v1481 = vmax.f32 %v1479, %v1480
        %v1482 = vrot.slane %v1468, 4
        %v1483 = vmax.f32 %v1468, %v1482
        %v1484 = vrot.slane %v1483, 2
        %v1485 = vmax.f32 %v1483, %v1484
        %v1486 = vrot.slane %v1485, 1
        %v1487 = vmax.f32 %v1485, %v1486
        %v1488 = vxor.u32 %v1481, 2147483648
        %v1489 = vxor.u32 %v1487, 2147483648
        %v1490 = vmul.f32 %v1488, 1.442695
        %v1491 = vpow.pop %v1490
        %v1492 = vmul.f32 %v1489, 1.442695
        %v1493 = vpow.pop %v1492
        %v1494 = vadd.f32 %v1491, 1.0
        %v1495 = vadd.f32 %v1493, 1.0
        %v1496 = vrcp.pop %v1494
        %v1497 = vmul.f32 1.0, %v1496
        %v1498 = vrcp.pop %v1495
        %v1499 = vmul.f32 1.0, %v1498
        %s1500 = sld [smem:[#allocation2]]
        %v1501 = vstv %s1500
        %v1502 = vmul.f32 %v1497, %v1501
        %v1503 = vmul.f32 %v1499, %v1501
        %v1504 = vmul.f32 %v1375, %v1502
        %v1505 = vmul.f32 %v1376, %v1503
        %v1506 = vrot.slane %v1472, 4
        %v1507 = vmax.f32 %v1472, %v1506
        %v1508 = vrot.slane %v1507, 2
        %v1509 = vmax.f32 %v1507, %v1508
        %v1510 = vrot.slane %v1509, 1
        %v1511 = vmax.f32 %v1509, %v1510
        %v1512 = vrot.slane %v1474, 4
        %v1513 = vmax.f32 %v1474, %v1512
        %v1514 = vrot.slane %v1513, 2
        %v1515 = vmax.f32 %v1513, %v1514
        %v1516 = vrot.slane %v1515, 1
        %v1517 = vmax.f32 %v1515, %v1516
        %v1518 = vxor.u32 %v1511, 2147483648
        %v1519 = vxor.u32 %v1517, 2147483648
        %v1520 = vmul.f32 %v1518, 1.442695
        %v1521 = vpow.pop %v1520
        %v1522 = vmul.f32 %v1519, 1.442695
        %v1523 = vpow.pop %v1522
        %v1524 = vadd.f32 %v1521, 1.0
        %v1525 = vadd.f32 %v1523, 1.0
        %v1526 = vrcp.pop %v1524
        %v1527 = vmul.f32 1.0, %v1526
        %v1528 = vrcp.pop %v1525
        %v1529 = vmul.f32 1.0, %v1528
        %s1530 = sld [smem:[#allocation2 + $0x1]]
        %v1531 = vstv %s1530
        %v1532 = vmul.f32 %v1527, %v1531
        %v1533 = vmul.f32 %v1529, %v1531
        %v1534 = vmul.f32 %v1377, %v1532
        %v1535 = vmul.f32 %v1378, %v1533
        %1536 = vst [vmem:[%s339] sm:$0xff] %v1504
        %1537 = vst [vmem:[%s339 + $0x8] sm:$0xff] %v1505
        %1538 = vst [vmem:[%s339 + $0x10] sm:$0xff] %v1534
        %1539 = vst [vmem:[%s339 + $0x18] sm:$0xff] %v1535
        %s1540 = sand.u32 %s208, 1
        %s1541 = scalar_lea.sflag [#allocation3], %s1540
        %s1542 = sand.u32 %s208, 1
        %s1543 = smul.addr %s1542, 32
        %s1544 = scalar_lea.vmem [#allocation5], %s1543
        // Predicated region
        $region53: #{tpu_custom_call.1} parent=47 // pred_check
          %p1545 = pneg %p218
        $region54: #{tpu_custom_call.1} parent=47 // pred_check_branch
          %1547 = sbr.rel (%p1545) target = $region56
        $region55: #{tpu_custom_call.1} parent=47 // pred_region
          %s1548 = smul.u32 2, %s27
          %s1550 = ssub.s32 512, 512
          %1551 = vsyncadd %s1541, %s1550
          %s1552 = smul.addr %s26, 4
          %s1553 = sadd.s32 %s1548, %s1552
          %s1554 = smul.addr %s1553, 128
          %s1555 = scalar_lea.hbm %s7, %s1554
          %s1556 = sshll.u32 %s1544, 4
          %s1557 = int_to_ptr.vmem [resolvable:$true] %s1556
          %1562 = dma.vmem_to_hbm [thread:$0]  %s1557, 512, %s1555, %s1541, 256, 256, 16
        $region56: #{tpu_custom_call.1} parent=47 // pred_fallthru
          _
      $region48: #{tpu_custom_call.1} parent=5 // pred_fallthru
        _
      %p1563 = scmp.le.s32.totalorder 2, %s17
      // Predicated region
      $region57: #{tpu_custom_call.1} parent=5 // pred_check
        %p1564 = pneg %p1563
      $region58: #{tpu_custom_call.1} parent=5 // pred_check_branch
        %1566 = sbr.rel (%p1564) target = $region60
      $region59: #{tpu_custom_call.1} parent=5 // pred_region
        %s1567 = ssub.s32 %s17, 2
        // Predicated region
        $region61: #{tpu_custom_call.1} parent=59 // pred_check
          %p1568 = pneg %p224
        $region62: #{tpu_custom_call.1} parent=59 // pred_check_branch
          %1570 = sbr.rel (%p1568) target = $region64
        $region63: #{tpu_custom_call.1} parent=59 // pred_region
          %s1571 = sand.u32 %s209, 1
          %s1572 = scalar_lea.sflag [#allocation3], %s1571
          %s1573 = sand.u32 %s209, 1
          %s1574 = smul.addr %s1573, 32
          %s1575 = scalar_lea.vmem [#allocation5], %s1574
          %1576 = dma.done %s1572, 512
        $region64: #{tpu_custom_call.1} parent=59 // pred_fallthru
          _
      $region60: #{tpu_custom_call.1} parent=5 // pred_fallthru
        _
    $region6: #{tpu_custom_call.1} parent=1 // loop_footer
      %s21 = sadd.s32 1, %s17
    $region7: #{tpu_custom_call.1} parent=1 // loop_footer_branch
      %16 = sbr.rel target = $region3
    $region8: #{tpu_custom_call.1} parent=1 // loop_exit
      _
    %1577 = vsyncpa [#allocation3], 1
    %s1578 = scalar_lea.sflag [#allocation3], 1
    %1579 = vsyncpa %s1578, 1
    %1580 = vsyncpa [#allocation4], 1
    %s1581 = scalar_lea.sflag [#allocation4], 1
    %1582 = vsyncpa %s1581, 1

// kernel: tpu_custom_call.1
$region0: #{tpu_custom_call.1}
  #allocation0 [shape = 'u32[]', space=smem, size = 0x4, offset = 0x4, fixed_abs, tag = 'smem constant byte address 0x4 - core index']
  #allocation1 [shape = 'u32[144,128]{1,0:T(1,128)}', space=vmem, size = 0x12000, scoped, tag = 'internal scratch']
  %s0 = inlined_call_operand.vmem [shape: f32[2,1,4,290], index: 0, kind: input, shape index: {}]
  %s1 = inlined_call_operand.vmem [shape: f32[2,16,4], index: 1, kind: input, shape index: {}]
  %s2 = inlined_call_operand.vmem [shape: f32[2,16,1], index: 2, kind: input, shape index: {}]
  %s3 = inlined_call_operand.vmem [shape: f32[9,16,4], index: 3, kind: input, shape index: {}]
  %s4 = inlined_call_operand.vmem [shape: f32[16,1], index: 4, kind: input, shape index: {}]
  %s5 = inlined_call_operand.vmem [shape: f32[2,256], index: 5, kind: input, shape index: {}]
  %s6 = inlined_call_operand.vmem [shape: f32[2], index: 6, kind: input, shape index: {}]
  %s7 = inlined_call_operand.hbm [shape: f32[2,16,256], index: 7, kind: output, shape index: {}]
  %s8 = sld [smem:[#allocation0]]
  $region65: #{tpu_custom_call.1} parent=0
    _
  %s10 = ssub.s32 1, %s8
  %s11 = scalar_select 0, %s10, %s8
  $region1: #{tpu_custom_call.1} parent=0
    #allocation2 [shape = 'u8[512]{0}', space=smem, size = 0x200, scoped, tag = 'input window, operand 6, single buffered']
    #allocation3 [shape = 's32[2]{0}', space=sflag, size = 0x8, scoped, tag = 'scoped memory for tpu_custom_call.1']
    #allocation4 [shape = 's32[2]{0}', space=sflag, size = 0x8, scoped, tag = 'scoped memory for tpu_custom_call.1']
    #allocation5 [shape = 'u8[32768]{0}', space=vmem, size = 0x8000, scoped, tag = 'output window, operand 0']
    %12 = vsyncpa [#allocation4], 0
    %13 = vsyncpa [#allocation3], 0
    %s14 = scalar_lea.sflag [#allocation3], 1
    %15 = vsyncpa %s14, 0
    loop: start=0, step=1, limit=4
    $region2: #{tpu_custom_call.1} parent=1 // loop_pre_header
      _
    $region3: #{tpu_custom_call.1} parent=1 // loop_header
      %s17 = sphi 0, %s21
      %p18 = scmp.ge.s32.totalorder %s17, 4
      %s24 = sphi 0, %s36
      %s25 = sphi 0, %s32
      %s26 = sphi 0, %s24
      %s27 = sphi 0, %s25
      %s28 = sphi 0, %s26
      %s29 = sphi 0, %s27
      %s41 = sphi 0, %s43
      %s44 = sphi 0, %s41
      %s45 = sphi 0, %s44
      %s61 = sphi 0, %s45
      %s67 = sphi 0, %s69
      %s70 = sphi 0, %s67
      %s71 = sphi 0, %s70
      %s87 = sphi 0, %s71
      %s93 = sphi 0, %s95
      %s96 = sphi 0, %s93
      %s97 = sphi 0, %s96
      %s113 = sphi 0, %s97
      %s117 = sphi 0, %s117
      %s119 = sphi 0, %s117
      %s120 = sphi 0, %s119
      %s134 = sphi 0, %s120
      %s138 = sphi 0, %s138
      %s140 = sphi 0, %s138
      %s141 = sphi 0, %s140
      %s155 = sphi 0, %s141
      %s159 = sphi 0, %s159
      %s161 = sphi 0, %s159
      %s162 = sphi 0, %s161
      %s176 = sphi 0, %s162
      %s180 = sphi 0, %s180
      %s182 = sphi 0, %s180
      %s183 = sphi 0, %s182
      %s197 = sphi 0, %s183
      %s205 = sphi 0, %s207
      %s208 = sphi 0, %s205
      %s209 = sphi 0, %s208
      %s225 = sphi 0, %s209
    $region4: #{tpu_custom_call.1} parent=1 // loop_header_branch
      %20 = sbr.rel (%p18) target = $region8
    $region5: #{tpu_custom_call.1} parent=1 // loop_body
      %s22 = ssub.s32 %s17, 1
      %s23 = ssub.s32 %s17, 2
      %s30 = sadd.s32 1, %s25
      %p31 = scmp.ge.s32.totalorder %s30, 1
      %s32 = scalar_select %p31, 0, %s30
      %s33 = sadd.s32 1, %s24
      %s34 = scalar_select %p31, %s33, %s24
      %p35 = scmp.ge.s32.totalorder %s34, 2
      %s36 = scalar_select %p35, 0, %s34
      %s37 = ssub.s32 %s24, %s36
      %s38 = ssub.s32 %s25, %s32
      %s39 = sor.u32 %s37, %s38
      %p40 = scmp.eq.s32.totalorder %s39, 0
      %s42 = sadd.s32 %s41, 1
      %s43 = scalar_select %p40, %s41, %s42
      %p46 = pneg %p40
      %p47 = scmp.eq.s32.totalorder %s17, 1
      %p48 = por %p46, %p47
      %p49 = scmp.ne.s32.totalorder %s41, %s44
      %p50 = scmp.eq.s32.totalorder %s17, 0
      %p51 = por %p49, %p50
      %p52 = scmp.ne.s32.totalorder %s41, %s44
      %p53 = scmp.eq.s32.totalorder %s22, 1
      %p54 = por %p52, %p53
      %p55 = scmp.ne.s32.totalorder %s44, %s45
      %p56 = scmp.eq.s32.totalorder %s22, 0
      %p57 = por %p55, %p56
      %p58 = scmp.ne.s32.totalorder %s44, %s45
      %p59 = scmp.eq.s32.totalorder %s23, 1
      %p60 = por %p58, %p59
      %p62 = scmp.ne.s32.totalorder %s45, %s61
      %p63 = scmp.eq.s32.totalorder %s23, 0
      %p64 = por %p62, %p63
      %s65 = ssub.s32 %s24, %s36
      %p66 = scmp.eq.s32.totalorder %s65, 0
      %s68 = sadd.s32 %s67, 1
      %s69 = scalar_select %p66, %s67, %s68
      %p72 = pneg %p66
      %p73 = scmp.eq.s32.totalorder %s17, 1
      %p74 = por %p72, %p73
      %p75 = scmp.ne.s32.totalorder %s67, %s70
      %p76 = scmp.eq.s32.totalorder %s17, 0
      %p77 = por %p75, %p76
      %p78 = scmp.ne.s32.totalorder %s67, %s70
      %p79 = scmp.eq.s32.totalorder %s22, 1
      %p80 = por %p78, %p79
      %p81 = scmp.ne.s32.totalorder %s70, %s71
      %p82 = scmp.eq.s32.totalorder %s22, 0
      %p83 = por %p81, %p82
      %p84 = scmp.ne.s32.totalorder %s70, %s71
      %p85 = scmp.eq.s32.totalorder %s23, 1
      %p86 = por %p84, %p85
      %p88 = scmp.ne.s32.totalorder %s71, %s87
      %p89 = scmp.eq.s32.totalorder %s23, 0
      %p90 = por %p88, %p89
      %s91 = ssub.s32 %s24, %s36
      %p92 = scmp.eq.s32.totalorder %s91, 0
      %s94 = sadd.s32 %s93, 1
      %s95 = scalar_select %p92, %s93, %s94
      %p98 = pneg %p92
      %p99 = scmp.eq.s32.totalorder %s17, 1
      %p100 = por %p98, %p99
      %p101 = scmp.ne.s32.totalorder %s93, %s96
      %p102 = scmp.eq.s32.totalorder %s17, 0
      %p103 = por %p101, %p102
      %p104 = scmp.ne.s32.totalorder %s93, %s96
      %p105 = scmp.eq.s32.totalorder %s22, 1
      %p106 = por %p104, %p105
      %p107 = scmp.ne.s32.totalorder %s96, %s97
      %p108 = scmp.eq.s32.totalorder %s22, 0
      %p109 = por %p107, %p108
      %p110 = scmp.ne.s32.totalorder %s96, %s97
      %p111 = scmp.eq.s32.totalorder %s23, 1
      %p112 = por %p110, %p111
      %p114 = scmp.ne.s32.totalorder %s97, %s113
      %p115 = scmp.eq.s32.totalorder %s23, 0
      %p116 = por %p114, %p115
      %s118 = sadd.s32 %s117, 1
      %p121 = scmp.eq.s32.totalorder %s17, 1
      %p122 = scmp.ne.s32.totalorder %s117, %s119
      %p123 = scmp.eq.s32.totalorder %s17, 0
      %p124 = por %p122, %p123
      %p125 = scmp.ne.s32.totalorder %s117, %s119
      %p126 = scmp.eq.s32.totalorder %s22, 1
      %p127 = por %p125, %p126
      %p128 = scmp.ne.s32.totalorder %s119, %s120
      %p129 = scmp.eq.s32.totalorder %s22, 0
      %p130 = por %p128, %p129
      %p131 = scmp.ne.s32.totalorder %s119, %s120
      %p132 = scmp.eq.s32.totalorder %s23, 1
      %p133 = por %p131, %p132
      %p135 = scmp.ne.s32.totalorder %s120, %s134
      %p136 = scmp.eq.s32.totalorder %s23, 0
      %p137 = por %p135, %p136
      %s139 = sadd.s32 %s138, 1
      %p142 = scmp.eq.s32.totalorder %s17, 1
      %p143 = scmp.ne.s32.totalorder %s138, %s140
      %p144 = scmp.eq.s32.totalorder %s17, 0
      %p145 = por %p143, %p144
      %p146 = scmp.ne.s32.totalorder %s138, %s140
      %p147 = scmp.eq.s32.totalorder %s22, 1
      %p148 = por %p146, %p147
      %p149 = scmp.ne.s32.totalorder %s140, %s141
      %p150 = scmp.eq.s32.totalorder %s22, 0
      %p151 = por %p149, %p150
      %p152 = scmp.ne.s32.totalorder %s140, %s141
      %p153 = scmp.eq.s32.totalorder %s23, 1
      %p154 = por %p152, %p153
      %p156 = scmp.ne.s32.totalorder %s141, %s155
      %p157 = scmp.eq.s32.totalorder %s23, 0
      %p158 = por %p156, %p157
      %s160 = sadd.s32 %s159, 1
      %p163 = scmp.eq.s32.totalorder %s17, 1
      %p164 = scmp.ne.s32.totalorder %s159, %s161
      %p165 = scmp.eq.s32.totalorder %s17, 0
      %p166 = por %p164, %p165
      %p167 = scmp.ne.s32.totalorder %s159, %s161
      %p168 = scmp.eq.s32.totalorder %s22, 1
      %p169 = por %p167, %p168
      %p170 = scmp.ne.s32.totalorder %s161, %s162
      %p171 = scmp.eq.s32.totalorder %s22, 0
      %p172 = por %p170, %p171
      %p173 = scmp.ne.s32.totalorder %s161, %s162
      %p174 = scmp.eq.s32.totalorder %s23, 1
      %p175 = por %p173, %p174
      %p177 = scmp.ne.s32.totalorder %s162, %s176
      %p178 = scmp.eq.s32.totalorder %s23, 0
      %p179 = por %p177, %p178
      %s181 = sadd.s32 %s180, 1
      %p184 = scmp.eq.s32.totalorder %s17, 1
      %p185 = scmp.ne.s32.totalorder %s180, %s182
      %p186 = scmp.eq.s32.totalorder %s17, 0
      %p187 = por %p185, %p186
      %p188 = scmp.ne.s32.totalorder %s180, %s182
      %p189 = scmp.eq.s32.totalorder %s22, 1
      %p190 = por %p188, %p189
      %p191 = scmp.ne.s32.totalorder %s182, %s183
      %p192 = scmp.eq.s32.totalorder %s22, 0
      %p193 = por %p191, %p192
      %p194 = scmp.ne.s32.totalorder %s182, %s183
      %p195 = scmp.eq.s32.totalorder %s23, 1
      %p196 = por %p194, %p195
      %p198 = scmp.ne.s32.totalorder %s183, %s197
      %p199 = scmp.eq.s32.totalorder %s23, 0
      %p200 = por %p198, %p199
      %s201 = ssub.s32 %s24, %s36
      %s202 = ssub.s32 %s25, %s32
      %s203 = sor.u32 %s201, %s202
      %p204 = scmp.eq.s32.totalorder %s203, 0
      %s206 = sadd.s32 %s205, 1
      %s207 = scalar_select %p204, %s205, %s206
      %p210 = pneg %p204
      %p211 = scmp.eq.s32.totalorder %s17, 1
      %p212 = por %p210, %p211
      %p213 = scmp.ne.s32.totalorder %s205, %s208
      %p214 = scmp.eq.s32.totalorder %s17, 0
      %p215 = por %p213, %p214
      %p216 = scmp.ne.s32.totalorder %s205, %s208
      %p217 = scmp.eq.s32.totalorder %s22, 1
      %p218 = por %p216, %p217
      %p219 = scmp.ne.s32.totalorder %s208, %s209
      %p220 = scmp.eq.s32.totalorder %s22, 0
      %p221 = por %p219, %p220
      %p222 = scmp.ne.s32.totalorder %s208, %s209
      %p223 = scmp.eq.s32.totalorder %s23, 1
      %p224 = por %p222, %p223
      %p226 = scmp.ne.s32.totalorder %s209, %s225
      %p227 = scmp.eq.s32.totalorder %s23, 0
      %p228 = por %p226, %p227
      %p229 = scmp.le.s32.totalorder 1, %s17
      %p230 = scmp.lt.s32.totalorder %s17, 3
      %p231 = pnand %p229, %p230
      %p232 = pneg %p231
      // Predicated region
      $region9: #{tpu_custom_call.1} parent=5 // pred_check
        _
      $region10: #{tpu_custom_call.1} parent=5 // pred_check_branch
        %234 = sbr.rel (%p231) target = $region12
      $region11: #{tpu_custom_call.1} parent=5 // pred_region
        %s235 = ssub.s32 %s17, 1
        // Predicated region
        $region13: #{tpu_custom_call.1} parent=11 // pred_check
          %p236 = pneg %p130
        $region14: #{tpu_custom_call.1} parent=11 // pred_check_branch
          %238 = sbr.rel (%p236) target = $region16
        $region15: #{tpu_custom_call.1} parent=11 // pred_region
          _
        $region16: #{tpu_custom_call.1} parent=11 // pred_fallthru
          _
        // Predicated region
        $region17: #{tpu_custom_call.1} parent=11 // pred_check
          %p239 = pneg %p151
        $region18: #{tpu_custom_call.1} parent=11 // pred_check_branch
          %241 = sbr.rel (%p239) target = $region20
        $region19: #{tpu_custom_call.1} parent=11 // pred_region
          _
        $region20: #{tpu_custom_call.1} parent=11 // pred_fallthru
          _
        // Predicated region
        $region21: #{tpu_custom_call.1} parent=11 // pred_check
          %p242 = pneg %p172
        $region22: #{tpu_custom_call.1} parent=11 // pred_check_branch
          %244 = sbr.rel (%p242) target = $region24
        $region23: #{tpu_custom_call.1} parent=11 // pred_region
          _
        $region24: #{tpu_custom_call.1} parent=11 // pred_fallthru
          _
        // Predicated region
        $region25: #{tpu_custom_call.1} parent=11 // pred_check
          %p245 = pneg %p193
        $region26: #{tpu_custom_call.1} parent=11 // pred_check_branch
          %247 = sbr.rel (%p245) target = $region28
        $region27: #{tpu_custom_call.1} parent=11 // pred_region
          %s249 = ssub.s32 16, 16
          %250 = vsyncadd [#allocation4], %s249
          %s252 = sshll.u32 %s6, 4
          %s253 = int_to_ptr.vmem [resolvable:$true] %s252
          %255 = dma.vmem_to_smem %s253, 16, [#allocation2], [#allocation4]
        $region28: #{tpu_custom_call.1} parent=11 // pred_fallthru
          _
      $region12: #{tpu_custom_call.1} parent=5 // pred_fallthru
        _
      %p256 = scmp.lt.s32.totalorder %s17, 2
      // Predicated region
      $region29: #{tpu_custom_call.1} parent=5 // pred_check
        %p257 = pneg %p256
      $region30: #{tpu_custom_call.1} parent=5 // pred_check_branch
        %259 = sbr.rel (%p257) target = $region32
      $region31: #{tpu_custom_call.1} parent=5 // pred_region
        // Predicated region
        $region33: #{tpu_custom_call.1} parent=31 // pred_check
          %p260 = pneg %p51
        $region34: #{tpu_custom_call.1} parent=31 // pred_check_branch
          %262 = sbr.rel (%p260) target = $region36
        $region35: #{tpu_custom_call.1} parent=31 // pred_region
          %p263 = scmp.lt.s32.totalorder %s24, 1
          %s264 = scalar_select %p263, %s24, 1
          %p265 = scmp.lt.s32.totalorder %s25, 0
          %s266 = scalar_select %p265, %s25, 0
          %s267 = smul.addr %s266, 3
          %s268 = smul.addr %s264, 3
          %s269 = sadd.s32 %s267, %s268
          %s270 = smul.addr %s269, 4
          %s271 = scalar_lea.vmem %s0, %s270
        $region36: #{tpu_custom_call.1} parent=31 // pred_fallthru
          _
        // Predicated region
        $region37: #{tpu_custom_call.1} parent=31 // pred_check
          %p272 = pneg %p77
        $region38: #{tpu_custom_call.1} parent=31 // pred_check_branch
          %274 = sbr.rel (%p272) target = $region40
        $region39: #{tpu_custom_call.1} parent=31 // pred_region
          %p275 = scmp.lt.s32.totalorder %s24, 1
          %s276 = scalar_select %p275, %s24, 1
          %s277 = smul.addr %s276, 2
          %s278 = smul.addr %s277, 8
          %s279 = scalar_lea.vmem %s1, %s278
        $region40: #{tpu_custom_call.1} parent=31 // pred_fallthru
          _
        // Predicated region
        $region41: #{tpu_custom_call.1} parent=31 // pred_check
          %p280 = pneg %p103
        $region42: #{tpu_custom_call.1} parent=31 // pred_check_branch
          %282 = sbr.rel (%p280) target = $region44
        $region43: #{tpu_custom_call.1} parent=31 // pred_region
          %p283 = scmp.lt.s32.totalorder %s24, 1
          %s284 = scalar_select %p283, %s24, 1
          %s285 = smul.addr %s284, 2
          %s286 = smul.addr %s285, 8
          %s287 = scalar_lea.vmem %s2, %s286
        $region44: #{tpu_custom_call.1} parent=31 // pred_fallthru
          _
      $region32: #{tpu_custom_call.1} parent=5 // pred_fallthru
        _
      %p288 = scmp.le.s32.totalorder 1, %s17
      %p289 = scmp.lt.s32.totalorder %s17, 3
      %p290 = pnand %p288, %p289
      %p291 = pneg %p290
      // Predicated region
      $region45: #{tpu_custom_call.1} parent=5 // pred_check
        _
      $region46: #{tpu_custom_call.1} parent=5 // pred_check_branch
        %293 = sbr.rel (%p290) target = $region48
      $region47: #{tpu_custom_call.1} parent=5 // pred_region
        %s294 = ssub.s32 %s17, 1
        // Predicated region
        $region49: #{tpu_custom_call.1} parent=47 // pred_check
          %p295 = pneg %p193
        $region50: #{tpu_custom_call.1} parent=47 // pred_check_branch
          %297 = sbr.rel (%p295) target = $region52
        $region51: #{tpu_custom_call.1} parent=47 // pred_region
          %298 = dma.done [#allocation4], 16
        $region52: #{tpu_custom_call.1} parent=47 // pred_fallthru
          _
        %299 = sfence
        %p300 = scmp.lt.s32.totalorder %s26, 1
        %s301 = scalar_select %p300, %s26, 1
        %p302 = scmp.lt.s32.totalorder %s27, 0
        %s303 = scalar_select %p302, %s27, 0
        %s304 = smul.addr %s303, 3
        %s305 = smul.addr %s301, 3
        %s306 = sadd.s32 %s304, %s305
        %s307 = smul.addr %s306, 4
        %s308 = scalar_lea.vmem %s0, %s307
        %p309 = pneg %p57
        %p310 = pneg %p54
        %p311 = scmp.lt.s32.totalorder %s26, 1
        %s312 = scalar_select %p311, %s26, 1
        %s313 = smul.addr %s312, 2
        %s314 = smul.addr %s313, 8
        %s315 = scalar_lea.vmem %s1, %s314
        %p316 = pneg %p83
        %p317 = pneg %p80
        %p318 = scmp.lt.s32.totalorder %s26, 1
        %s319 = scalar_select %p318, %s26, 1
        %s320 = smul.addr %s319, 2
        %s321 = smul.addr %s320, 8
        %s322 = scalar_lea.vmem %s2, %s321
        %p323 = pneg %p109
        %p324 = pneg %p106
        %p325 = pneg %p130
        %p326 = pneg %p127
        %p327 = pneg %p151
        %p328 = pneg %p148
        %p329 = pneg %p172
        %p330 = pneg %p169
        %p331 = pneg %p193
        %p332 = pneg %p190
        %p333 = pneg %p221
        %p334 = pneg %p218
        %s335 = sand.u32 %s208, 1
        %s336 = scalar_lea.sflag [#allocation3], %s335
        %s337 = sand.u32 %s208, 1
        %s338 = smul.addr %s337, 32
        %s339 = scalar_lea.vmem [#allocation5], %s338
        %p340 = scmp.lt.s32.totalorder %s26, 1
        %s341 = scalar_select %p340, %s26, 1
        %p342 = scmp.lt.s32.totalorder %s27, 0
        %s343 = scalar_select %p342, %s27, 0
        %s344 = smul.addr %s343, 3
        %s345 = smul.addr %s341, 3
        %s346 = sadd.s32 %s344, %s345
        %s347 = smul.addr %s346, 4
        %s348 = scalar_lea.vmem %s0, %s347
        %p349 = scmp.lt.s32.totalorder %s26, 1
        %s350 = scalar_select %p349, %s26, 1
        %s351 = smul.addr %s350, 2
        %s352 = smul.addr %s351, 8
        %s353 = scalar_lea.vmem %s1, %s352
        %p354 = scmp.lt.s32.totalorder %s26, 1
        %s355 = scalar_select %p354, %s26, 1
        %s356 = smul.addr %s355, 2
        %s357 = smul.addr %s356, 8
        %s358 = scalar_lea.vmem %s2, %s357
        %s359 = smul.u32 2, %s27
        %v360 = vld [vmem:[%s348] sm:$0xff]
        %v361 = vld [vmem:[%s348 + $0x8] sm:$0xf]
        %v362 = vld [vmem:[%s5] ss:$2 sm:$0x3]
        %s363 = scalar_lea.vmem %s5, 1
        %v364 = vld [vmem:[%s363] ss:$2 sm:$0x3]
        %v366 = vlaneseq
        %v367 = vshrl.u32 %v366, 7
        %v368 = vsub.s32 0, %v367
        %v369 = vrot.slane %v362, %v368
        %v370 = vlaneseq
        %v371 = vshrl.u32 %v370, 7
        %v372 = vsub.s32 1, %v371
        %v373 = vrot.slane %v362, %v372
        %v374 = vcombine.low %v369, %v373
        %v376 = vmul.f32 %v360, %v374
        %v377 = vld [vmem:[%s3] sm:$0xff]
        %v378 = vld [vmem:[%s3 + $0x8] sm:$0xff]
        %s379 = scalar_lea.vmem %s3, 16
        %v380 = vld [vmem:[%s379] sm:$0xff]
        %v381 = vld [vmem:[%s379 + $0x8] sm:$0xff]
        %v384 = vcombine.high %v360, %v360
        %385 = vrot.lane.b32.xlu0 %v360, 127
        %v386 = vpop.permute.xlu0 %385
        %387 = vrot.lane.b32.xlu0 %v384, 127
        %v388 = vpop.permute.xlu0 %387
        %389 = vrot.lane.b32.xlu0 %v361, 127
        %v390 = vpop.permute.xlu0 %389
        %vm391 = vcmask 1039360
        %v392 = vsel %vm391, %v386, %v388
        %v393 = vsel %vm391, %v388, %v390
        %vm394 = vcmask 31744
        %v396 = vsel %vm394, %v380, 0
        %v399 = vsel %vm394, %v381, 0
        %vm401 = vcmask 1043456
        %v402 = vsel %vm401, %v392, 0
        %v404 = vsel %vm401, %v393, 0
        %406 = vmatprep.subr.mxu0 %v404
        %407 = vmatpush1.msra.mxu0 %v402
        %408 = vmatprep.subr.mxu0 0.0
        %409 = vmatpush1.msra.mxu0 0.0
        %410 = vmatprep.subr.mxu0 0.0
        %411 = vmatpush1.msra.mxu0 0.0
        %412 = vmatprep.subr.mxu0 0.0
        %413 = vmatpush1.msra.mxu0 0.0
        %414 = vmatprep.subr.mxu0 0.0
        %415 = vmatpush1.msra.mxu0 0.0
        %416 = vmatprep.subr.mxu0 0.0
        %417 = vmatpush1.msra.mxu0 0.0
        %418 = vmatprep.subr.mxu0 0.0
        %419 = vmatpush1.msra.mxu0 0.0
        %420 = vmatprep.subr.mxu0 0.0
        %421 = vmatpush1.msra.mxu0 0.0
        %422 = vmatprep.subr.mxu0 0.0
        %423 = vmatpush1.msra.mxu0 0.0
        %424 = vmatprep.subr.mxu0 0.0
        %425 = vmatpush1.msra.mxu0 0.0
        %426 = vmatprep.subr.mxu0 0.0
        %427 = vmatpush1.msra.mxu0 0.0
        %428 = vmatprep.subr.mxu0 0.0
        %429 = vmatpush1.msra.mxu0 0.0
        %430 = vmatprep.subr.mxu0 0.0
        %431 = vmatpush1.msra.mxu0 0.0
        %432 = vmatprep.subr.mxu0 0.0
        %433 = vmatpush1.msra.mxu0 0.0
        %434 = vmatprep.subr.mxu0 0.0
        %435 = vmatpush1.msra.mxu0 0.0
        %436 = vmatprep.subr.mxu0 0.0
        %437 = vmatpush1.msra.mxu0 0.0
        %438 = vmatprep.subr.mxu0 0.0
        %439 = vmatpush1.msra.mxu0 0.0
        %440 = vmatprep.subr.mxu0 0.0
        %441 = vmatpush1.msra.mxu0 0.0
        %442 = vmatprep.subr.mxu0 0.0
        %443 = vmatpush1.msra.mxu0 0.0
        %444 = vmatprep.subr.mxu0 0.0
        %445 = vmatpush1.msra.mxu0 0.0
        %446 = vmatprep.subr.mxu0 0.0
        %447 = vmatpush1.msra.mxu0 0.0
        %448 = vmatprep.subr.mxu0 0.0
        %449 = vmatpush1.msra.mxu0 0.0
        %450 = vmatprep.subr.mxu0 0.0
        %451 = vmatpush1.msra.mxu0 0.0
        %452 = vmatprep.subr.mxu0 0.0
        %453 = vmatpush1.msra.mxu0 0.0
        %454 = vmatprep.subr.mxu0 0.0
        %455 = vmatpush1.msra.mxu0 0.0
        %456 = vmatprep.subr.mxu0 0.0
        %457 = vmatpush1.msra.mxu0 0.0
        %458 = vmatprep.subr.mxu0 0.0
        %459 = vmatpush1.msra.mxu0 0.0
        %460 = vmatprep.subr.mxu0 0.0
        %461 = vmatpush1.msra.mxu0 0.0
        %462 = vmatprep.subr.mxu0 0.0
        %463 = vmatpush1.msra.mxu0 0.0
        %464 = vmatprep.subr.mxu0 0.0
        %465 = vmatpush1.msra.mxu0 0.0
        %466 = vmatprep.subr.mxu0 0.0
        %467 = vmatpush1.msra.mxu0 0.0
        %468 = vmatprep.subr.mxu0 0.0
        %469 = vmatpush1.msra.mxu0 0.0
        %470 = vmatprep.mubr.f32.mxu0 0.0
        %471 = vmatmul.mubr.f32.gmra.mrb[0].mxu0 %v396
        %v472 = vpop.f32.mrb[0].mxu0
        %v473 = vadd.f32 0.0, %v472
        %v474 = vpop.f32.mrb[0].mxu0
        %v475 = vadd.f32 0.0, %v474
        %476 = vmatprep.mubr.f32.mxu0 0.0
        %477 = vmatmul.mubr.f32.gmra.mrb[0].mxu0 %v399
        %v478 = vpop.f32.mrb[0].mxu0
        %v479 = vadd.f32 0.0, %v478
        %v480 = vpop.f32.mrb[0].mxu0
        %v481 = vadd.f32 0.0, %v480
        %482 = vdwg.mxu0
        %v484 = vcombine.high %v376, %v376
        %v486 = vsel %vm394, %v377, 0
        %v489 = vsel %vm394, %v378, 0
        %v491 = vsel %vm401, %v376, 0
        %v493 = vsel %vm401, %v484, 0
        %495 = vmatprep.subr.mxu0 %v493
        %496 = vmatpush1.msra.mxu0 %v491
        %497 = vmatprep.subr.mxu0 0.0
        %498 = vmatpush1.msra.mxu0 0.0
        %499 = vmatprep.subr.mxu0 0.0
        %500 = vmatpush1.msra.mxu0 0.0
        %501 = vmatprep.subr.mxu0 0.0
        %502 = vmatpush1.msra.mxu0 0.0
        %503 = vmatprep.subr.mxu0 0.0
        %504 = vmatpush1.msra.mxu0 0.0
        %505 = vmatprep.subr.mxu0 0.0
        %506 = vmatpush1.msra.mxu0 0.0
        %507 = vmatprep.subr.mxu0 0.0
        %508 = vmatpush1.msra.mxu0 0.0
        %509 = vmatprep.subr.mxu0 0.0
        %510 = vmatpush1.msra.mxu0 0.0
        %511 = vmatprep.subr.mxu0 0.0
        %512 = vmatpush1.msra.mxu0 0.0
        %513 = vmatprep.subr.mxu0 0.0
        %514 = vmatpush1.msra.mxu0 0.0
        %515 = vmatprep.subr.mxu0 0.0
        %516 = vmatpush1.msra.mxu0 0.0
        %517 = vmatprep.subr.mxu0 0.0
        %518 = vmatpush1.msra.mxu0 0.0
        %519 = vmatprep.subr.mxu0 0.0
        %520 = vmatpush1.msra.mxu0 0.0
        %521 = vmatprep.subr.mxu0 0.0
        %522 = vmatpush1.msra.mxu0 0.0
        %523 = vmatprep.subr.mxu0 0.0
        %524 = vmatpush1.msra.mxu0 0.0
        %525 = vmatprep.subr.mxu0 0.0
        %526 = vmatpush1.msra.mxu0 0.0
        %527 = vmatprep.subr.mxu0 0.0
        %528 = vmatpush1.msra.mxu0 0.0
        %529 = vmatprep.subr.mxu0 0.0
        %530 = vmatpush1.msra.mxu0 0.0
        %531 = vmatprep.subr.mxu0 0.0
        %532 = vmatpush1.msra.mxu0 0.0
        %533 = vmatprep.subr.mxu0 0.0
        %534 = vmatpush1.msra.mxu0 0.0
        %535 = vmatprep.subr.mxu0 0.0
        %536 = vmatpush1.msra.mxu0 0.0
        %537 = vmatprep.subr.mxu0 0.0
        %538 = vmatpush1.msra.mxu0 0.0
        %539 = vmatprep.subr.mxu0 0.0
        %540 = vmatpush1.msra.mxu0 0.0
        %541 = vmatprep.subr.mxu0 0.0
        %542 = vmatpush1.msra.mxu0 0.0
        %543 = vmatprep.subr.mxu0 0.0
        %544 = vmatpush1.msra.mxu0 0.0
        %545 = vmatprep.subr.mxu0 0.0
        %546 = vmatpush1.msra.mxu0 0.0
        %547 = vmatprep.subr.mxu0 0.0
        %548 = vmatpush1.msra.mxu0 0.0
        %549 = vmatprep.subr.mxu0 0.0
        %550 = vmatpush1.msra.mxu0 0.0
        %551 = vmatprep.subr.mxu0 0.0
        %552 = vmatpush1.msra.mxu0 0.0
        %553 = vmatprep.subr.mxu0 0.0
        %554 = vmatpush1.msra.mxu0 0.0
        %555 = vmatprep.subr.mxu0 0.0
        %556 = vmatpush1.msra.mxu0 0.0
        %557 = vmatprep.subr.mxu0 0.0
        %558 = vmatpush1.msra.mxu0 0.0
        %559 = vmatprep.mubr.f32.mxu0 0.0
        %560 = vmatmul.mubr.f32.gmra.mrb[0].mxu0 %v486
        %v561 = vpop.f32.mrb[0].mxu0
        %v562 = vadd.f32 %v473, %v561
        %v563 = vpop.f32.mrb[0].mxu0
        %v564 = vadd.f32 %v475, %v563
        %565 = vmatprep.mubr.f32.mxu0 0.0
        %566 = vmatmul.mubr.f32.gmra.mrb[0].mxu0 %v489
        %v567 = vpop.f32.mrb[0].mxu0
        %v568 = vadd.f32 %v479, %v567
        %v569 = vpop.f32.mrb[0].mxu0
        %v570 = vadd.f32 %v481, %v569
        %571 = vdwg.mxu0
        %v573 = vlaneseq
        %v574 = vshrl.u32 %v573, 7
        %v575 = vsub.s32 0, %v574
        %v576 = vrot.slane %v364, %v575
        %v577 = vlaneseq
        %v578 = vshrl.u32 %v577, 7
        %v579 = vsub.s32 1, %v578
        %v580 = vrot.slane %v364, %v579
        %v581 = vcombine.low %v576, %v580
        %582 = vrot.lane.b32.xlu0 %v581, 2
        %v583 = vpop.permute.xlu0 %582
        %v584 = vrot.slane %v583, 4
        %vm585 = vcmask 15360
        %v586 = vsel %vm585, %v584, %v583
        %v589 = vmul.f32 %v360, %v586
        %v590 = vmul.f32 %v361, %v584
        %s591 = scalar_lea.vmem %s3, 32
        %v592 = vld [vmem:[%s591] sm:$0xff]
        %v593 = vld [vmem:[%s591 + $0x8] sm:$0xff]
        %v596 = vcombine.high %v589, %v589
        %597 = vrot.lane.b32.xlu0 %v589, 126
        %v598 = vpop.permute.xlu0 %597
        %599 = vrot.lane.b32.xlu0 %v596, 126
        %v600 = vpop.permute.xlu0 %599
        %601 = vrot.lane.b32.xlu0 %v590, 126
        %v602 = vpop.permute.xlu0 %601
        %vm603 = vcmask 1031168
        %v604 = vsel %vm603, %v598, %v600
        %v605 = vsel %vm603, %v600, %v602
        %v607 = vsel %vm394, %v592, 0
        %v610 = vsel %vm394, %v593, 0
        %v612 = vsel %vm401, %v604, 0
        %v614 = vsel %vm401, %v605, 0
        %616 = vmatprep.subr.mxu0 %v614
        %617 = vmatpush1.msra.mxu0 %v612
        %618 = vmatprep.subr.mxu0 0.0
        %619 = vmatpush1.msra.mxu0 0.0
        %620 = vmatprep.subr.mxu0 0.0
        %621 = vmatpush1.msra.mxu0 0.0
        %622 = vmatprep.subr.mxu0 0.0
        %623 = vmatpush1.msra.mxu0 0.0
        %624 = vmatprep.subr.mxu0 0.0
        %625 = vmatpush1.msra.mxu0 0.0
        %626 = vmatprep.subr.mxu0 0.0
        %627 = vmatpush1.msra.mxu0 0.0
        %628 = vmatprep.subr.mxu0 0.0
        %629 = vmatpush1.msra.mxu0 0.0
        %630 = vmatprep.subr.mxu0 0.0
        %631 = vmatpush1.msra.mxu0 0.0
        %632 = vmatprep.subr.mxu0 0.0
        %633 = vmatpush1.msra.mxu0 0.0
        %634 = vmatprep.subr.mxu0 0.0
        %635 = vmatpush1.msra.mxu0 0.0
        %636 = vmatprep.subr.mxu0 0.0
        %637 = vmatpush1.msra.mxu0 0.0
        %638 = vmatprep.subr.mxu0 0.0
        %639 = vmatpush1.msra.mxu0 0.0
        %640 = vmatprep.subr.mxu0 0.0
        %641 = vmatpush1.msra.mxu0 0.0
        %642 = vmatprep.subr.mxu0 0.0
        %643 = vmatpush1.msra.mxu0 0.0
        %644 = vmatprep.subr.mxu0 0.0
        %645 = vmatpush1.msra.mxu0 0.0
        %646 = vmatprep.subr.mxu0 0.0
        %647 = vmatpush1.msra.mxu0 0.0
        %648 = vmatprep.subr.mxu0 0.0
        %649 = vmatpush1.msra.mxu0 0.0
        %650 = vmatprep.subr.mxu0 0.0
        %651 = vmatpush1.msra.mxu0 0.0
        %652 = vmatprep.subr.mxu0 0.0
        %653 = vmatpush1.msra.mxu0 0.0
        %654 = vmatprep.subr.mxu0 0.0
        %655 = vmatpush1.msra.mxu0 0.0
        %656 = vmatprep.subr.mxu0 0.0
        %657 = vmatpush1.msra.mxu0 0.0
        %658 = vmatprep.subr.mxu0 0.0
        %659 = vmatpush1.msra.mxu0 0.0
        %660 = vmatprep.subr.mxu0 0.0
        %661 = vmatpush1.msra.mxu0 0.0
        %662 = vmatprep.subr.mxu0 0.0
        %663 = vmatpush1.msra.mxu0 0.0
        %664 = vmatprep.subr.mxu0 0.0
        %665 = vmatpush1.msra.mxu0 0.0
        %666 = vmatprep.subr.mxu0 0.0
        %667 = vmatpush1.msra.mxu0 0.0
        %668 = vmatprep.subr.mxu0 0.0
        %669 = vmatpush1.msra.mxu0 0.0
        %670 = vmatprep.subr.mxu0 0.0
        %671 = vmatpush1.msra.mxu0 0.0
        %672 = vmatprep.subr.mxu0 0.0
        %673 = vmatpush1.msra.mxu0 0.0
        %674 = vmatprep.subr.mxu0 0.0
        %675 = vmatpush1.msra.mxu0 0.0
        %676 = vmatprep.subr.mxu0 0.0
        %677 = vmatpush1.msra.mxu0 0.0
        %678 = vmatprep.subr.mxu0 0.0
        %679 = vmatpush1.msra.mxu0 0.0
        %680 = vmatprep.mubr.f32.mxu0 0.0
        %681 = vmatmul.mubr.f32.gmra.mrb[0].mxu0 %v607
        %v682 = vpop.f32.mrb[0].mxu0
        %v683 = vadd.f32 0.0, %v682
        %v684 = vpop.f32.mrb[0].mxu0
        %v685 = vadd.f32 0.0, %v684
        %686 = vmatprep.mubr.f32.mxu0 0.0
        %687 = vmatmul.mubr.f32.gmra.mrb[0].mxu0 %v610
        %v688 = vpop.f32.mrb[0].mxu0
        %v689 = vadd.f32 0.0, %v688
        %v690 = vpop.f32.mrb[0].mxu0
        %v691 = vadd.f32 0.0, %v690
        %692 = vdwg.mxu0
        %v693 = vadd.f32 %v562, %v683
        %v694 = vadd.f32 %v564, %v685
        %v695 = vadd.f32 %v568, %v689
        %v696 = vadd.f32 %v570, %v691
        %697 = vrot.lane.b32.xlu0 %v374, 16
        %v698 = vpop.permute.xlu0 %697
        %v699 = vrot.slane %v698, 4
        %vm700 = vcmask 130048
        %v701 = vsel %vm700, %v699, %v698
        %v704 = vmul.f32 %v360, %v701
        %v705 = vmul.f32 %v361, %v699
        %s706 = scalar_lea.vmem %s3, 48
        %v707 = vld [vmem:[%s706] sm:$0xff]
        %v708 = vld [vmem:[%s706 + $0x8] sm:$0xff]
        %v711 = vcombine.high %v704, %v704
        %712 = vrot.lane.b32.xlu0 %v704, 112
        %v713 = vpop.permute.xlu0 %712
        %714 = vrot.lane.b32.xlu0 %v711, 112
        %v715 = vpop.permute.xlu0 %714
        %716 = vrot.lane.b32.xlu0 %v705, 112
        %v717 = vpop.permute.xlu0 %716
        %vm718 = vcmask 916480
        %v719 = vsel %vm718, %v713, %v715
        %v720 = vsel %vm718, %v715, %v717
        %v722 = vsel %vm394, %v707, 0
        %v725 = vsel %vm394, %v708, 0
        %v727 = vsel %vm401, %v719, 0
        %v729 = vsel %vm401, %v720, 0
        %731 = vmatprep.subr.mxu0 %v729
        %732 = vmatpush1.msra.mxu0 %v727
        %733 = vmatprep.subr.mxu0 0.0
        %734 = vmatpush1.msra.mxu0 0.0
        %735 = vmatprep.subr.mxu0 0.0
        %736 = vmatpush1.msra.mxu0 0.0
        %737 = vmatprep.subr.mxu0 0.0
        %738 = vmatpush1.msra.mxu0 0.0
        %739 = vmatprep.subr.mxu0 0.0
        %740 = vmatpush1.msra.mxu0 0.0
        %741 = vmatprep.subr.mxu0 0.0
        %742 = vmatpush1.msra.mxu0 0.0
        %743 = vmatprep.subr.mxu0 0.0
        %744 = vmatpush1.msra.mxu0 0.0
        %745 = vmatprep.subr.mxu0 0.0
        %746 = vmatpush1.msra.mxu0 0.0
        %747 = vmatprep.subr.mxu0 0.0
        %748 = vmatpush1.msra.mxu0 0.0
        %749 = vmatprep.subr.mxu0 0.0
        %750 = vmatpush1.msra.mxu0 0.0
        %751 = vmatprep.subr.mxu0 0.0
        %752 = vmatpush1.msra.mxu0 0.0
        %753 = vmatprep.subr.mxu0 0.0
        %754 = vmatpush1.msra.mxu0 0.0
        %755 = vmatprep.subr.mxu0 0.0
        %756 = vmatpush1.msra.mxu0 0.0
        %757 = vmatprep.subr.mxu0 0.0
        %758 = vmatpush1.msra.mxu0 0.0
        %759 = vmatprep.subr.mxu0 0.0
        %760 = vmatpush1.msra.mxu0 0.0
        %761 = vmatprep.subr.mxu0 0.0
        %762 = vmatpush1.msra.mxu0 0.0
        %763 = vmatprep.subr.mxu0 0.0
        %764 = vmatpush1.msra.mxu0 0.0
        %765 = vmatprep.subr.mxu0 0.0
        %766 = vmatpush1.msra.mxu0 0.0
        %767 = vmatprep.subr.mxu0 0.0
        %768 = vmatpush1.msra.mxu0 0.0
        %769 = vmatprep.subr.mxu0 0.0
        %770 = vmatpush1.msra.mxu0 0.0
        %771 = vmatprep.subr.mxu0 0.0
        %772 = vmatpush1.msra.mxu0 0.0
        %773 = vmatprep.subr.mxu0 0.0
        %774 = vmatpush1.msra.mxu0 0.0
        %775 = vmatprep.subr.mxu0 0.0
        %776 = vmatpush1.msra.mxu0 0.0
        %777 = vmatprep.subr.mxu0 0.0
        %778 = vmatpush1.msra.mxu0 0.0
        %779 = vmatprep.subr.mxu0 0.0
        %780 = vmatpush1.msra.mxu0 0.0
        %781 = vmatprep.subr.mxu0 0.0
        %782 = vmatpush1.msra.mxu0 0.0
        %783 = vmatprep.subr.mxu0 0.0
        %784 = vmatpush1.msra.mxu0 0.0
        %785 = vmatprep.subr.mxu0 0.0
        %786 = vmatpush1.msra.mxu0 0.0
        %787 = vmatprep.subr.mxu0 0.0
        %788 = vmatpush1.msra.mxu0 0.0
        %789 = vmatprep.subr.mxu0 0.0
        %790 = vmatpush1.msra.mxu0 0.0
        %791 = vmatprep.subr.mxu0 0.0
        %792 = vmatpush1.msra.mxu0 0.0
        %793 = vmatprep.subr.mxu0 0.0
        %794 = vmatpush1.msra.mxu0 0.0
        %795 = vmatprep.mubr.f32.mxu0 0.0
        %796 = vmatmul.mubr.f32.gmra.mrb[0].mxu0 %v722
        %v797 = vpop.f32.mrb[0].mxu0
        %v798 = vadd.f32 0.0, %v797
        %v799 = vpop.f32.mrb[0].mxu0
        %v800 = vadd.f32 0.0, %v799
        %801 = vmatprep.mubr.f32.mxu0 0.0
        %802 = vmatmul.mubr.f32.gmra.mrb[0].mxu0 %v725
        %v803 = vpop.f32.mrb[0].mxu0
        %v804 = vadd.f32 0.0, %v803
        %v805 = vpop.f32.mrb[0].mxu0
        %v806 = vadd.f32 0.0, %v805
        %807 = vdwg.mxu0
        %v808 = vadd.f32 %v693, %v798
        %v809 = vadd.f32 %v694, %v800
        %v810 = vadd.f32 %v695, %v804
        %v811 = vadd.f32 %v696, %v806
        %s812 = scalar_lea.vmem %s3, 64
        %v813 = vld [vmem:[%s812] sm:$0xff]
        %v814 = vld [vmem:[%s812 + $0x8] sm:$0xff]
        %815 = vrot.lane.b32.xlu0 %v360, 111
        %v816 = vpop.permute.xlu0 %815
        %817 = vrot.lane.b32.xlu0 %v384, 111
        %v818 = vpop.permute.xlu0 %817
        %819 = vrot.lane.b32.xlu0 %v361, 111
        %v820 = vpop.permute.xlu0 %819
        %vm821 = vcmask 908288
        %v822 = vsel %vm821, %v816, %v818
        %v823 = vsel %vm821, %v818, %v820
        %v825 = vsel %vm394, %v813, 0
        %v828 = vsel %vm394, %v814, 0
        %v830 = vsel %vm401, %v822, 0
        %v832 = vsel %vm401, %v823, 0
        %834 = vmatprep.subr.mxu0 %v832
        %835 = vmatpush1.msra.mxu0 %v830
        %836 = vmatprep.subr.mxu0 0.0
        %837 = vmatpush1.msra.mxu0 0.0
        %838 = vmatprep.subr.mxu0 0.0
        %839 = vmatpush1.msra.mxu0 0.0
        %840 = vmatprep.subr.mxu0 0.0
        %841 = vmatpush1.msra.mxu0 0.0
        %842 = vmatprep.subr.mxu0 0.0
        %843 = vmatpush1.msra.mxu0 0.0
        %844 = vmatprep.subr.mxu0 0.0
        %845 = vmatpush1.msra.mxu0 0.0
        %846 = vmatprep.subr.mxu0 0.0
        %847 = vmatpush1.msra.mxu0 0.0
        %848 = vmatprep.subr.mxu0 0.0
        %849 = vmatpush1.msra.mxu0 0.0
        %850 = vmatprep.subr.mxu0 0.0
        %851 = vmatpush1.msra.mxu0 0.0
        %852 = vmatprep.subr.mxu0 0.0
        %853 = vmatpush1.msra.mxu0 0.0
        %854 = vmatprep.subr.mxu0 0.0
        %855 = vmatpush1.msra.mxu0 0.0
        %856 = vmatprep.subr.mxu0 0.0
        %857 = vmatpush1.msra.mxu0 0.0
        %858 = vmatprep.subr.mxu0 0.0
        %859 = vmatpush1.msra.mxu0 0.0
        %860 = vmatprep.subr.mxu0 0.0
        %861 = vmatpush1.msra.mxu0 0.0
        %862 = vmatprep.subr.mxu0 0.0
        %863 = vmatpush1.msra.mxu0 0.0
        %864 = vmatprep.subr.mxu0 0.0
        %865 = vmatpush1.msra.mxu0 0.0
        %866 = vmatprep.subr.mxu0 0.0
        %867 = vmatpush1.msra.mxu0 0.0
        %868 = vmatprep.subr.mxu0 0.0
        %869 = vmatpush1.msra.mxu0 0.0
        %870 = vmatprep.subr.mxu0 0.0
        %871 = vmatpush1.msra.mxu0 0.0
        %872 = vmatprep.subr.mxu0 0.0
        %873 = vmatpush1.msra.mxu0 0.0
        %874 = vmatprep.subr.mxu0 0.0
        %875 = vmatpush1.msra.mxu0 0.0
        %876 = vmatprep.subr.mxu0 0.0
        %877 = vmatpush1.msra.mxu0 0.0
        %878 = vmatprep.subr.mxu0 0.0
        %879 = vmatpush1.msra.mxu0 0.0
        %880 = vmatprep.subr.mxu0 0.0
        %881 = vmatpush1.msra.mxu0 0.0
        %882 = vmatprep.subr.mxu0 0.0
        %883 = vmatpush1.msra.mxu0 0.0
        %884 = vmatprep.subr.mxu0 0.0
        %885 = vmatpush1.msra.mxu0 0.0
        %886 = vmatprep.subr.mxu0 0.0
        %887 = vmatpush1.msra.mxu0 0.0
        %888 = vmatprep.subr.mxu0 0.0
        %889 = vmatpush1.msra.mxu0 0.0
        %890 = vmatprep.subr.mxu0 0.0
        %891 = vmatpush1.msra.mxu0 0.0
        %892 = vmatprep.subr.mxu0 0.0
        %893 = vmatpush1.msra.mxu0 0.0
        %894 = vmatprep.subr.mxu0 0.0
        %895 = vmatpush1.msra.mxu0 0.0
        %896 = vmatprep.subr.mxu0 0.0
        %897 = vmatpush1.msra.mxu0 0.0
        %898 = vmatprep.mubr.f32.mxu0 0.0
        %899 = vmatmul.mubr.f32.gmra.mrb[0].mxu0 %v825
        %v900 = vpop.f32.mrb[0].mxu0
        %v901 = vadd.f32 0.0, %v900
        %v902 = vpop.f32.mrb[0].mxu0
        %v903 = vadd.f32 0.0, %v902
        %904 = vmatprep.mubr.f32.mxu0 0.0
        %905 = vmatmul.mubr.f32.gmra.mrb[0].mxu0 %v828
        %v906 = vpop.f32.mrb[0].mxu0
        %v907 = vadd.f32 0.0, %v906
        %v908 = vpop.f32.mrb[0].mxu0
        %v909 = vadd.f32 0.0, %v908
        %910 = vdwg.mxu0
        %v911 = vadd.f32 %v808, %v901
        %v912 = vadd.f32 %v809, %v903
        %v913 = vadd.f32 %v810, %v907
        %v914 = vadd.f32 %v811, %v909
        %915 = vrot.lane.b32.xlu0 %v581, 18
        %v916 = vpop.permute.xlu0 %915
        %v917 = vrot.slane %v916, 4
        %vm918 = vcmask 146432
        %v919 = vsel %vm918, %v917, %v916
        %v922 = vmul.f32 %v360, %v919
        %v923 = vmul.f32 %v361, %v917
        %s924 = scalar_lea.vmem %s3, 80
        %v925 = vld [vmem:[%s924] sm:$0xff]
        %v926 = vld [vmem:[%s924 + $0x8] sm:$0xff]
        %v929 = vcombine.high %v922, %v922
        %930 = vrot.lane.b32.xlu0 %v922, 110
        %v931 = vpop.permute.xlu0 %930
        %932 = vrot.lane.b32.xlu0 %v929, 110
        %v933 = vpop.permute.xlu0 %932
        %934 = vrot.lane.b32.xlu0 %v923, 110
        %v935 = vpop.permute.xlu0 %934
        %vm936 = vcmask 900096
        %v937 = vsel %vm936, %v931, %v933
        %v938 = vsel %vm936, %v933, %v935
        %v940 = vsel %vm394, %v925, 0
        %v943 = vsel %vm394, %v926, 0
        %v945 = vsel %vm401, %v937, 0
        %v947 = vsel %vm401, %v938, 0
        %949 = vmatprep.subr.mxu0 %v947
        %950 = vmatpush1.msra.mxu0 %v945
        %951 = vmatprep.subr.mxu0 0.0
        %952 = vmatpush1.msra.mxu0 0.0
        %953 = vmatprep.subr.mxu0 0.0
        %954 = vmatpush1.msra.mxu0 0.0
        %955 = vmatprep.subr.mxu0 0.0
        %956 = vmatpush1.msra.mxu0 0.0
        %957 = vmatprep.subr.mxu0 0.0
        %958 = vmatpush1.msra.mxu0 0.0
        %959 = vmatprep.subr.mxu0 0.0
        %960 = vmatpush1.msra.mxu0 0.0
        %961 = vmatprep.subr.mxu0 0.0
        %962 = vmatpush1.msra.mxu0 0.0
        %963 = vmatprep.subr.mxu0 0.0
        %964 = vmatpush1.msra.mxu0 0.0
        %965 = vmatprep.subr.mxu0 0.0
        %966 = vmatpush1.msra.mxu0 0.0
        %967 = vmatprep.subr.mxu0 0.0
        %968 = vmatpush1.msra.mxu0 0.0
        %969 = vmatprep.subr.mxu0 0.0
        %970 = vmatpush1.msra.mxu0 0.0
        %971 = vmatprep.subr.mxu0 0.0
        %972 = vmatpush1.msra.mxu0 0.0
        %973 = vmatprep.subr.mxu0 0.0
        %974 = vmatpush1.msra.mxu0 0.0
        %975 = vmatprep.subr.mxu0 0.0
        %976 = vmatpush1.msra.mxu0 0.0
        %977 = vmatprep.subr.mxu0 0.0
        %978 = vmatpush1.msra.mxu0 0.0
        %979 = vmatprep.subr.mxu0 0.0
        %980 = vmatpush1.msra.mxu0 0.0
        %981 = vmatprep.subr.mxu0 0.0
        %982 = vmatpush1.msra.mxu0 0.0
        %983 = vmatprep.subr.mxu0 0.0
        %984 = vmatpush1.msra.mxu0 0.0
        %985 = vmatprep.subr.mxu0 0.0
        %986 = vmatpush1.msra.mxu0 0.0
        %987 = vmatprep.subr.mxu0 0.0
        %988 = vmatpush1.msra.mxu0 0.0
        %989 = vmatprep.subr.mxu0 0.0
        %990 = vmatpush1.msra.mxu0 0.0
        %991 = vmatprep.subr.mxu0 0.0
        %992 = vmatpush1.msra.mxu0 0.0
        %993 = vmatprep.subr.mxu0 0.0
        %994 = vmatpush1.msra.mxu0 0.0
        %995 = vmatprep.subr.mxu0 0.0
        %996 = vmatpush1.msra.mxu0 0.0
        %997 = vmatprep.subr.mxu0 0.0
        %998 = vmatpush1.msra.mxu0 0.0
        %999 = vmatprep.subr.mxu0 0.0
        %1000 = vmatpush1.msra.mxu0 0.0
        %1001 = vmatprep.subr.mxu0 0.0
        %1002 = vmatpush1.msra.mxu0 0.0
        %1003 = vmatprep.subr.mxu0 0.0
        %1004 = vmatpush1.msra.mxu0 0.0
        %1005 = vmatprep.subr.mxu0 0.0
        %1006 = vmatpush1.msra.mxu0 0.0
        %1007 = vmatprep.subr.mxu0 0.0
        %1008 = vmatpush1.msra.mxu0 0.0
        %1009 = vmatprep.subr.mxu0 0.0
        %1010 = vmatpush1.msra.mxu0 0.0
        %1011 = vmatprep.subr.mxu0 0.0
        %1012 = vmatpush1.msra.mxu0 0.0
        %1013 = vmatprep.mubr.f32.mxu0 0.0
        %1014 = vmatmul.mubr.f32.gmra.mrb[0].mxu0 %v940
        %v1015 = vpop.f32.mrb[0].mxu0
        %v1016 = vadd.f32 0.0, %v1015
        %v1017 = vpop.f32.mrb[0].mxu0
        %v1018 = vadd.f32 0.0, %v1017
        %1019 = vmatprep.mubr.f32.mxu0 0.0
        %1020 = vmatmul.mubr.f32.gmra.mrb[0].mxu0 %v943
        %v1021 = vpop.f32.mrb[0].mxu0
        %v1022 = vadd.f32 0.0, %v1021
        %v1023 = vpop.f32.mrb[0].mxu0
        %v1024 = vadd.f32 0.0, %v1023
        %1025 = vdwg.mxu0
        %v1026 = vadd.f32 %v911, %v1016
        %v1027 = vadd.f32 %v912, %v1018
        %v1028 = vadd.f32 %v913, %v1022
        %v1029 = vadd.f32 %v914, %v1024
        %1030 = vrot.lane.b32.xlu0 %v374, 32
        %v1031 = vpop.permute.xlu0 %1030
        %v1032 = vrot.slane %v1031, 4
        %vm1033 = vcmask 261120
        %v1034 = vsel %vm1033, %v1032, %v1031
        %v1037 = vmul.f32 %v360, %v1034
        %v1038 = vmul.f32 %v361, %v1032
        %s1039 = scalar_lea.vmem %s3, 96
        %v1040 = vld [vmem:[%s1039] sm:$0xff]
        %v1041 = vld [vmem:[%s1039 + $0x8] sm:$0xff]
        %v1044 = vcombine.high %v1037, %v1037
        %1045 = vrot.lane.b32.xlu0 %v1037, 96
        %v1046 = vpop.permute.xlu0 %1045
        %1047 = vrot.lane.b32.xlu0 %v1044, 96
        %v1048 = vpop.permute.xlu0 %1047
        %1049 = vrot.lane.b32.xlu0 %v1038, 96
        %v1050 = vpop.permute.xlu0 %1049
        %vm1051 = vcmask 785408
        %v1052 = vsel %vm1051, %v1046, %v1048
        %v1053 = vsel %vm1051, %v1048, %v1050
        %v1055 = vsel %vm394, %v1040, 0
        %v1058 = vsel %vm394, %v1041, 0
        %v1060 = vsel %vm401, %v1052, 0
        %v1062 = vsel %vm401, %v1053, 0
        %1064 = vmatprep.subr.mxu0 %v1062
        %1065 = vmatpush1.msra.mxu0 %v1060
        %1066 = vmatprep.subr.mxu0 0.0
        %1067 = vmatpush1.msra.mxu0 0.0
        %1068 = vmatprep.subr.mxu0 0.0
        %1069 = vmatpush1.msra.mxu0 0.0
        %1070 = vmatprep.subr.mxu0 0.0
        %1071 = vmatpush1.msra.mxu0 0.0
        %1072 = vmatprep.subr.mxu0 0.0
        %1073 = vmatpush1.msra.mxu0 0.0
        %1074 = vmatprep.subr.mxu0 0.0
        %1075 = vmatpush1.msra.mxu0 0.0
        %1076 = vmatprep.subr.mxu0 0.0
        %1077 = vmatpush1.msra.mxu0 0.0
        %1078 = vmatprep.subr.mxu0 0.0
        %1079 = vmatpush1.msra.mxu0 0.0
        %1080 = vmatprep.subr.mxu0 0.0
        %1081 = vmatpush1.msra.mxu0 0.0
        %1082 = vmatprep.subr.mxu0 0.0
        %1083 = vmatpush1.msra.mxu0 0.0
        %1084 = vmatprep.subr.mxu0 0.0
        %1085 = vmatpush1.msra.mxu0 0.0
        %1086 = vmatprep.subr.mxu0 0.0
        %1087 = vmatpush1.msra.mxu0 0.0
        %1088 = vmatprep.subr.mxu0 0.0
        %1089 = vmatpush1.msra.mxu0 0.0
        %1090 = vmatprep.subr.mxu0 0.0
        %1091 = vmatpush1.msra.mxu0 0.0
        %1092 = vmatprep.subr.mxu0 0.0
        %1093 = vmatpush1.msra.mxu0 0.0
        %1094 = vmatprep.subr.mxu0 0.0
        %1095 = vmatpush1.msra.mxu0 0.0
        %1096 = vmatprep.subr.mxu0 0.0
        %1097 = vmatpush1.msra.mxu0 0.0
        %1098 = vmatprep.subr.mxu0 0.0
        %1099 = vmatpush1.msra.mxu0 0.0
        %1100 = vmatprep.subr.mxu0 0.0
        %1101 = vmatpush1.msra.mxu0 0.0
        %1102 = vmatprep.subr.mxu0 0.0
        %1103 = vmatpush1.msra.mxu0 0.0
        %1104 = vmatprep.subr.mxu0 0.0
        %1105 = vmatpush1.msra.mxu0 0.0
        %1106 = vmatprep.subr.mxu0 0.0
        %1107 = vmatpush1.msra.mxu0 0.0
        %1108 = vmatprep.subr.mxu0 0.0
        %1109 = vmatpush1.msra.mxu0 0.0
        %1110 = vmatprep.subr.mxu0 0.0
        %1111 = vmatpush1.msra.mxu0 0.0
        %1112 = vmatprep.subr.mxu0 0.0
        %1113 = vmatpush1.msra.mxu0 0.0
        %1114 = vmatprep.subr.mxu0 0.0
        %1115 = vmatpush1.msra.mxu0 0.0
        %1116 = vmatprep.subr.mxu0 0.0
        %1117 = vmatpush1.msra.mxu0 0.0
        %1118 = vmatprep.subr.mxu0 0.0
        %1119 = vmatpush1.msra.mxu0 0.0
        %1120 = vmatprep.subr.mxu0 0.0
        %1121 = vmatpush1.msra.mxu0 0.0
        %1122 = vmatprep.subr.mxu0 0.0
        %1123 = vmatpush1.msra.mxu0 0.0
        %1124 = vmatprep.subr.mxu0 0.0
        %1125 = vmatpush1.msra.mxu0 0.0
        %1126 = vmatprep.subr.mxu0 0.0
        %1127 = vmatpush1.msra.mxu0 0.0
        %1128 = vmatprep.mubr.f32.mxu0 0.0
        %1129 = vmatmul.mubr.f32.gmra.mrb[0].mxu0 %v1055
        %v1130 = vpop.f32.mrb[0].mxu0
        %v1131 = vadd.f32 0.0, %v1130
        %v1132 = vpop.f32.mrb[0].mxu0
        %v1133 = vadd.f32 0.0, %v1132
        %1134 = vmatprep.mubr.f32.mxu0 0.0
        %1135 = vmatmul.mubr.f32.gmra.mrb[0].mxu0 %v1058
        %v1136 = vpop.f32.mrb[0].mxu0
        %v1137 = vadd.f32 0.0, %v1136
        %v1138 = vpop.f32.mrb[0].mxu0
        %v1139 = vadd.f32 0.0, %v1138
        %1140 = vdwg.mxu0
        %v1141 = vadd.f32 %v1026, %v1131
        %v1142 = vadd.f32 %v1027, %v1133
        %v1143 = vadd.f32 %v1028, %v1137
        %v1144 = vadd.f32 %v1029, %v1139
        %s1145 = scalar_lea.vmem %s3, 112
        %v1146 = vld [vmem:[%s1145] sm:$0xff]
        %v1147 = vld [vmem:[%s1145 + $0x8] sm:$0xff]
        %1148 = vrot.lane.b32.xlu0 %v360, 95
        %v1149 = vpop.permute.xlu0 %1148
        %1150 = vrot.lane.b32.xlu0 %v384, 95
        %v1151 = vpop.permute.xlu0 %1150
        %1152 = vrot.lane.b32.xlu0 %v361, 95
        %v1153 = vpop.permute.xlu0 %1152
        %vm1154 = vcmask 777216
        %v1155 = vsel %vm1154, %v1149, %v1151
        %v1156 = vsel %vm1154, %v1151, %v1153
        %v1158 = vsel %vm394, %v1146, 0
        %v1161 = vsel %vm394, %v1147, 0
        %v1163 = vsel %vm401, %v1155, 0
        %v1165 = vsel %vm401, %v1156, 0
        %1167 = vmatprep.subr.mxu0 %v1165
        %1168 = vmatpush1.msra.mxu0 %v1163
        %1169 = vmatprep.subr.mxu0 0.0
        %1170 = vmatpush1.msra.mxu0 0.0
        %1171 = vmatprep.subr.mxu0 0.0
        %1172 = vmatpush1.msra.mxu0 0.0
        %1173 = vmatprep.subr.mxu0 0.0
        %1174 = vmatpush1.msra.mxu0 0.0
        %1175 = vmatprep.subr.mxu0 0.0
        %1176 = vmatpush1.msra.mxu0 0.0
        %1177 = vmatprep.subr.mxu0 0.0
        %1178 = vmatpush1.msra.mxu0 0.0
        %1179 = vmatprep.subr.mxu0 0.0
        %1180 = vmatpush1.msra.mxu0 0.0
        %1181 = vmatprep.subr.mxu0 0.0
        %1182 = vmatpush1.msra.mxu0 0.0
        %1183 = vmatprep.subr.mxu0 0.0
        %1184 = vmatpush1.msra.mxu0 0.0
        %1185 = vmatprep.subr.mxu0 0.0
        %1186 = vmatpush1.msra.mxu0 0.0
        %1187 = vmatprep.subr.mxu0 0.0
        %1188 = vmatpush1.msra.mxu0 0.0
        %1189 = vmatprep.subr.mxu0 0.0
        %1190 = vmatpush1.msra.mxu0 0.0
        %1191 = vmatprep.subr.mxu0 0.0
        %1192 = vmatpush1.msra.mxu0 0.0
        %1193 = vmatprep.subr.mxu0 0.0
        %1194 = vmatpush1.msra.mxu0 0.0
        %1195 = vmatprep.subr.mxu0 0.0
        %1196 = vmatpush1.msra.mxu0 0.0
        %1197 = vmatprep.subr.mxu0 0.0
        %1198 = vmatpush1.msra.mxu0 0.0
        %1199 = vmatprep.subr.mxu0 0.0
        %1200 = vmatpush1.msra.mxu0 0.0
        %1201 = vmatprep.subr.mxu0 0.0
        %1202 = vmatpush1.msra.mxu0 0.0
        %1203 = vmatprep.subr.mxu0 0.0
        %1204 = vmatpush1.msra.mxu0 0.0
        %1205 = vmatprep.subr.mxu0 0.0
        %1206 = vmatpush1.msra.mxu0 0.0
        %1207 = vmatprep.subr.mxu0 0.0
        %1208 = vmatpush1.msra.mxu0 0.0
        %1209 = vmatprep.subr.mxu0 0.0
        %1210 = vmatpush1.msra.mxu0 0.0
        %1211 = vmatprep.subr.mxu0 0.0
        %1212 = vmatpush1.msra.mxu0 0.0
        %1213 = vmatprep.subr.mxu0 0.0
        %1214 = vmatpush1.msra.mxu0 0.0
        %1215 = vmatprep.subr.mxu0 0.0
        %1216 = vmatpush1.msra.mxu0 0.0
        %1217 = vmatprep.subr.mxu0 0.0
        %1218 = vmatpush1.msra.mxu0 0.0
        %1219 = vmatprep.subr.mxu0 0.0
        %1220 = vmatpush1.msra.mxu0 0.0
        %1221 = vmatprep.subr.mxu0 0.0
        %1222 = vmatpush1.msra.mxu0 0.0
        %1223 = vmatprep.subr.mxu0 0.0
        %1224 = vmatpush1.msra.mxu0 0.0
        %1225 = vmatprep.subr.mxu0 0.0
        %1226 = vmatpush1.msra.mxu0 0.0
        %1227 = vmatprep.subr.mxu0 0.0
        %1228 = vmatpush1.msra.mxu0 0.0
        %1229 = vmatprep.subr.mxu0 0.0
        %1230 = vmatpush1.msra.mxu0 0.0
        %1231 = vmatprep.mubr.f32.mxu0 0.0
        %1232 = vmatmul.mubr.f32.gmra.mrb[0].mxu0 %v1158
        %v1233 = vpop.f32.mrb[0].mxu0
        %v1234 = vadd.f32 0.0, %v1233
        %v1235 = vpop.f32.mrb[0].mxu0
        %v1236 = vadd.f32 0.0, %v1235
        %1237 = vmatprep.mubr.f32.mxu0 0.0
        %1238 = vmatmul.mubr.f32.gmra.mrb[0].mxu0 %v1161
        %v1239 = vpop.f32.mrb[0].mxu0
        %v1240 = vadd.f32 0.0, %v1239
        %v1241 = vpop.f32.mrb[0].mxu0
        %v1242 = vadd.f32 0.0, %v1241
        %1243 = vdwg.mxu0
        %v1244 = vadd.f32 %v1141, %v1234
        %v1245 = vadd.f32 %v1142, %v1236
        %v1246 = vadd.f32 %v1143, %v1240
        %v1247 = vadd.f32 %v1144, %v1242
        %1248 = vrot.lane.b32.xlu0 %v581, 34
        %v1249 = vpop.permute.xlu0 %1248
        %v1250 = vrot.slane %v1249, 4
        %vm1251 = vcmask 277504
        %v1252 = vsel %vm1251, %v1250, %v1249
        %v1255 = vmul.f32 %v360, %v1252
        %v1256 = vmul.f32 %v361, %v1250
        %s1257 = scalar_lea.vmem %s3, 128
        %v1258 = vld [vmem:[%s1257] sm:$0xff]
        %v1259 = vld [vmem:[%s1257 + $0x8] sm:$0xff]
        %v1262 = vcombine.high %v1255, %v1255
        %1263 = vrot.lane.b32.xlu0 %v1255, 94
        %v1264 = vpop.permute.xlu0 %1263
        %1265 = vrot.lane.b32.xlu0 %v1262, 94
        %v1266 = vpop.permute.xlu0 %1265
        %1267 = vrot.lane.b32.xlu0 %v1256, 94
        %v1268 = vpop.permute.xlu0 %1267
        %vm1269 = vcmask 769024
        %v1270 = vsel %vm1269, %v1264, %v1266
        %v1271 = vsel %vm1269, %v1266, %v1268
        %v1273 = vsel %vm394, %v1258, 0
        %v1276 = vsel %vm394, %v1259, 0
        %v1278 = vsel %vm401, %v1270, 0
        %v1280 = vsel %vm401, %v1271, 0
        %1282 = vmatprep.subr.mxu0 %v1280
        %1283 = vmatpush1.msra.mxu0 %v1278
        %1284 = vmatprep.subr.mxu0 0.0
        %1285 = vmatpush1.msra.mxu0 0.0
        %1286 = vmatprep.subr.mxu0 0.0
        %1287 = vmatpush1.msra.mxu0 0.0
        %1288 = vmatprep.subr.mxu0 0.0
        %1289 = vmatpush1.msra.mxu0 0.0
        %1290 = vmatprep.subr.mxu0 0.0
        %1291 = vmatpush1.msra.mxu0 0.0
        %1292 = vmatprep.subr.mxu0 0.0
        %1293 = vmatpush1.msra.mxu0 0.0
        %1294 = vmatprep.subr.mxu0 0.0
        %1295 = vmatpush1.msra.mxu0 0.0
        %1296 = vmatprep.subr.mxu0 0.0
        %1297 = vmatpush1.msra.mxu0 0.0
        %1298 = vmatprep.subr.mxu0 0.0
        %1299 = vmatpush1.msra.mxu0 0.0
        %1300 = vmatprep.subr.mxu0 0.0
        %1301 = vmatpush1.msra.mxu0 0.0
        %1302 = vmatprep.subr.mxu0 0.0
        %1303 = vmatpush1.msra.mxu0 0.0
        %1304 = vmatprep.subr.mxu0 0.0
        %1305 = vmatpush1.msra.mxu0 0.0
        %1306 = vmatprep.subr.mxu0 0.0
        %1307 = vmatpush1.msra.mxu0 0.0
        %1308 = vmatprep.subr.mxu0 0.0
        %1309 = vmatpush1.msra.mxu0 0.0
        %1310 = vmatprep.subr.mxu0 0.0
        %1311 = vmatpush1.msra.mxu0 0.0
        %1312 = vmatprep.subr.mxu0 0.0
        %1313 = vmatpush1.msra.mxu0 0.0
        %1314 = vmatprep.subr.mxu0 0.0
        %1315 = vmatpush1.msra.mxu0 0.0
        %1316 = vmatprep.subr.mxu0 0.0
        %1317 = vmatpush1.msra.mxu0 0.0
        %1318 = vmatprep.subr.mxu0 0.0
        %1319 = vmatpush1.msra.mxu0 0.0
        %1320 = vmatprep.subr.mxu0 0.0
        %1321 = vmatpush1.msra.mxu0 0.0
        %1322 = vmatprep.subr.mxu0 0.0
        %1323 = vmatpush1.msra.mxu0 0.0
        %1324 = vmatprep.subr.mxu0 0.0
        %1325 = vmatpush1.msra.mxu0 0.0
        %1326 = vmatprep.subr.mxu0 0.0
        %1327 = vmatpush1.msra.mxu0 0.0
        %1328 = vmatprep.subr.mxu0 0.0
        %1329 = vmatpush1.msra.mxu0 0.0
        %1330 = vmatprep.subr.mxu0 0.0
        %1331 = vmatpush1.msra.mxu0 0.0
        %1332 = vmatprep.subr.mxu0 0.0
        %1333 = vmatpush1.msra.mxu0 0.0
        %1334 = vmatprep.subr.mxu0 0.0
        %1335 = vmatpush1.msra.mxu0 0.0
        %1336 = vmatprep.subr.mxu0 0.0
        %1337 = vmatpush1.msra.mxu0 0.0
        %1338 = vmatprep.subr.mxu0 0.0
        %1339 = vmatpush1.msra.mxu0 0.0
        %1340 = vmatprep.subr.mxu0 0.0
        %1341 = vmatpush1.msra.mxu0 0.0
        %1342 = vmatprep.subr.mxu0 0.0
        %1343 = vmatpush1.msra.mxu0 0.0
        %1344 = vmatprep.subr.mxu0 0.0
        %1345 = vmatpush1.msra.mxu0 0.0
        %1346 = vmatprep.mubr.f32.mxu0 0.0
        %1347 = vmatmul.mubr.f32.gmra.mrb[0].mxu0 %v1273
        %v1348 = vpop.f32.mrb[0].mxu0
        %v1349 = vadd.f32 0.0, %v1348
        %v1350 = vpop.f32.mrb[0].mxu0
        %v1351 = vadd.f32 0.0, %v1350
        %1352 = vmatprep.mubr.f32.mxu0 0.0
        %1353 = vmatmul.mubr.f32.gmra.mrb[0].mxu0 %v1276
        %v1354 = vpop.f32.mrb[0].mxu0
        %v1355 = vadd.f32 0.0, %v1354
        %v1356 = vpop.f32.mrb[0].mxu0
        %v1357 = vadd.f32 0.0, %v1356
        %1358 = vdwg.mxu0
        %v1359 = vadd.f32 %v1244, %v1349
        %v1360 = vadd.f32 %v1245, %v1351
        %v1361 = vadd.f32 %v1246, %v1355
        %v1362 = vadd.f32 %v1247, %v1357
        %v1363 = vld [vmem:[%s4] sm:$0xff]
        %v1364 = vld [vmem:[%s4 + $0x8] sm:$0xff]
        %1366 = vset.pattern.permute.xlu0 0
        %1367 = vperm.xlu0 %1366, %v1363
        %v1368 = vpop.permute.xlu0 %1367
        %1371 = vset.pattern.permute.xlu0 0
        %1372 = vperm.xlu0 %1371, %v1364
        %v1373 = vpop.permute.xlu0 %1372
        %v1375 = vadd.f32 %v1359, %v1368
        %v1376 = vadd.f32 %v1360, %v1368
        %v1377 = vadd.f32 %v1361, %v1373
        %v1378 = vadd.f32 %v1362, %v1373
        %v1379 = vld [vmem:[%s353] sm:$0xff]
        %v1380 = vld [vmem:[%s353 + $0x8] sm:$0xff]
        %v1381 = vld [vmem:[%s358] sm:$0xff]
        %v1382 = vld [vmem:[%s358 + $0x8] sm:$0xff]
        %1384 = vset.pattern.permute.xlu0 0
        %1385 = vperm.xlu0 %1384, %v1381
        %v1386 = vpop.permute.xlu0 %1385
        %1389 = vset.pattern.permute.xlu0 0
        %1390 = vperm.xlu0 %1389, %v1382
        %v1391 = vpop.permute.xlu0 %1390
        %v1394 = vsel %vm394, %v1379, 0
        %v1397 = vsel %vm394, %v1380, 0
        %1399 = vmatprep.subr.mxu0 %v832
        %1400 = vmatpush1.msra.mxu0 %v830
        %1401 = vmatprep.subr.mxu0 0.0
        %1402 = vmatpush1.msra.mxu0 0.0
        %1403 = vmatprep.subr.mxu0 0.0
        %1404 = vmatpush1.msra.mxu0 0.0
        %1405 = vmatprep.subr.mxu0 0.0
        %1406 = vmatpush1.msra.mxu0 0.0
        %1407 = vmatprep.subr.mxu0 0.0
        %1408 = vmatpush1.msra.mxu0 0.0
        %1409 = vmatprep.subr.mxu0 0.0
        %1410 = vmatpush1.msra.mxu0 0.0
        %1411 = vmatprep.subr.mxu0 0.0
        %1412 = vmatpush1.msra.mxu0 0.0
        %1413 = vmatprep.subr.mxu0 0.0
        %1414 = vmatpush1.msra.mxu0 0.0
        %1415 = vmatprep.subr.mxu0 0.0
        %1416 = vmatpush1.msra.mxu0 0.0
        %1417 = vmatprep.subr.mxu0 0.0
        %1418 = vmatpush1.msra.mxu0 0.0
        %1419 = vmatprep.subr.mxu0 0.0
        %1420 = vmatpush1.msra.mxu0 0.0
        %1421 = vmatprep.subr.mxu0 0.0
        %1422 = vmatpush1.msra.mxu0 0.0
        %1423 = vmatprep.subr.mxu0 0.0
        %1424 = vmatpush1.msra.mxu0 0.0
        %1425 = vmatprep.subr.mxu0 0.0
        %1426 = vmatpush1.msra.mxu0 0.0
        %1427 = vmatprep.subr.mxu0 0.0
        %1428 = vmatpush1.msra.mxu0 0.0
        %1429 = vmatprep.subr.mxu0 0.0
        %1430 = vmatpush1.msra.mxu0 0.0
        %1431 = vmatprep.subr.mxu0 0.0
        %1432 = vmatpush1.msra.mxu0 0.0
        %1433 = vmatprep.subr.mxu0 0.0
        %1434 = vmatpush1.msra.mxu0 0.0
        %1435 = vmatprep.subr.mxu0 0.0
        %1436 = vmatpush1.msra.mxu0 0.0
        %1437 = vmatprep.subr.mxu0 0.0
        %1438 = vmatpush1.msra.mxu0 0.0
        %1439 = vmatprep.subr.mxu0 0.0
        %1440 = vmatpush1.msra.mxu0 0.0
        %1441 = vmatprep.subr.mxu0 0.0
        %1442 = vmatpush1.msra.mxu0 0.0
        %1443 = vmatprep.subr.mxu0 0.0
        %1444 = vmatpush1.msra.mxu0 0.0
        %1445 = vmatprep.subr.mxu0 0.0
        %1446 = vmatpush1.msra.mxu0 0.0
        %1447 = vmatprep.subr.mxu0 0.0
        %1448 = vmatpush1.msra.mxu0 0.0
        %1449 = vmatprep.subr.mxu0 0.0
        %1450 = vmatpush1.msra.mxu0 0.0
        %1451 = vmatprep.subr.mxu0 0.0
        %1452 = vmatpush1.msra.mxu0 0.0
        %1453 = vmatprep.subr.mxu0 0.0
        %1454 = vmatpush1.msra.mxu0 0.0
        %1455 = vmatprep.subr.mxu0 0.0
        %1456 = vmatpush1.msra.mxu0 0.0
        %1457 = vmatprep.subr.mxu0 0.0
        %1458 = vmatpush1.msra.mxu0 0.0
        %1459 = vmatprep.subr.mxu0 0.0
        %1460 = vmatpush1.msra.mxu0 0.0
        %1461 = vmatprep.subr.mxu0 0.0
        %1462 = vmatpush1.msra.mxu0 0.0
        %1463 = vmatprep.mubr.f32.mxu0 0.0
        %1464 = vmatmul.mubr.f32.gmra.mrb[0].mxu0 %v1394
        %v1465 = vpop.f32.mrb[0].mxu0
        %v1466 = vadd.f32 %v1386, %v1465
        %v1467 = vpop.f32.mrb[0].mxu0
        %v1468 = vadd.f32 %v1386, %v1467
        %1469 = vmatprep.mubr.f32.mxu0 0.0
        %1470 = vmatmul.mubr.f32.gmra.mrb[0].mxu0 %v1397
        %v1471 = vpop.f32.mrb[0].mxu0
        %v1472 = vadd.f32 %v1391, %v1471
        %v1473 = vpop.f32.mrb[0].mxu0
        %v1474 = vadd.f32 %v1391, %v1473
        %1475 = vdwg.mxu0
        %v1476 = vrot.slane %v1466, 4
        %v1477 = vmax.f32 %v1466, %v1476
        %v1478 = vrot.slane %v1477, 2
        %v1479 = vmax.f32 %v1477, %v1478
        %v1480 = vrot.slane %v1479, 1
        %v1481 = vmax.f32 %v1479, %v1480
        %v1482 = vrot.slane %v1468, 4
        %v1483 = vmax.f32 %v1468, %v1482
        %v1484 = vrot.slane %v1483, 2
        %v1485 = vmax.f32 %v1483, %v1484
        %v1486 = vrot.slane %v1485, 1
        %v1487 = vmax.f32 %v1485, %v1486
        %v1488 = vxor.u32 %v1481, 2147483648
        %v1489 = vxor.u32 %v1487, 2147483648
        %v1490 = vmul.f32 %v1488, 1.442695
        %v1491 = vpow.pop %v1490
        %v1492 = vmul.f32 %v1489, 1.442695
        %v1493 = vpow.pop %v1492
        %v1494 = vadd.f32 %v1491, 1.0
        %v1495 = vadd.f32 %v1493, 1.0
        %v1496 = vrcp.pop %v1494
        %v1497 = vmul.f32 1.0, %v1496
        %v1498 = vrcp.pop %v1495
        %v1499 = vmul.f32 1.0, %v1498
        %s1500 = sld [smem:[#allocation2]]
        %v1501 = vstv %s1500
        %v1502 = vmul.f32 %v1497, %v1501
        %v1503 = vmul.f32 %v1499, %v1501
        %v1504 = vmul.f32 %v1375, %v1502
        %v1505 = vmul.f32 %v1376, %v1503
        %v1506 = vrot.slane %v1472, 4
        %v1507 = vmax.f32 %v1472, %v1506
        %v1508 = vrot.slane %v1507, 2
        %v1509 = vmax.f32 %v1507, %v1508
        %v1510 = vrot.slane %v1509, 1
        %v1511 = vmax.f32 %v1509, %v1510
        %v1512 = vrot.slane %v1474, 4
        %v1513 = vmax.f32 %v1474, %v1512
        %v1514 = vrot.slane %v1513, 2
        %v1515 = vmax.f32 %v1513, %v1514
        %v1516 = vrot.slane %v1515, 1
        %v1517 = vmax.f32 %v1515, %v1516
        %v1518 = vxor.u32 %v1511, 2147483648
        %v1519 = vxor.u32 %v1517, 2147483648
        %v1520 = vmul.f32 %v1518, 1.442695
        %v1521 = vpow.pop %v1520
        %v1522 = vmul.f32 %v1519, 1.442695
        %v1523 = vpow.pop %v1522
        %v1524 = vadd.f32 %v1521, 1.0
        %v1525 = vadd.f32 %v1523, 1.0
        %v1526 = vrcp.pop %v1524
        %v1527 = vmul.f32 1.0, %v1526
        %v1528 = vrcp.pop %v1525
        %v1529 = vmul.f32 1.0, %v1528
        %s1530 = sld [smem:[#allocation2 + $0x1]]
        %v1531 = vstv %s1530
        %v1532 = vmul.f32 %v1527, %v1531
        %v1533 = vmul.f32 %v1529, %v1531
        %v1534 = vmul.f32 %v1377, %v1532
        %v1535 = vmul.f32 %v1378, %v1533
        %1536 = vst [vmem:[%s339] sm:$0xff] %v1504
        %1537 = vst [vmem:[%s339 + $0x8] sm:$0xff] %v1505
        %1538 = vst [vmem:[%s339 + $0x10] sm:$0xff] %v1534
        %1539 = vst [vmem:[%s339 + $0x18] sm:$0xff] %v1535
        %s1540 = sand.u32 %s208, 1
        %s1541 = scalar_lea.sflag [#allocation3], %s1540
        %s1542 = sand.u32 %s208, 1
        %s1543 = smul.addr %s1542, 32
        %s1544 = scalar_lea.vmem [#allocation5], %s1543
        // Predicated region
        $region53: #{tpu_custom_call.1} parent=47 // pred_check
          %p1545 = pneg %p218
        $region54: #{tpu_custom_call.1} parent=47 // pred_check_branch
          %1547 = sbr.rel (%p1545) target = $region56
        $region55: #{tpu_custom_call.1} parent=47 // pred_region
          %s1548 = smul.u32 2, %s27
          %s1550 = ssub.s32 512, 512
          %1551 = vsyncadd %s1541, %s1550
          %s1552 = smul.addr %s26, 4
          %s1553 = sadd.s32 %s1548, %s1552
          %s1554 = smul.addr %s1553, 128
          %s1555 = scalar_lea.hbm %s7, %s1554
          %s1556 = sshll.u32 %s1544, 4
          %s1557 = int_to_ptr.vmem [resolvable:$true] %s1556
          %1562 = dma.vmem_to_hbm [thread:$0]  %s1557, 512, %s1555, %s1541, 256, 256, 16
        $region56: #{tpu_custom_call.1} parent=47 // pred_fallthru
          _
      $region48: #{tpu_custom_call.1} parent=5 // pred_fallthru
        _
      %p1563 = scmp.le.s32.totalorder 2, %s17
      // Predicated region
      $region57: #{tpu_custom_call.1} parent=5 // pred_check
        %p1564 = pneg %p1563
      $region58: #{tpu_custom_call.1} parent=5 // pred_check_branch
        %1566 = sbr.rel (%p1564) target = $region60
      $region59: #{tpu_custom_call.1} parent=5 // pred_region
        %s1567 = ssub.s32 %s17, 2
        // Predicated region
        $region61: #{tpu_custom_call.1} parent=59 // pred_check
          %p1568 = pneg %p224
        $region62: #{tpu_custom_call.1} parent=59 // pred_check_branch
          %1570 = sbr.rel (%p1568) target = $region64
        $region63: #{tpu_custom_call.1} parent=59 // pred_region
          %s1571 = sand.u32 %s209, 1
          %s1572 = scalar_lea.sflag [#allocation3], %s1571
          %s1573 = sand.u32 %s209, 1
          %s1574 = smul.addr %s1573, 32
          %s1575 = scalar_lea.vmem [#allocation5], %s1574
          %1576 = dma.done %s1572, 512
        $region64: #{tpu_custom_call.1} parent=59 // pred_fallthru
          _
      $region60: #{tpu_custom_call.1} parent=5 // pred_fallthru
        _
    $region6: #{tpu_custom_call.1} parent=1 // loop_footer
      %s21 = sadd.s32 1, %s17
    $region7: #{tpu_custom_call.1} parent=1 // loop_footer_branch
      %16 = sbr.rel target = $region3
    $region8: #{tpu_custom_call.1} parent=1 // loop_exit
      _
    %1577 = vsyncpa [#allocation3], 1
    %s1578 = scalar_lea.sflag [#allocation3], 1
    %1579 = vsyncpa %s1578, 1
    %1580 = vsyncpa [#allocation4], 1
    %s1581 = scalar_lea.sflag [#allocation4], 1
    %1582 = vsyncpa %s1581, 1

</llo_original>
